<compile_context>
chip_gen: v7x
topology: tpu7x:2x2x1
jax: 0.10.0
libtpu: 0.0.40
codegen_flags: <defaults>
</compile_context>

<pallas_src>
import jax
import jax.numpy as jnp
from jax.experimental import pallas as pl
from jax.experimental.pallas import tpu as pltpu

# Module hyper-parameters (conv must preserve spatial dims for the final
# broadcast multiply to be valid, exactly as the PyTorch module is used).
C_IN, C_OUT, K, STRIDE, PAD = 4, 8, 3, 1, 1


def attention_conv2d_kernel(x_ref, w_ref, out_ref, xpad_s, p_s):
    # x_ref  : (TB, C_in, H, W)            un-padded input block
    # w_ref  : (C_out, C_in*K*K + 1)       conv weight with bias column appended
    # out_ref: (TB, C_in*H, W)             output block (row-major view of (TB, C_in, H, W))
    # xpad_s : (TB, C_in, H+2P, W+2P)      VMEM scratch (zero padding fused here)
    # p_s    : (C_in*K*K + 1, TB*H, W)     VMEM scratch (im2col patches + ones row)
    TB, C_in, H, W = x_ref.shape

    # --- fused zero padding (replaces any wrapper-side jnp.pad HBM pass) -----
    xpad_s[...] = jnp.zeros_like(xpad_s)
    xpad_s[:, :, PAD:PAD + H, PAD:PAD + W] = x_ref[...]

    # --- im2col gather; row order (c, kh, kw) matches weight.reshape(C_out,-1)
    row = 0
    for c in range(C_in):
        for kh in range(K):
            for kw in range(K):
                for tb in range(TB):
                    p_s[row, tb * H:(tb + 1) * H, :] = (
                        xpad_s[tb, c, kh:kh + H, kw:kw + W])
                row += 1
    # All-ones row folds the conv bias into the single matmul below.
    p_s[C_in * K * K, :, :] = jnp.ones((TB * H, W), dtype=jnp.float32)

    # --- conv as a single MXU matmul: (C_out, CKK+1) x (CKK+1, TB*H, W) ------
    conv = jax.lax.dot_general(
        w_ref[...], p_s[...],
        dimension_numbers=(((1,), (0,)), ((), ())),
        preferred_element_type=jnp.float32)              # (C_out, TB*H, W)

    # --- softmax(dim=-1) + sum over out-channels; softmax never materialized -
    m = jnp.max(conv, axis=-1, keepdims=True)
    e = jnp.exp(conv - m)
    s = jnp.sum(e, axis=-1, keepdims=True)               # (C_out, TB*H, 1)
    inv = pl.reciprocal(s, approx=True)                  # EUP fast path
    inv = inv * (2.0 - s * inv)                          # one Newton step -> f32 accurate
    attn = jnp.sum(e * inv, axis=0)                      # (TB*H, W)

    # --- y = x * attn; sublane-aligned full-width per-channel stores ---------
    for tb in range(TB):
        a_tb = attn[tb * H:(tb + 1) * H, :]               # (H, W)
        for c in range(C_in):
            out_ref[tb, c * H:(c + 1) * H, :] = (
                x_ref[tb, c] * a_tb).astype(out_ref.dtype)


def _pick_batch_tile(B, C_in, H, W, *, target_bytes=2 << 20, max_tb=8):
    """Batch elements folded per grid step: big enough to amortize per-step
    pipeline overhead (~0.35us/step), small enough for VMEM (v7x: 64 MiB/TC),
    and keeping >= 2 grid steps so both v7x TensorCores get work when B allows."""
    per_image = C_in * H * W * 4
    tb = max(1, min(max_tb, B, target_bytes // max(per_image, 1)))
    if B >= 2:
        tb = min(tb, max(1, B // 2))
    while B % tb:                      # TB must divide B (no remainder handling)
        tb -= 1
    return tb


def attention_conv2d(x, w, b):
    """x: (B, C_in, H, W) f32, w: (C_out, C_in, K, K) f32, b: (C_out,) f32."""
    B, C_in, H, W = x.shape
    C_out = w.shape[0]
    TB = _pick_batch_tile(B, C_in, H, W)

    # Weight as (C_out, C_in*K*K) with the bias appended as one extra column;
    # row-major reshape matches the kernel's (c, kh, kw) im2col row ordering.
    w_aug = jnp.concatenate(
        [w.reshape(C_out, C_in * K * K), b.reshape(C_out, 1)], axis=1
    ).astype(jnp.float32)

    flops = (2 * C_out * (C_in * K * K + 1) + 8 * C_out + 2 * C_in) * B * H * W
    cost = pl.CostEstimate(
        flops=int(flops),
        transcendentals=int(B * C_out * H * W),
        bytes_accessed=int(2 * x.size * 4 + w_aug.size * 4),
    )

    # NOTE: for large production H/W, add an H-tiling grid axis with a PAD-row
    # halo and pad W up to a multiple of 128 (masked before max/exp).
    out_view = pl.pallas_call(
        attention_conv2d_kernel,
        out_shape=jax.ShapeDtypeStruct((B, C_in * H, W), x.dtype),
        grid_spec=pltpu.PrefetchScalarGridSpec(
            num_scalar_prefetch=0,
            grid=(B // TB,),
            in_specs=[
                pl.BlockSpec((TB, C_in, H, W), lambda i: (i, 0, 0, 0)),
                pl.BlockSpec((C_out, C_in * K * K + 1), lambda i: (0, 0)),
            ],
            out_specs=pl.BlockSpec((TB, C_in * H, W), lambda i: (i, 0, 0)),
            scratch_shapes=[
                pltpu.VMEM((TB, C_in, H + 2 * PAD, W + 2 * PAD), jnp.float32),
                pltpu.VMEM((C_in * K * K + 1, TB * H, W), jnp.float32),
            ],
        ),
        compiler_params=pltpu.CompilerParams(
            dimension_semantics=("parallel",),
            vmem_limit_bytes=32 * 1024 * 1024,
        ),
        cost_estimate=cost,
    )(x, w_aug)

    # (B, C_in*H, W) is the row-major flattening of (B, C_in, H, W): free view.
    return out_view.reshape(B, C_in, H, W)


def _reference(x, w, b):
    conv = jax.lax.conv_general_dilated(
        x, w, window_strides=(STRIDE, STRIDE),
        padding=((PAD, PAD), (PAD, PAD)),
        dimension_numbers=("NCHW", "OIHW", "NCHW"))
    conv = conv + b.reshape(1, -1, 1, 1)
    soft = jax.nn.softmax(conv, axis=-1)
    attn = jnp.sum(soft, axis=1, keepdims=True)
    return x * attn


if __name__ == "__main__":
    key = jax.random.PRNGKey(0)
    kx, kw, kb = jax.random.split(key, 3)

    B, H, W = 2, 16, 16
    x = jax.random.normal(kx, (B, C_IN, H, W), dtype=jnp.float32)
    # Deterministic synthetic parameters (shapes from nn.Conv2d(4, 8, 3, 1, 1)).
    weight = jax.random.normal(kw, (C_OUT, C_IN, K, K), dtype=jnp.float32) * 0.1
    bias = jax.random.normal(kb, (C_OUT,), dtype=jnp.float32) * 0.1

    out = attention_conv2d(x, weight, bias)
    out = jax.block_until_ready(out)

    ref = _reference(x, weight, bias)
    assert out.shape == ref.shape and out.dtype == ref.dtype
    # approx reciprocal + one Newton refinement -> well inside 1e-4.
    assert jnp.allclose(out, ref, atol=1e-4, rtol=1e-4), "mismatch vs reference"

    print("KERNEL_OK")
</pallas_src>

<mosaic_0001>
module attributes {stable_mosaic.version = 11 : i64} {
  func.func @attention_conv2d_kernel(%arg0: i32, %arg1: memref<1x4x16x16xf32, #tpu.memory_space<vmem>>, %arg2: memref<8x37xf32, #tpu.memory_space<vmem>>, %arg3: memref<1x64x16xf32, #tpu.memory_space<vmem>>, %arg4: memref<1x4x18x18xf32, #tpu.memory_space<vmem>>, %arg5: memref<37x16x16xf32, #tpu.memory_space<vmem>>) attributes {dimension_semantics = [#tpu.dimension_semantics<parallel>], iteration_bounds = array<i64: 2>, scalar_prefetch = 0 : i64, scratch_operands = 2 : i64, tpu.core_type = #tpu.core_type<tc>, window_params = [{transform_indices = @transform_0, window_bounds = array<i64: 1, 4, 16, 16>}, {pipeline_mode = #tpu.pipeline_mode<synchronous>, transform_indices = @transform_1, window_bounds = array<i64: 8, 37>}, {transform_indices = @transform_2, window_bounds = array<i64: 1, 64, 16>}]} {
    %cst = arith.constant 0.000000e+00 : f32
    %0 = vector.broadcast %cst : f32 to vector<1x4x18x18xf32>
    %c0 = arith.constant 0 : index
    %c0_0 = arith.constant 0 : index
    %c0_1 = arith.constant 0 : index
    %c0_2 = arith.constant 0 : index
    %1 = vector.load %arg4[%c0, %c0_0, %c0_1, %c0_2] : memref<1x4x18x18xf32, #tpu.memory_space<vmem>>, vector<1x4x18x18xf32>
    tpu.vector_store %arg4[%c0, %c0_0, %c0_1, %c0_2], %0 {strides = array<i32>} : memref<1x4x18x18xf32, #tpu.memory_space<vmem>>, vector<1x4x18x18xf32>,
    %c0_3 = arith.constant 0 : index
    %c0_4 = arith.constant 0 : index
    %c0_5 = arith.constant 0 : index
    %c0_6 = arith.constant 0 : index
    %2 = vector.load %arg1[%c0_3, %c0_4, %c0_5, %c0_6] : memref<1x4x16x16xf32, #tpu.memory_space<vmem>>, vector<1x4x16x16xf32>
    %c0_7 = arith.constant 0 : index
    %c0_8 = arith.constant 0 : index
    %c1 = arith.constant 1 : index
    %c1_9 = arith.constant 1 : index
    %3 = vector.load %arg4[%c0_7, %c0_8, %c1, %c1_9] : memref<1x4x18x18xf32, #tpu.memory_space<vmem>>, vector<1x4x16x16xf32>
    tpu.vector_store %arg4[%c0_7, %c0_8, %c1, %c1_9], %2 {strides = array<i32>} : memref<1x4x18x18xf32, #tpu.memory_space<vmem>>, vector<1x4x16x16xf32>,
    %c0_10 = arith.constant 0 : index
    %c0_11 = arith.constant 0 : index
    %c0_12 = arith.constant 0 : index
    %c0_13 = arith.constant 0 : index
    %4 = vector.load %arg4[%c0_10, %c0_11, %c0_12, %c0_13] : memref<1x4x18x18xf32, #tpu.memory_space<vmem>>, vector<1x1x16x16xf32>
    %5 = vector.shape_cast %4 : vector<1x1x16x16xf32> to vector<16x16xf32>
    %c0_14 = arith.constant 0 : index
    %c0_15 = arith.constant 0 : index
    %c0_16 = arith.constant 0 : index
    %6 = vector.load %arg5[%c0_14, %c0_15, %c0_16] : memref<37x16x16xf32, #tpu.memory_space<vmem>>, vector<1x16x16xf32>
    %7 = vector.shape_cast %6 : vector<1x16x16xf32> to vector<16x16xf32>
    %8 = vector.shape_cast %5 : vector<16x16xf32> to vector<1x16x16xf32>
    tpu.vector_store %arg5[%c0_14, %c0_15, %c0_16], %8 {strides = array<i32>} : memref<37x16x16xf32, #tpu.memory_space<vmem>>, vector<1x16x16xf32>,
    %c0_17 = arith.constant 0 : index
    %c0_18 = arith.constant 0 : index
    %c0_19 = arith.constant 0 : index
    %c1_20 = arith.constant 1 : index
    %9 = vector.load %arg4[%c0_17, %c0_18, %c0_19, %c1_20] : memref<1x4x18x18xf32, #tpu.memory_space<vmem>>, vector<1x1x16x16xf32>
    %10 = vector.shape_cast %9 : vector<1x1x16x16xf32> to vector<16x16xf32>
    %c1_21 = arith.constant 1 : index
    %c0_22 = arith.constant 0 : index
    %c0_23 = arith.constant 0 : index
    %11 = vector.load %arg5[%c1_21, %c0_22, %c0_23] : memref<37x16x16xf32, #tpu.memory_space<vmem>>, vector<1x16x16xf32>
    %12 = vector.shape_cast %11 : vector<1x16x16xf32> to vector<16x16xf32>
    %13 = vector.shape_cast %10 : vector<16x16xf32> to vector<1x16x16xf32>
    tpu.vector_store %arg5[%c1_21, %c0_22, %c0_23], %13 {strides = array<i32>} : memref<37x16x16xf32, #tpu.memory_space<vmem>>, vector<1x16x16xf32>,
    %c0_24 = arith.constant 0 : index
    %c0_25 = arith.constant 0 : index
    %c0_26 = arith.constant 0 : index
    %c2 = arith.constant 2 : index
    %14 = vector.load %arg4[%c0_24, %c0_25, %c0_26, %c2] : memref<1x4x18x18xf32, #tpu.memory_space<vmem>>, vector<1x1x16x16xf32>
    %15 = vector.shape_cast %14 : vector<1x1x16x16xf32> to vector<16x16xf32>
    %c2_27 = arith.constant 2 : index
    %c0_28 = arith.constant 0 : index
    %c0_29 = arith.constant 0 : index
    %16 = vector.load %arg5[%c2_27, %c0_28, %c0_29] : memref<37x16x16xf32, #tpu.memory_space<vmem>>, vector<1x16x16xf32>
    %17 = vector.shape_cast %16 : vector<1x16x16xf32> to vector<16x16xf32>
    %18 = vector.shape_cast %15 : vector<16x16xf32> to vector<1x16x16xf32>
    tpu.vector_store %arg5[%c2_27, %c0_28, %c0_29], %18 {strides = array<i32>} : memref<37x16x16xf32, #tpu.memory_space<vmem>>, vector<1x16x16xf32>,
    %c0_30 = arith.constant 0 : index
    %c0_31 = arith.constant 0 : index
    %c1_32 = arith.constant 1 : index
    %c0_33 = arith.constant 0 : index
    %19 = vector.load %arg4[%c0_30, %c0_31, %c1_32, %c0_33] : memref<1x4x18x18xf32, #tpu.memory_space<vmem>>, vector<1x1x16x16xf32>
    %20 = vector.shape_cast %19 : vector<1x1x16x16xf32> to vector<16x16xf32>
    %c3 = arith.constant 3 : index
    %c0_34 = arith.constant 0 : index
    %c0_35 = arith.constant 0 : index
    %21 = vector.load %arg5[%c3, %c0_34, %c0_35] : memref<37x16x16xf32, #tpu.memory_space<vmem>>, vector<1x16x16xf32>
    %22 = vector.shape_cast %21 : vector<1x16x16xf32> to vector<16x16xf32>
    %23 = vector.shape_cast %20 : vector<16x16xf32> to vector<1x16x16xf32>
    tpu.vector_store %arg5[%c3, %c0_34, %c0_35], %23 {strides = array<i32>} : memref<37x16x16xf32, #tpu.memory_space<vmem>>, vector<1x16x16xf32>,
    %c0_36 = arith.constant 0 : index
    %c0_37 = arith.constant 0 : index
    %c1_38 = arith.constant 1 : index
    %c1_39 = arith.constant 1 : index
    %24 = vector.load %arg4[%c0_36, %c0_37, %c1_38, %c1_39] : memref<1x4x18x18xf32, #tpu.memory_space<vmem>>, vector<1x1x16x16xf32>
    %25 = vector.shape_cast %24 : vector<1x1x16x16xf32> to vector<16x16xf32>
    %c4 = arith.constant 4 : index
    %c0_40 = arith.constant 0 : index
    %c0_41 = arith.constant 0 : index
    %26 = vector.load %arg5[%c4, %c0_40, %c0_41] : memref<37x16x16xf32, #tpu.memory_space<vmem>>, vector<1x16x16xf32>
    %27 = vector.shape_cast %26 : vector<1x16x16xf32> to vector<16x16xf32>
    %28 = vector.shape_cast %25 : vector<16x16xf32> to vector<1x16x16xf32>
    tpu.vector_store %arg5[%c4, %c0_40, %c0_41], %28 {strides = array<i32>} : memref<37x16x16xf32, #tpu.memory_space<vmem>>, vector<1x16x16xf32>,
    %c0_42 = arith.constant 0 : index
    %c0_43 = arith.constant 0 : index
    %c1_44 = arith.constant 1 : index
    %c2_45 = arith.constant 2 : index
    %29 = vector.load %arg4[%c0_42, %c0_43, %c1_44, %c2_45] : memref<1x4x18x18xf32, #tpu.memory_space<vmem>>, vector<1x1x16x16xf32>
    %30 = vector.shape_cast %29 : vector<1x1x16x16xf32> to vector<16x16xf32>
    %c5 = arith.constant 5 : index
    %c0_46 = arith.constant 0 : index
    %c0_47 = arith.constant 0 : index
    %31 = vector.load %arg5[%c5, %c0_46, %c0_47] : memref<37x16x16xf32, #tpu.memory_space<vmem>>, vector<1x16x16xf32>
    %32 = vector.shape_cast %31 : vector<1x16x16xf32> to vector<16x16xf32>
    %33 = vector.shape_cast %30 : vector<16x16xf32> to vector<1x16x16xf32>
    tpu.vector_store %arg5[%c5, %c0_46, %c0_47], %33 {strides = array<i32>} : memref<37x16x16xf32, #tpu.memory_space<vmem>>, vector<1x16x16xf32>,
    %c0_48 = arith.constant 0 : index
    %c0_49 = arith.constant 0 : index
    %c2_50 = arith.constant 2 : index
    %c0_51 = arith.constant 0 : index
    %34 = vector.load %arg4[%c0_48, %c0_49, %c2_50, %c0_51] : memref<1x4x18x18xf32, #tpu.memory_space<vmem>>, vector<1x1x16x16xf32>
    %35 = vector.shape_cast %34 : vector<1x1x16x16xf32> to vector<16x16xf32>
    %c6 = arith.constant 6 : index
    %c0_52 = arith.constant 0 : index
    %c0_53 = arith.constant 0 : index
    %36 = vector.load %arg5[%c6, %c0_52, %c0_53] : memref<37x16x16xf32, #tpu.memory_space<vmem>>, vector<1x16x16xf32>
    %37 = vector.shape_cast %36 : vector<1x16x16xf32> to vector<16x16xf32>
    %38 = vector.shape_cast %35 : vector<16x16xf32> to vector<1x16x16xf32>
    tpu.vector_store %arg5[%c6, %c0_52, %c0_53], %38 {strides = array<i32>} : memref<37x16x16xf32, #tpu.memory_space<vmem>>, vector<1x16x16xf32>,
    %c0_54 = arith.constant 0 : index
    %c0_55 = arith.constant 0 : index
    %c2_56 = arith.constant 2 : index
    %c1_57 = arith.constant 1 : index
    %39 = vector.load %arg4[%c0_54, %c0_55, %c2_56, %c1_57] : memref<1x4x18x18xf32, #tpu.memory_space<vmem>>, vector<1x1x16x16xf32>
    %40 = vector.shape_cast %39 : vector<1x1x16x16xf32> to vector<16x16xf32>
    %c7 = arith.constant 7 : index
    %c0_58 = arith.constant 0 : index
    %c0_59 = arith.constant 0 : index
    %41 = vector.load %arg5[%c7, %c0_58, %c0_59] : memref<37x16x16xf32, #tpu.memory_space<vmem>>, vector<1x16x16xf32>
    %42 = vector.shape_cast %41 : vector<1x16x16xf32> to vector<16x16xf32>
    %43 = vector.shape_cast %40 : vector<16x16xf32> to vector<1x16x16xf32>
    tpu.vector_store %arg5[%c7, %c0_58, %c0_59], %43 {strides = array<i32>} : memref<37x16x16xf32, #tpu.memory_space<vmem>>, vector<1x16x16xf32>,
    %c0_60 = arith.constant 0 : index
    %c0_61 = arith.constant 0 : index
    %c2_62 = arith.constant 2 : index
    %c2_63 = arith.constant 2 : index
    %44 = vector.load %arg4[%c0_60, %c0_61, %c2_62, %c2_63] : memref<1x4x18x18xf32, #tpu.memory_space<vmem>>, vector<1x1x16x16xf32>
    %45 = vector.shape_cast %44 : vector<1x1x16x16xf32> to vector<16x16xf32>
    %c8 = arith.constant 8 : index
    %c0_64 = arith.constant 0 : index
    %c0_65 = arith.constant 0 : index
    %46 = vector.load %arg5[%c8, %c0_64, %c0_65] : memref<37x16x16xf32, #tpu.memory_space<vmem>>, vector<1x16x16xf32>
    %47 = vector.shape_cast %46 : vector<1x16x16xf32> to vector<16x16xf32>
    %48 = vector.shape_cast %45 : vector<16x16xf32> to vector<1x16x16xf32>
    tpu.vector_store %arg5[%c8, %c0_64, %c0_65], %48 {strides = array<i32>} : memref<37x16x16xf32, #tpu.memory_space<vmem>>, vector<1x16x16xf32>,
    %c0_66 = arith.constant 0 : index
    %c1_67 = arith.constant 1 : index
    %c0_68 = arith.constant 0 : index
    %c0_69 = arith.constant 0 : index
    %49 = vector.load %arg4[%c0_66, %c1_67, %c0_68, %c0_69] : memref<1x4x18x18xf32, #tpu.memory_space<vmem>>, vector<1x1x16x16xf32>
    %50 = vector.shape_cast %49 : vector<1x1x16x16xf32> to vector<16x16xf32>
    %c9 = arith.constant 9 : index
    %c0_70 = arith.constant 0 : index
    %c0_71 = arith.constant 0 : index
    %51 = vector.load %arg5[%c9, %c0_70, %c0_71] : memref<37x16x16xf32, #tpu.memory_space<vmem>>, vector<1x16x16xf32>
    %52 = vector.shape_cast %51 : vector<1x16x16xf32> to vector<16x16xf32>
    %53 = vector.shape_cast %50 : vector<16x16xf32> to vector<1x16x16xf32>
    tpu.vector_store %arg5[%c9, %c0_70, %c0_71], %53 {strides = array<i32>} : memref<37x16x16xf32, #tpu.memory_space<vmem>>, vector<1x16x16xf32>,
    %c0_72 = arith.constant 0 : index
    %c1_73 = arith.constant 1 : index
    %c0_74 = arith.constant 0 : index
    %c1_75 = arith.constant 1 : index
    %54 = vector.load %arg4[%c0_72, %c1_73, %c0_74, %c1_75] : memref<1x4x18x18xf32, #tpu.memory_space<vmem>>, vector<1x1x16x16xf32>
    %55 = vector.shape_cast %54 : vector<1x1x16x16xf32> to vector<16x16xf32>
    %c10 = arith.constant 10 : index
    %c0_76 = arith.constant 0 : index
    %c0_77 = arith.constant 0 : index
    %56 = vector.load %arg5[%c10, %c0_76, %c0_77] : memref<37x16x16xf32, #tpu.memory_space<vmem>>, vector<1x16x16xf32>
    %57 = vector.shape_cast %56 : vector<1x16x16xf32> to vector<16x16xf32>
    %58 = vector.shape_cast %55 : vector<16x16xf32> to vector<1x16x16xf32>
    tpu.vector_store %arg5[%c10, %c0_76, %c0_77], %58 {strides = array<i32>} : memref<37x16x16xf32, #tpu.memory_space<vmem>>, vector<1x16x16xf32>,
    %c0_78 = arith.constant 0 : index
    %c1_79 = arith.constant 1 : index
    %c0_80 = arith.constant 0 : index
    %c2_81 = arith.constant 2 : index
    %59 = vector.load %arg4[%c0_78, %c1_79, %c0_80, %c2_81] : memref<1x4x18x18xf32, #tpu.memory_space<vmem>>, vector<1x1x16x16xf32>
    %60 = vector.shape_cast %59 : vector<1x1x16x16xf32> to vector<16x16xf32>
    %c11 = arith.constant 11 : index
    %c0_82 = arith.constant 0 : index
    %c0_83 = arith.constant 0 : index
    %61 = vector.load %arg5[%c11, %c0_82, %c0_83] : memref<37x16x16xf32, #tpu.memory_space<vmem>>, vector<1x16x16xf32>
    %62 = vector.shape_cast %61 : vector<1x16x16xf32> to vector<16x16xf32>
    %63 = vector.shape_cast %60 : vector<16x16xf32> to vector<1x16x16xf32>
    tpu.vector_store %arg5[%c11, %c0_82, %c0_83], %63 {strides = array<i32>} : memref<37x16x16xf32, #tpu.memory_space<vmem>>, vector<1x16x16xf32>,
    %c0_84 = arith.constant 0 : index
    %c1_85 = arith.constant 1 : index
    %c1_86 = arith.constant 1 : index
    %c0_87 = arith.constant 0 : index
    %64 = vector.load %arg4[%c0_84, %c1_85, %c1_86, %c0_87] : memref<1x4x18x18xf32, #tpu.memory_space<vmem>>, vector<1x1x16x16xf32>
    %65 = vector.shape_cast %64 : vector<1x1x16x16xf32> to vector<16x16xf32>
    %c12 = arith.constant 12 : index
    %c0_88 = arith.constant 0 : index
    %c0_89 = arith.constant 0 : index
    %66 = vector.load %arg5[%c12, %c0_88, %c0_89] : memref<37x16x16xf32, #tpu.memory_space<vmem>>, vector<1x16x16xf32>
    %67 = vector.shape_cast %66 : vector<1x16x16xf32> to vector<16x16xf32>
    %68 = vector.shape_cast %65 : vector<16x16xf32> to vector<1x16x16xf32>
    tpu.vector_store %arg5[%c12, %c0_88, %c0_89], %68 {strides = array<i32>} : memref<37x16x16xf32, #tpu.memory_space<vmem>>, vector<1x16x16xf32>,
    %c0_90 = arith.constant 0 : index
    %c1_91 = arith.constant 1 : index
    %c1_92 = arith.constant 1 : index
    %c1_93 = arith.constant 1 : index
    %69 = vector.load %arg4[%c0_90, %c1_91, %c1_92, %c1_93] : memref<1x4x18x18xf32, #tpu.memory_space<vmem>>, vector<1x1x16x16xf32>
    %70 = vector.shape_cast %69 : vector<1x1x16x16xf32> to vector<16x16xf32>
    %c13 = arith.constant 13 : index
    %c0_94 = arith.constant 0 : index
    %c0_95 = arith.constant 0 : index
    %71 = vector.load %arg5[%c13, %c0_94, %c0_95] : memref<37x16x16xf32, #tpu.memory_space<vmem>>, vector<1x16x16xf32>
    %72 = vector.shape_cast %71 : vector<1x16x16xf32> to vector<16x16xf32>
    %73 = vector.shape_cast %70 : vector<16x16xf32> to vector<1x16x16xf32>
    tpu.vector_store %arg5[%c13, %c0_94, %c0_95], %73 {strides = array<i32>} : memref<37x16x16xf32, #tpu.memory_space<vmem>>, vector<1x16x16xf32>,
    %c0_96 = arith.constant 0 : index
    %c1_97 = arith.constant 1 : index
    %c1_98 = arith.constant 1 : index
    %c2_99 = arith.constant 2 : index
    %74 = vector.load %arg4[%c0_96, %c1_97, %c1_98, %c2_99] : memref<1x4x18x18xf32, #tpu.memory_space<vmem>>, vector<1x1x16x16xf32>
    %75 = vector.shape_cast %74 : vector<1x1x16x16xf32> to vector<16x16xf32>
    %c14 = arith.constant 14 : index
    %c0_100 = arith.constant 0 : index
    %c0_101 = arith.constant 0 : index
    %76 = vector.load %arg5[%c14, %c0_100, %c0_101] : memref<37x16x16xf32, #tpu.memory_space<vmem>>, vector<1x16x16xf32>
    %77 = vector.shape_cast %76 : vector<1x16x16xf32> to vector<16x16xf32>
    %78 = vector.shape_cast %75 : vector<16x16xf32> to vector<1x16x16xf32>
    tpu.vector_store %arg5[%c14, %c0_100, %c0_101], %78 {strides = array<i32>} : memref<37x16x16xf32, #tpu.memory_space<vmem>>, vector<1x16x16xf32>,
    %c0_102 = arith.constant 0 : index
    %c1_103 = arith.constant 1 : index
    %c2_104 = arith.constant 2 : index
    %c0_105 = arith.constant 0 : index
    %79 = vector.load %arg4[%c0_102, %c1_103, %c2_104, %c0_105] : memref<1x4x18x18xf32, #tpu.memory_space<vmem>>, vector<1x1x16x16xf32>
    %80 = vector.shape_cast %79 : vector<1x1x16x16xf32> to vector<16x16xf32>
    %c15 = arith.constant 15 : index
    %c0_106 = arith.constant 0 : index
    %c0_107 = arith.constant 0 : index
    %81 = vector.load %arg5[%c15, %c0_106, %c0_107] : memref<37x16x16xf32, #tpu.memory_space<vmem>>, vector<1x16x16xf32>
    %82 = vector.shape_cast %81 : vector<1x16x16xf32> to vector<16x16xf32>
    %83 = vector.shape_cast %80 : vector<16x16xf32> to vector<1x16x16xf32>
    tpu.vector_store %arg5[%c15, %c0_106, %c0_107], %83 {strides = array<i32>} : memref<37x16x16xf32, #tpu.memory_space<vmem>>, vector<1x16x16xf32>,
    %c0_108 = arith.constant 0 : index
    %c1_109 = arith.constant 1 : index
    %c2_110 = arith.constant 2 : index
    %c1_111 = arith.constant 1 : index
    %84 = vector.load %arg4[%c0_108, %c1_109, %c2_110, %c1_111] : memref<1x4x18x18xf32, #tpu.memory_space<vmem>>, vector<1x1x16x16xf32>
    %85 = vector.shape_cast %84 : vector<1x1x16x16xf32> to vector<16x16xf32>
    %c16 = arith.constant 16 : index
    %c0_112 = arith.constant 0 : index
    %c0_113 = arith.constant 0 : index
    %86 = vector.load %arg5[%c16, %c0_112, %c0_113] : memref<37x16x16xf32, #tpu.memory_space<vmem>>, vector<1x16x16xf32>
    %87 = vector.shape_cast %86 : vector<1x16x16xf32> to vector<16x16xf32>
    %88 = vector.shape_cast %85 : vector<16x16xf32> to vector<1x16x16xf32>
    tpu.vector_store %arg5[%c16, %c0_112, %c0_113], %88 {strides = array<i32>} : memref<37x16x16xf32, #tpu.memory_space<vmem>>, vector<1x16x16xf32>,
    %c0_114 = arith.constant 0 : index
    %c1_115 = arith.constant 1 : index
    %c2_116 = arith.constant 2 : index
    %c2_117 = arith.constant 2 : index
    %89 = vector.load %arg4[%c0_114, %c1_115, %c2_116, %c2_117] : memref<1x4x18x18xf32, #tpu.memory_space<vmem>>, vector<1x1x16x16xf32>
    %90 = vector.shape_cast %89 : vector<1x1x16x16xf32> to vector<16x16xf32>
    %c17 = arith.constant 17 : index
    %c0_118 = arith.constant 0 : index
    %c0_119 = arith.constant 0 : index
    %91 = vector.load %arg5[%c17, %c0_118, %c0_119] : memref<37x16x16xf32, #tpu.memory_space<vmem>>, vector<1x16x16xf32>
    %92 = vector.shape_cast %91 : vector<1x16x16xf32> to vector<16x16xf32>
    %93 = vector.shape_cast %90 : vector<16x16xf32> to vector<1x16x16xf32>
    tpu.vector_store %arg5[%c17, %c0_118, %c0_119], %93 {strides = array<i32>} : memref<37x16x16xf32, #tpu.memory_space<vmem>>, vector<1x16x16xf32>,
    %c0_120 = arith.constant 0 : index
    %c2_121 = arith.constant 2 : index
    %c0_122 = arith.constant 0 : index
    %c0_123 = arith.constant 0 : index
    %94 = vector.load %arg4[%c0_120, %c2_121, %c0_122, %c0_123] : memref<1x4x18x18xf32, #tpu.memory_space<vmem>>, vector<1x1x16x16xf32>
    %95 = vector.shape_cast %94 : vector<1x1x16x16xf32> to vector<16x16xf32>
    %c18 = arith.constant 18 : index
    %c0_124 = arith.constant 0 : index
    %c0_125 = arith.constant 0 : index
    %96 = vector.load %arg5[%c18, %c0_124, %c0_125] : memref<37x16x16xf32, #tpu.memory_space<vmem>>, vector<1x16x16xf32>
    %97 = vector.shape_cast %96 : vector<1x16x16xf32> to vector<16x16xf32>
    %98 = vector.shape_cast %95 : vector<16x16xf32> to vector<1x16x16xf32>
    tpu.vector_store %arg5[%c18, %c0_124, %c0_125], %98 {strides = array<i32>} : memref<37x16x16xf32, #tpu.memory_space<vmem>>, vector<1x16x16xf32>,
    %c0_126 = arith.constant 0 : index
    %c2_127 = arith.constant 2 : index
    %c0_128 = arith.constant 0 : index
    %c1_129 = arith.constant 1 : index
    %99 = vector.load %arg4[%c0_126, %c2_127, %c0_128, %c1_129] : memref<1x4x18x18xf32, #tpu.memory_space<vmem>>, vector<1x1x16x16xf32>
    %100 = vector.shape_cast %99 : vector<1x1x16x16xf32> to vector<16x16xf32>
    %c19 = arith.constant 19 : index
    %c0_130 = arith.constant 0 : index
    %c0_131 = arith.constant 0 : index
    %101 = vector.load %arg5[%c19, %c0_130, %c0_131] : memref<37x16x16xf32, #tpu.memory_space<vmem>>, vector<1x16x16xf32>
    %102 = vector.shape_cast %101 : vector<1x16x16xf32> to vector<16x16xf32>
    %103 = vector.shape_cast %100 : vector<16x16xf32> to vector<1x16x16xf32>
    tpu.vector_store %arg5[%c19, %c0_130, %c0_131], %103 {strides = array<i32>} : memref<37x16x16xf32, #tpu.memory_space<vmem>>, vector<1x16x16xf32>,
    %c0_132 = arith.constant 0 : index
    %c2_133 = arith.constant 2 : index
    %c0_134 = arith.constant 0 : index
    %c2_135 = arith.constant 2 : index
    %104 = vector.load %arg4[%c0_132, %c2_133, %c0_134, %c2_135] : memref<1x4x18x18xf32, #tpu.memory_space<vmem>>, vector<1x1x16x16xf32>
    %105 = vector.shape_cast %104 : vector<1x1x16x16xf32> to vector<16x16xf32>
    %c20 = arith.constant 20 : index
    %c0_136 = arith.constant 0 : index
    %c0_137 = arith.constant 0 : index
    %106 = vector.load %arg5[%c20, %c0_136, %c0_137] : memref<37x16x16xf32, #tpu.memory_space<vmem>>, vector<1x16x16xf32>
    %107 = vector.shape_cast %106 : vector<1x16x16xf32> to vector<16x16xf32>
    %108 = vector.shape_cast %105 : vector<16x16xf32> to vector<1x16x16xf32>
    tpu.vector_store %arg5[%c20, %c0_136, %c0_137], %108 {strides = array<i32>} : memref<37x16x16xf32, #tpu.memory_space<vmem>>, vector<1x16x16xf32>,
    %c0_138 = arith.constant 0 : index
    %c2_139 = arith.constant 2 : index
    %c1_140 = arith.constant 1 : index
    %c0_141 = arith.constant 0 : index
    %109 = vector.load %arg4[%c0_138, %c2_139, %c1_140, %c0_141] : memref<1x4x18x18xf32, #tpu.memory_space<vmem>>, vector<1x1x16x16xf32>
    %110 = vector.shape_cast %109 : vector<1x1x16x16xf32> to vector<16x16xf32>
    %c21 = arith.constant 21 : index
    %c0_142 = arith.constant 0 : index
    %c0_143 = arith.constant 0 : index
    %111 = vector.load %arg5[%c21, %c0_142, %c0_143] : memref<37x16x16xf32, #tpu.memory_space<vmem>>, vector<1x16x16xf32>
    %112 = vector.shape_cast %111 : vector<1x16x16xf32> to vector<16x16xf32>
    %113 = vector.shape_cast %110 : vector<16x16xf32> to vector<1x16x16xf32>
    tpu.vector_store %arg5[%c21, %c0_142, %c0_143], %113 {strides = array<i32>} : memref<37x16x16xf32, #tpu.memory_space<vmem>>, vector<1x16x16xf32>,
    %c0_144 = arith.constant 0 : index
    %c2_145 = arith.constant 2 : index
    %c1_146 = arith.constant 1 : index
    %c1_147 = arith.constant 1 : index
    %114 = vector.load %arg4[%c0_144, %c2_145, %c1_146, %c1_147] : memref<1x4x18x18xf32, #tpu.memory_space<vmem>>, vector<1x1x16x16xf32>
    %115 = vector.shape_cast %114 : vector<1x1x16x16xf32> to vector<16x16xf32>
    %c22 = arith.constant 22 : index
    %c0_148 = arith.constant 0 : index
    %c0_149 = arith.constant 0 : index
    %116 = vector.load %arg5[%c22, %c0_148, %c0_149] : memref<37x16x16xf32, #tpu.memory_space<vmem>>, vector<1x16x16xf32>
    %117 = vector.shape_cast %116 : vector<1x16x16xf32> to vector<16x16xf32>
    %118 = vector.shape_cast %115 : vector<16x16xf32> to vector<1x16x16xf32>
    tpu.vector_store %arg5[%c22, %c0_148, %c0_149], %118 {strides = array<i32>} : memref<37x16x16xf32, #tpu.memory_space<vmem>>, vector<1x16x16xf32>,
    %c0_150 = arith.constant 0 : index
    %c2_151 = arith.constant 2 : index
    %c1_152 = arith.constant 1 : index
    %c2_153 = arith.constant 2 : index
    %119 = vector.load %arg4[%c0_150, %c2_151, %c1_152, %c2_153] : memref<1x4x18x18xf32, #tpu.memory_space<vmem>>, vector<1x1x16x16xf32>
    %120 = vector.shape_cast %119 : vector<1x1x16x16xf32> to vector<16x16xf32>
    %c23 = arith.constant 23 : index
    %c0_154 = arith.constant 0 : index
    %c0_155 = arith.constant 0 : index
    %121 = vector.load %arg5[%c23, %c0_154, %c0_155] : memref<37x16x16xf32, #tpu.memory_space<vmem>>, vector<1x16x16xf32>
    %122 = vector.shape_cast %121 : vector<1x16x16xf32> to vector<16x16xf32>
    %123 = vector.shape_cast %120 : vector<16x16xf32> to vector<1x16x16xf32>
    tpu.vector_store %arg5[%c23, %c0_154, %c0_155], %123 {strides = array<i32>} : memref<37x16x16xf32, #tpu.memory_space<vmem>>, vector<1x16x16xf32>,
    %c0_156 = arith.constant 0 : index
    %c2_157 = arith.constant 2 : index
    %c2_158 = arith.constant 2 : index
    %c0_159 = arith.constant 0 : index
    %124 = vector.load %arg4[%c0_156, %c2_157, %c2_158, %c0_159] : memref<1x4x18x18xf32, #tpu.memory_space<vmem>>, vector<1x1x16x16xf32>
    %125 = vector.shape_cast %124 : vector<1x1x16x16xf32> to vector<16x16xf32>
    %c24 = arith.constant 24 : index
    %c0_160 = arith.constant 0 : index
    %c0_161 = arith.constant 0 : index
    %126 = vector.load %arg5[%c24, %c0_160, %c0_161] : memref<37x16x16xf32, #tpu.memory_space<vmem>>, vector<1x16x16xf32>
    %127 = vector.shape_cast %126 : vector<1x16x16xf32> to vector<16x16xf32>
    %128 = vector.shape_cast %125 : vector<16x16xf32> to vector<1x16x16xf32>
    tpu.vector_store %arg5[%c24, %c0_160, %c0_161], %128 {strides = array<i32>} : memref<37x16x16xf32, #tpu.memory_space<vmem>>, vector<1x16x16xf32>,
    %c0_162 = arith.constant 0 : index
    %c2_163 = arith.constant 2 : index
    %c2_164 = arith.constant 2 : index
    %c1_165 = arith.constant 1 : index
    %129 = vector.load %arg4[%c0_162, %c2_163, %c2_164, %c1_165] : memref<1x4x18x18xf32, #tpu.memory_space<vmem>>, vector<1x1x16x16xf32>
    %130 = vector.shape_cast %129 : vector<1x1x16x16xf32> to vector<16x16xf32>
    %c25 = arith.constant 25 : index
    %c0_166 = arith.constant 0 : index
    %c0_167 = arith.constant 0 : index
    %131 = vector.load %arg5[%c25, %c0_166, %c0_167] : memref<37x16x16xf32, #tpu.memory_space<vmem>>, vector<1x16x16xf32>
    %132 = vector.shape_cast %131 : vector<1x16x16xf32> to vector<16x16xf32>
    %133 = vector.shape_cast %130 : vector<16x16xf32> to vector<1x16x16xf32>
    tpu.vector_store %arg5[%c25, %c0_166, %c0_167], %133 {strides = array<i32>} : memref<37x16x16xf32, #tpu.memory_space<vmem>>, vector<1x16x16xf32>,
    %c0_168 = arith.constant 0 : index
    %c2_169 = arith.constant 2 : index
    %c2_170 = arith.constant 2 : index
    %c2_171 = arith.constant 2 : index
    %134 = vector.load %arg4[%c0_168, %c2_169, %c2_170, %c2_171] : memref<1x4x18x18xf32, #tpu.memory_space<vmem>>, vector<1x1x16x16xf32>
    %135 = vector.shape_cast %134 : vector<1x1x16x16xf32> to vector<16x16xf32>
    %c26 = arith.constant 26 : index
    %c0_172 = arith.constant 0 : index
    %c0_173 = arith.constant 0 : index
    %136 = vector.load %arg5[%c26, %c0_172, %c0_173] : memref<37x16x16xf32, #tpu.memory_space<vmem>>, vector<1x16x16xf32>
    %137 = vector.shape_cast %136 : vector<1x16x16xf32> to vector<16x16xf32>
    %138 = vector.shape_cast %135 : vector<16x16xf32> to vector<1x16x16xf32>
    tpu.vector_store %arg5[%c26, %c0_172, %c0_173], %138 {strides = array<i32>} : memref<37x16x16xf32, #tpu.memory_space<vmem>>, vector<1x16x16xf32>,
    %c0_174 = arith.constant 0 : index
    %c3_175 = arith.constant 3 : index
    %c0_176 = arith.constant 0 : index
    %c0_177 = arith.constant 0 : index
    %139 = vector.load %arg4[%c0_174, %c3_175, %c0_176, %c0_177] : memref<1x4x18x18xf32, #tpu.memory_space<vmem>>, vector<1x1x16x16xf32>
    %140 = vector.shape_cast %139 : vector<1x1x16x16xf32> to vector<16x16xf32>
    %c27 = arith.constant 27 : index
    %c0_178 = arith.constant 0 : index
    %c0_179 = arith.constant 0 : index
    %141 = vector.load %arg5[%c27, %c0_178, %c0_179] : memref<37x16x16xf32, #tpu.memory_space<vmem>>, vector<1x16x16xf32>
    %142 = vector.shape_cast %141 : vector<1x16x16xf32> to vector<16x16xf32>
    %143 = vector.shape_cast %140 : vector<16x16xf32> to vector<1x16x16xf32>
    tpu.vector_store %arg5[%c27, %c0_178, %c0_179], %143 {strides = array<i32>} : memref<37x16x16xf32, #tpu.memory_space<vmem>>, vector<1x16x16xf32>,
    %c0_180 = arith.constant 0 : index
    %c3_181 = arith.constant 3 : index
    %c0_182 = arith.constant 0 : index
    %c1_183 = arith.constant 1 : index
    %144 = vector.load %arg4[%c0_180, %c3_181, %c0_182, %c1_183] : memref<1x4x18x18xf32, #tpu.memory_space<vmem>>, vector<1x1x16x16xf32>
    %145 = vector.shape_cast %144 : vector<1x1x16x16xf32> to vector<16x16xf32>
    %c28 = arith.constant 28 : index
    %c0_184 = arith.constant 0 : index
    %c0_185 = arith.constant 0 : index
    %146 = vector.load %arg5[%c28, %c0_184, %c0_185] : memref<37x16x16xf32, #tpu.memory_space<vmem>>, vector<1x16x16xf32>
    %147 = vector.shape_cast %146 : vector<1x16x16xf32> to vector<16x16xf32>
    %148 = vector.shape_cast %145 : vector<16x16xf32> to vector<1x16x16xf32>
    tpu.vector_store %arg5[%c28, %c0_184, %c0_185], %148 {strides = array<i32>} : memref<37x16x16xf32, #tpu.memory_space<vmem>>, vector<1x16x16xf32>,
    %c0_186 = arith.constant 0 : index
    %c3_187 = arith.constant 3 : index
    %c0_188 = arith.constant 0 : index
    %c2_189 = arith.constant 2 : index
    %149 = vector.load %arg4[%c0_186, %c3_187, %c0_188, %c2_189] : memref<1x4x18x18xf32, #tpu.memory_space<vmem>>, vector<1x1x16x16xf32>
    %150 = vector.shape_cast %149 : vector<1x1x16x16xf32> to vector<16x16xf32>
    %c29 = arith.constant 29 : index
    %c0_190 = arith.constant 0 : index
    %c0_191 = arith.constant 0 : index
    %151 = vector.load %arg5[%c29, %c0_190, %c0_191] : memref<37x16x16xf32, #tpu.memory_space<vmem>>, vector<1x16x16xf32>
    %152 = vector.shape_cast %151 : vector<1x16x16xf32> to vector<16x16xf32>
    %153 = vector.shape_cast %150 : vector<16x16xf32> to vector<1x16x16xf32>
    tpu.vector_store %arg5[%c29, %c0_190, %c0_191], %153 {strides = array<i32>} : memref<37x16x16xf32, #tpu.memory_space<vmem>>, vector<1x16x16xf32>,
    %c0_192 = arith.constant 0 : index
    %c3_193 = arith.constant 3 : index
    %c1_194 = arith.constant 1 : index
    %c0_195 = arith.constant 0 : index
    %154 = vector.load %arg4[%c0_192, %c3_193, %c1_194, %c0_195] : memref<1x4x18x18xf32, #tpu.memory_space<vmem>>, vector<1x1x16x16xf32>
    %155 = vector.shape_cast %154 : vector<1x1x16x16xf32> to vector<16x16xf32>
    %c30 = arith.constant 30 : index
    %c0_196 = arith.constant 0 : index
    %c0_197 = arith.constant 0 : index
    %156 = vector.load %arg5[%c30, %c0_196, %c0_197] : memref<37x16x16xf32, #tpu.memory_space<vmem>>, vector<1x16x16xf32>
    %157 = vector.shape_cast %156 : vector<1x16x16xf32> to vector<16x16xf32>
    %158 = vector.shape_cast %155 : vector<16x16xf32> to vector<1x16x16xf32>
    tpu.vector_store %arg5[%c30, %c0_196, %c0_197], %158 {strides = array<i32>} : memref<37x16x16xf32, #tpu.memory_space<vmem>>, vector<1x16x16xf32>,
    %c0_198 = arith.constant 0 : index
    %c3_199 = arith.constant 3 : index
    %c1_200 = arith.constant 1 : index
    %c1_201 = arith.constant 1 : index
    %159 = vector.load %arg4[%c0_198, %c3_199, %c1_200, %c1_201] : memref<1x4x18x18xf32, #tpu.memory_space<vmem>>, vector<1x1x16x16xf32>
    %160 = vector.shape_cast %159 : vector<1x1x16x16xf32> to vector<16x16xf32>
    %c31 = arith.constant 31 : index
    %c0_202 = arith.constant 0 : index
    %c0_203 = arith.constant 0 : index
    %161 = vector.load %arg5[%c31, %c0_202, %c0_203] : memref<37x16x16xf32, #tpu.memory_space<vmem>>, vector<1x16x16xf32>
    %162 = vector.shape_cast %161 : vector<1x16x16xf32> to vector<16x16xf32>
    %163 = vector.shape_cast %160 : vector<16x16xf32> to vector<1x16x16xf32>
    tpu.vector_store %arg5[%c31, %c0_202, %c0_203], %163 {strides = array<i32>} : memref<37x16x16xf32, #tpu.memory_space<vmem>>, vector<1x16x16xf32>,
    %c0_204 = arith.constant 0 : index
    %c3_205 = arith.constant 3 : index
    %c1_206 = arith.constant 1 : index
    %c2_207 = arith.constant 2 : index
    %164 = vector.load %arg4[%c0_204, %c3_205, %c1_206, %c2_207] : memref<1x4x18x18xf32, #tpu.memory_space<vmem>>, vector<1x1x16x16xf32>
    %165 = vector.shape_cast %164 : vector<1x1x16x16xf32> to vector<16x16xf32>
    %c32 = arith.constant 32 : index
    %c0_208 = arith.constant 0 : index
    %c0_209 = arith.constant 0 : index
    %166 = vector.load %arg5[%c32, %c0_208, %c0_209] : memref<37x16x16xf32, #tpu.memory_space<vmem>>, vector<1x16x16xf32>
    %167 = vector.shape_cast %166 : vector<1x16x16xf32> to vector<16x16xf32>
    %168 = vector.shape_cast %165 : vector<16x16xf32> to vector<1x16x16xf32>
    tpu.vector_store %arg5[%c32, %c0_208, %c0_209], %168 {strides = array<i32>} : memref<37x16x16xf32, #tpu.memory_space<vmem>>, vector<1x16x16xf32>,
    %c0_210 = arith.constant 0 : index
    %c3_211 = arith.constant 3 : index
    %c2_212 = arith.constant 2 : index
    %c0_213 = arith.constant 0 : index
    %169 = vector.load %arg4[%c0_210, %c3_211, %c2_212, %c0_213] : memref<1x4x18x18xf32, #tpu.memory_space<vmem>>, vector<1x1x16x16xf32>
    %170 = vector.shape_cast %169 : vector<1x1x16x16xf32> to vector<16x16xf32>
    %c33 = arith.constant 33 : index
    %c0_214 = arith.constant 0 : index
    %c0_215 = arith.constant 0 : index
    %171 = vector.load %arg5[%c33, %c0_214, %c0_215] : memref<37x16x16xf32, #tpu.memory_space<vmem>>, vector<1x16x16xf32>
    %172 = vector.shape_cast %171 : vector<1x16x16xf32> to vector<16x16xf32>
    %173 = vector.shape_cast %170 : vector<16x16xf32> to vector<1x16x16xf32>
    tpu.vector_store %arg5[%c33, %c0_214, %c0_215], %173 {strides = array<i32>} : memref<37x16x16xf32, #tpu.memory_space<vmem>>, vector<1x16x16xf32>,
    %c0_216 = arith.constant 0 : index
    %c3_217 = arith.constant 3 : index
    %c2_218 = arith.constant 2 : index
    %c1_219 = arith.constant 1 : index
    %174 = vector.load %arg4[%c0_216, %c3_217, %c2_218, %c1_219] : memref<1x4x18x18xf32, #tpu.memory_space<vmem>>, vector<1x1x16x16xf32>
    %175 = vector.shape_cast %174 : vector<1x1x16x16xf32> to vector<16x16xf32>
    %c34 = arith.constant 34 : index
    %c0_220 = arith.constant 0 : index
    %c0_221 = arith.constant 0 : index
    %176 = vector.load %arg5[%c34, %c0_220, %c0_221] : memref<37x16x16xf32, #tpu.memory_space<vmem>>, vector<1x16x16xf32>
    %177 = vector.shape_cast %176 : vector<1x16x16xf32> to vector<16x16xf32>
    %178 = vector.shape_cast %175 : vector<16x16xf32> to vector<1x16x16xf32>
    tpu.vector_store %arg5[%c34, %c0_220, %c0_221], %178 {strides = array<i32>} : memref<37x16x16xf32, #tpu.memory_space<vmem>>, vector<1x16x16xf32>,
    %c0_222 = arith.constant 0 : index
    %c3_223 = arith.constant 3 : index
    %c2_224 = arith.constant 2 : index
    %c2_225 = arith.constant 2 : index
    %179 = vector.load %arg4[%c0_222, %c3_223, %c2_224, %c2_225] : memref<1x4x18x18xf32, #tpu.memory_space<vmem>>, vector<1x1x16x16xf32>
    %180 = vector.shape_cast %179 : vector<1x1x16x16xf32> to vector<16x16xf32>
    %c35 = arith.constant 35 : index
    %c0_226 = arith.constant 0 : index
    %c0_227 = arith.constant 0 : index
    %181 = vector.load %arg5[%c35, %c0_226, %c0_227] : memref<37x16x16xf32, #tpu.memory_space<vmem>>, vector<1x16x16xf32>
    %182 = vector.shape_cast %181 : vector<1x16x16xf32> to vector<16x16xf32>
    %183 = vector.shape_cast %180 : vector<16x16xf32> to vector<1x16x16xf32>
    tpu.vector_store %arg5[%c35, %c0_226, %c0_227], %183 {strides = array<i32>} : memref<37x16x16xf32, #tpu.memory_space<vmem>>, vector<1x16x16xf32>,
    %cst_228 = arith.constant 1.000000e+00 : f32
    %184 = vector.broadcast %cst_228 : f32 to vector<16x16xf32>
    %c36 = arith.constant 36 : index
    %c0_229 = arith.constant 0 : index
    %c0_230 = arith.constant 0 : index
    %185 = vector.load %arg5[%c36, %c0_229, %c0_230] : memref<37x16x16xf32, #tpu.memory_space<vmem>>, vector<1x16x16xf32>
    %186 = vector.shape_cast %185 : vector<1x16x16xf32> to vector<16x16xf32>
    %187 = vector.shape_cast %184 : vector<16x16xf32> to vector<1x16x16xf32>
    tpu.vector_store %arg5[%c36, %c0_229, %c0_230], %187 {strides = array<i32>} : memref<37x16x16xf32, #tpu.memory_space<vmem>>, vector<1x16x16xf32>,
    %c0_231 = arith.constant 0 : index
    %c0_232 = arith.constant 0 : index
    %188 = vector.load %arg2[%c0_231, %c0_232] : memref<8x37xf32, #tpu.memory_space<vmem>>, vector<8x37xf32>
    %c0_233 = arith.constant 0 : index
    %c0_234 = arith.constant 0 : index
    %c0_235 = arith.constant 0 : index
    %189 = vector.load %arg5[%c0_233, %c0_234, %c0_235] : memref<37x16x16xf32, #tpu.memory_space<vmem>>, vector<37x16x16xf32>
    %cst_236 = arith.constant dense<0.000000e+00> : vector<8x16x16xf32>
    %190 = tpu.matmul %188, %189, %cst_236 {dimension_numbers = #tpu.dot_dimension_numbers<[1], [0], [0], [1, 2], [0, 0, 1, 1, 1, 2], [], []>} : vector<8x37xf32>, vector<37x16x16xf32>, vector<8x16x16xf32> -> vector<8x16x16xf32>
    %cst_237 = arith.constant dense<0xFF800000> : vector<8x16xf32>
    %191 = vector.multi_reduction <maximumf>, %190, %cst_237 [2] : vector<8x16x16xf32> to vector<8x16xf32>
    %192 = vector.shape_cast %191 : vector<8x16xf32> to vector<8x16x1xf32>
    %193 = vector.broadcast %192 : vector<8x16x1xf32> to vector<8x16x16xf32>
    %194 = arith.subf %190, %193 : vector<8x16x16xf32>
    %195 = math.exp %194 : vector<8x16x16xf32>
    %cst_238 = arith.constant dense<0.000000e+00> : vector<8x16xf32>
    %196 = vector.multi_reduction <add>, %195, %cst_238 [2] : vector<8x16x16xf32> to vector<8x16xf32>
    %197 = vector.shape_cast %196 : vector<8x16xf32> to vector<8x16x1xf32>
    %198 = tpu.reciprocal %197 {approx = true} : vector<8x16x1xf32> -> vector<8x16x1xf32>
    %199 = arith.mulf %197, %198 : vector<8x16x1xf32>
    %cst_239 = arith.constant 2.000000e+00 : f32
    %200 = vector.broadcast %cst_239 : f32 to vector<8x16x1xf32>
    %201 = arith.subf %200, %199 : vector<8x16x1xf32>
    %202 = arith.mulf %198, %201 : vector<8x16x1xf32>
    %203 = vector.broadcast %202 : vector<8x16x1xf32> to vector<8x16x16xf32>
    %204 = arith.mulf %195, %203 : vector<8x16x16xf32>
    %cst_240 = arith.constant dense<0.000000e+00> : vector<16x16xf32>
    %205 = vector.multi_reduction <add>, %204, %cst_240 [0] : vector<8x16x16xf32> to vector<16x16xf32>
    %c0_241 = arith.constant 0 : index
    %c0_242 = arith.constant 0 : index
    %c0_243 = arith.constant 0 : index
    %c0_244 = arith.constant 0 : index
    %206 = vector.load %arg1[%c0_241, %c0_242, %c0_243, %c0_244] : memref<1x4x16x16xf32, #tpu.memory_space<vmem>>, vector<1x1x16x16xf32>
    %207 = vector.shape_cast %206 : vector<1x1x16x16xf32> to vector<16x16xf32>
    %208 = arith.mulf %207, %205 : vector<16x16xf32>
    %c0_245 = arith.constant 0 : index
    %c0_246 = arith.constant 0 : index
    %c0_247 = arith.constant 0 : index
    %209 = vector.load %arg3[%c0_245, %c0_246, %c0_247] : memref<1x64x16xf32, #tpu.memory_space<vmem>>, vector<1x16x16xf32>
    %210 = vector.shape_cast %209 : vector<1x16x16xf32> to vector<16x16xf32>
    %211 = vector.shape_cast %208 : vector<16x16xf32> to vector<1x16x16xf32>
    tpu.vector_store %arg3[%c0_245, %c0_246, %c0_247], %211 {strides = array<i32>} : memref<1x64x16xf32, #tpu.memory_space<vmem>>, vector<1x16x16xf32>,
    %c0_248 = arith.constant 0 : index
    %c1_249 = arith.constant 1 : index
    %c0_250 = arith.constant 0 : index
    %c0_251 = arith.constant 0 : index
    %212 = vector.load %arg1[%c0_248, %c1_249, %c0_250, %c0_251] : memref<1x4x16x16xf32, #tpu.memory_space<vmem>>, vector<1x1x16x16xf32>
    %213 = vector.shape_cast %212 : vector<1x1x16x16xf32> to vector<16x16xf32>
    %214 = arith.mulf %213, %205 : vector<16x16xf32>
    %c0_252 = arith.constant 0 : index
    %c16_253 = arith.constant 16 : index
    %c0_254 = arith.constant 0 : index
    %215 = vector.load %arg3[%c0_252, %c16_253, %c0_254] : memref<1x64x16xf32, #tpu.memory_space<vmem>>, vector<1x16x16xf32>
    %216 = vector.shape_cast %215 : vector<1x16x16xf32> to vector<16x16xf32>
    %217 = vector.shape_cast %214 : vector<16x16xf32> to vector<1x16x16xf32>
    tpu.vector_store %arg3[%c0_252, %c16_253, %c0_254], %217 {strides = array<i32>} : memref<1x64x16xf32, #tpu.memory_space<vmem>>, vector<1x16x16xf32>,
    %c0_255 = arith.constant 0 : index
    %c2_256 = arith.constant 2 : index
    %c0_257 = arith.constant 0 : index
    %c0_258 = arith.constant 0 : index
    %218 = vector.load %arg1[%c0_255, %c2_256, %c0_257, %c0_258] : memref<1x4x16x16xf32, #tpu.memory_space<vmem>>, vector<1x1x16x16xf32>
    %219 = vector.shape_cast %218 : vector<1x1x16x16xf32> to vector<16x16xf32>
    %220 = arith.mulf %219, %205 : vector<16x16xf32>
    %c0_259 = arith.constant 0 : index
    %c32_260 = arith.constant 32 : index
    %c0_261 = arith.constant 0 : index
    %221 = vector.load %arg3[%c0_259, %c32_260, %c0_261] : memref<1x64x16xf32, #tpu.memory_space<vmem>>, vector<1x16x16xf32>
    %222 = vector.shape_cast %221 : vector<1x16x16xf32> to vector<16x16xf32>
    %223 = vector.shape_cast %220 : vector<16x16xf32> to vector<1x16x16xf32>
    tpu.vector_store %arg3[%c0_259, %c32_260, %c0_261], %223 {strides = array<i32>} : memref<1x64x16xf32, #tpu.memory_space<vmem>>, vector<1x16x16xf32>,
    %c0_262 = arith.constant 0 : index
    %c3_263 = arith.constant 3 : index
    %c0_264 = arith.constant 0 : index
    %c0_265 = arith.constant 0 : index
    %224 = vector.load %arg1[%c0_262, %c3_263, %c0_264, %c0_265] : memref<1x4x16x16xf32, #tpu.memory_space<vmem>>, vector<1x1x16x16xf32>
    %225 = vector.shape_cast %224 : vector<1x1x16x16xf32> to vector<16x16xf32>
    %226 = arith.mulf %225, %205 : vector<16x16xf32>
    %c0_266 = arith.constant 0 : index
    %c48 = arith.constant 48 : index
    %c0_267 = arith.constant 0 : index
    %227 = vector.load %arg3[%c0_266, %c48, %c0_267] : memref<1x64x16xf32, #tpu.memory_space<vmem>>, vector<1x16x16xf32>
    %228 = vector.shape_cast %227 : vector<1x16x16xf32> to vector<16x16xf32>
    %229 = vector.shape_cast %226 : vector<16x16xf32> to vector<1x16x16xf32>
    tpu.vector_store %arg3[%c0_266, %c48, %c0_267], %229 {strides = array<i32>} : memref<1x64x16xf32, #tpu.memory_space<vmem>>, vector<1x16x16xf32>,
    return
  }
  func.func @transform_0(%arg0: i32) -> (i32, i32, i32, i32) {
    %c0_i32 = arith.constant 0 : i32
    %c0_i32_0 = arith.constant 0 : i32
    %c0_i32_1 = arith.constant 0 : i32
    %c0_i32_2 = arith.constant 0 : i32
    return %arg0, %c0_i32, %c0_i32_0, %c0_i32_1 : i32, i32, i32, i32
  }
  func.func @transform_1(%arg0: i32) -> (i32, i32) {
    %c0_i32 = arith.constant 0 : i32
    %c0_i32_0 = arith.constant 0 : i32
    %c0_i32_1 = arith.constant 0 : i32
    return %c0_i32, %c0_i32_0 : i32, i32
  }
  func.func @transform_2(%arg0: i32) -> (i32, i32, i32) {
    %c0_i32 = arith.constant 0 : i32
    %c0_i32_0 = arith.constant 0 : i32
    %c0_i32_1 = arith.constant 0 : i32
    return %arg0, %c0_i32, %c0_i32_0 : i32, i32, i32
  }
}

</mosaic_0001>

<llo_original>
// kernel: tpu_custom_call.1
$region0: #{tpu_custom_call.1}
  #allocation0 [shape = 'u32[]', space=smem, size = 0x4, offset = 0x4, fixed_abs, tag = 'smem constant byte address 0x4 - core index']
  #allocation1 [shape = 'u32[144,128]{1,0:T(1,128)}', space=vmem, size = 0x12000, scoped, tag = 'internal scratch']
  #allocation2 [shape = 'f32[1,4,18,18]{3,2,1,0:T(8,128)}', space=vmem, size = 0xc000, scoped, tag = 'scratch operand']
  #allocation3 [shape = 'f32[37,16,16]{2,1,0:T(8,128)}', space=vmem, size = 0x4a000, scoped, tag = 'scratch operand']
  %s0 = inlined_call_operand.hbm [shape: f32[2,4,16,16], index: 0, kind: input, shape index: {}]
  %s1 = inlined_call_operand.hbm [shape: f32[8,37], index: 1, kind: input, shape index: {}]
  %s2 = inlined_call_operand.vmem [shape: f32[2,64,16], index: 2, kind: output, shape index: {}]
  %s3 = sld [smem:[#allocation0]]
  $region49: #{tpu_custom_call.1} parent=0
    _
  %s5 = ssub.s32 1, %s3
  %s6 = scalar_select 0, %s5, %s3
  $region1: #{tpu_custom_call.1} parent=0
    #allocation4 [shape = 'u8[65536]{0}', space=vmem, size = 0x10000, scoped, tag = 'input window, operand 0']
    #allocation5 [shape = 's32[2]{0}', space=sflag, size = 0x8, scoped, tag = 'scoped memory for tpu_custom_call.1']
    #allocation6 [shape = 'u8[4096]{0}', space=vmem, size = 0x1000, scoped, tag = 'input window, operand 1, single buffered']
    #allocation7 [shape = 's32[1]{0}', space=sflag, size = 0x4, scoped, tag = 'scoped memory for tpu_custom_call.1']
    %7 = vsyncpa [#allocation5], 0
    %s8 = scalar_lea.sflag [#allocation5], 1
    %9 = vsyncpa %s8, 0
    %10 = vsyncpa [#allocation7], 0
    loop: start=0, step=1, limit=4
    $region2: #{tpu_custom_call.1} parent=1 // loop_pre_header
      _
    $region3: #{tpu_custom_call.1} parent=1 // loop_header
      %s12 = sphi 0, %s16
      %p13 = scmp.ge.s32.totalorder %s12, 4
      %s22 = sphi 0, %s24
      %s25 = sphi 0, %s22
      %s26 = sphi 0, %s25
      %s42 = sphi 0, %s26
      %s46 = sphi 0, %s46
      %s48 = sphi 0, %s46
      %s49 = sphi 0, %s48
      %s63 = sphi 0, %s49
      %s69 = sphi 0, %s71
      %s72 = sphi 0, %s69
      %s73 = sphi 0, %s72
      %s89 = sphi 0, %s73
    $region4: #{tpu_custom_call.1} parent=1 // loop_header_branch
      %15 = sbr.rel (%p13) target = $region8
    $region5: #{tpu_custom_call.1} parent=1 // loop_body
      %s17 = ssub.s32 %s12, 1
      %s18 = ssub.s32 %s12, 2
      %s19 = sadd.s32 %s12, 1
      %s20 = ssub.s32 %s12, %s19
      %p21 = scmp.eq.s32.totalorder %s20, 0
      %s23 = sadd.s32 %s22, 1
      %s24 = scalar_select %p21, %s22, %s23
      %p27 = pneg %p21
      %p28 = scmp.eq.s32.totalorder %s12, 1
      %p29 = por %p27, %p28
      %p30 = scmp.ne.s32.totalorder %s22, %s25
      %p31 = scmp.eq.s32.totalorder %s12, 0
      %p32 = por %p30, %p31
      %p33 = scmp.ne.s32.totalorder %s22, %s25
      %p34 = scmp.eq.s32.totalorder %s17, 1
      %p35 = por %p33, %p34
      %p36 = scmp.ne.s32.totalorder %s25, %s26
      %p37 = scmp.eq.s32.totalorder %s17, 0
      %p38 = por %p36, %p37
      %p39 = scmp.ne.s32.totalorder %s25, %s26
      %p40 = scmp.eq.s32.totalorder %s18, 1
      %p41 = por %p39, %p40
      %p43 = scmp.ne.s32.totalorder %s26, %s42
      %p44 = scmp.eq.s32.totalorder %s18, 0
      %p45 = por %p43, %p44
      %s47 = sadd.s32 %s46, 1
      %p50 = scmp.eq.s32.totalorder %s12, 1
      %p51 = scmp.ne.s32.totalorder %s46, %s48
      %p52 = scmp.eq.s32.totalorder %s12, 0
      %p53 = por %p51, %p52
      %p54 = scmp.ne.s32.totalorder %s46, %s48
      %p55 = scmp.eq.s32.totalorder %s17, 1
      %p56 = por %p54, %p55
      %p57 = scmp.ne.s32.totalorder %s48, %s49
      %p58 = scmp.eq.s32.totalorder %s17, 0
      %p59 = por %p57, %p58
      %p60 = scmp.ne.s32.totalorder %s48, %s49
      %p61 = scmp.eq.s32.totalorder %s18, 1
      %p62 = por %p60, %p61
      %p64 = scmp.ne.s32.totalorder %s49, %s63
      %p65 = scmp.eq.s32.totalorder %s18, 0
      %p66 = por %p64, %p65
      %s67 = ssub.s32 %s12, %s19
      %p68 = scmp.eq.s32.totalorder %s67, 0
      %s70 = sadd.s32 %s69, 1
      %s71 = scalar_select %p68, %s69, %s70
      %p74 = pneg %p68
      %p75 = scmp.eq.s32.totalorder %s12, 1
      %p76 = por %p74, %p75
      %p77 = scmp.ne.s32.totalorder %s69, %s72
      %p78 = scmp.eq.s32.totalorder %s12, 0
      %p79 = por %p77, %p78
      %p80 = scmp.ne.s32.totalorder %s69, %s72
      %p81 = scmp.eq.s32.totalorder %s17, 1
      %p82 = por %p80, %p81
      %p83 = scmp.ne.s32.totalorder %s72, %s73
      %p84 = scmp.eq.s32.totalorder %s17, 0
      %p85 = por %p83, %p84
      %p86 = scmp.ne.s32.totalorder %s72, %s73
      %p87 = scmp.eq.s32.totalorder %s18, 1
      %p88 = por %p86, %p87
      %p90 = scmp.ne.s32.totalorder %s73, %s89
      %p91 = scmp.eq.s32.totalorder %s18, 0
      %p92 = por %p90, %p91
      %p93 = scmp.le.s32.totalorder 1, %s12
      %p94 = scmp.lt.s32.totalorder %s12, 3
      %p95 = pnand %p93, %p94
      %p96 = pneg %p95
      // Predicated region
      $region9: #{tpu_custom_call.1} parent=5 // pred_check
        _
      $region10: #{tpu_custom_call.1} parent=5 // pred_check_branch
        %98 = sbr.rel (%p95) target = $region12
      $region11: #{tpu_custom_call.1} parent=5 // pred_region
        %s99 = ssub.s32 %s12, 1
        // Predicated region
        $region13: #{tpu_custom_call.1} parent=11 // pred_check
          %p100 = pneg %p59
        $region14: #{tpu_custom_call.1} parent=11 // pred_check_branch
          %102 = sbr.rel (%p100) target = $region16
        $region15: #{tpu_custom_call.1} parent=11 // pred_region
          %s104 = ssub.s32 128, 128
          %105 = vsyncadd [#allocation7], %s104
          %s107 = sshll.u32 [#allocation6], 4
          %s108 = int_to_ptr.vmem [resolvable:$true] %s107
          %110 = dma.hbm_to_vmem [thread:$0]  %s1, 128, %s108, [#allocation7]
        $region16: #{tpu_custom_call.1} parent=11 // pred_fallthru
          _
      $region12: #{tpu_custom_call.1} parent=5 // pred_fallthru
        _
      %p111 = scmp.lt.s32.totalorder %s12, 2
      // Predicated region
      $region17: #{tpu_custom_call.1} parent=5 // pred_check
        %p112 = pneg %p111
      $region18: #{tpu_custom_call.1} parent=5 // pred_check_branch
        %114 = sbr.rel (%p112) target = $region20
      $region19: #{tpu_custom_call.1} parent=5 // pred_region
        // Predicated region
        $region21: #{tpu_custom_call.1} parent=19 // pred_check
          %p115 = pneg %p32
        $region22: #{tpu_custom_call.1} parent=19 // pred_check_branch
          %117 = sbr.rel (%p115) target = $region24
        $region23: #{tpu_custom_call.1} parent=19 // pred_region
          %s118 = sand.u32 %s22, 1
          %s119 = scalar_lea.sflag [#allocation5], %s118
          %s120 = sand.u32 %s22, 1
          %s121 = smul.addr %s120, 64
          %s122 = scalar_lea.vmem [#allocation4], %s121
          %s124 = ssub.s32 1024, 1024
          %125 = vsyncadd %s119, %s124
          %s126 = smul.addr %s12, 8
          %s127 = smul.addr %s126, 128
          %s128 = scalar_lea.hbm %s0, %s127
          %s129 = sshll.u32 %s122, 4
          %s130 = int_to_ptr.vmem [resolvable:$true] %s129
          %135 = dma.hbm_to_vmem [thread:$0]  %s128, 1024, %s130, %s119, 128, 128, 8
        $region24: #{tpu_custom_call.1} parent=19 // pred_fallthru
          _
      $region20: #{tpu_custom_call.1} parent=5 // pred_fallthru
        _
      %p136 = scmp.le.s32.totalorder 1, %s12
      %p137 = scmp.lt.s32.totalorder %s12, 3
      %p138 = pnand %p136, %p137
      %p139 = pneg %p138
      // Predicated region
      $region25: #{tpu_custom_call.1} parent=5 // pred_check
        _
      $region26: #{tpu_custom_call.1} parent=5 // pred_check_branch
        %141 = sbr.rel (%p138) target = $region28
      $region27: #{tpu_custom_call.1} parent=5 // pred_region
        %s142 = ssub.s32 %s12, 1
        %s143 = sand.u32 %s25, 1
        %s144 = scalar_lea.sflag [#allocation5], %s143
        %s145 = sand.u32 %s25, 1
        %s146 = smul.addr %s145, 64
        %s147 = scalar_lea.vmem [#allocation4], %s146
        // Predicated region
        $region29: #{tpu_custom_call.1} parent=27 // pred_check
          %p148 = pneg %p38
        $region30: #{tpu_custom_call.1} parent=27 // pred_check_branch
          %150 = sbr.rel (%p148) target = $region32
        $region31: #{tpu_custom_call.1} parent=27 // pred_region
          %151 = dma.done %s144, 1024
        $region32: #{tpu_custom_call.1} parent=27 // pred_fallthru
          _
        // Predicated region
        $region33: #{tpu_custom_call.1} parent=27 // pred_check
          %p152 = pneg %p59
        $region34: #{tpu_custom_call.1} parent=27 // pred_check_branch
          %154 = sbr.rel (%p152) target = $region36
        $region35: #{tpu_custom_call.1} parent=27 // pred_region
          %155 = dma.done [#allocation7], 128
        $region36: #{tpu_custom_call.1} parent=27 // pred_fallthru
          _
        %s156 = sand.u32 %s25, 1
        %s157 = scalar_lea.sflag [#allocation5], %s156
        %s158 = sand.u32 %s25, 1
        %s159 = smul.addr %s158, 64
        %s160 = scalar_lea.vmem [#allocation4], %s159
        %p161 = pneg %p38
        %p162 = pneg %p35
        %p163 = pneg %p59
        %p164 = pneg %p56
        %p165 = pneg %p85
        %p166 = pneg %p82
        %p167 = scmp.lt.s32.totalorder %s17, 1
        %s168 = scalar_select %p167, %s17, 1
        %s169 = smul.addr %s168, 8
        %s170 = smul.addr %s169, 8
        %s171 = scalar_lea.vmem %s2, %s170
        %p172 = scmp.lt.s32.totalorder %s17, 1
        %s173 = scalar_select %p172, %s17, 1
        %s174 = smul.addr %s173, 8
        %s175 = smul.addr %s174, 8
        %s176 = scalar_lea.vmem %s2, %s175
        %vm177 = vcmask 146432
        %178 = vst.msk [vmem:[#allocation2] sm:$0xff] %vm177, 0.0
        %179 = vst.msk [vmem:[#allocation2 + $0x8] sm:$0xff] %vm177, 0.0
        %vm180 = vcmask 140288
        %181 = vst.msk [vmem:[#allocation2 + $0x10] sm:$0x3] %vm180, 0.0
        %182 = vst.msk [vmem:[#allocation2 + $0x18] sm:$0xff] %vm177, 0.0
        %183 = vst.msk [vmem:[#allocation2 + $0x20] sm:$0xff] %vm177, 0.0
        %184 = vst.msk [vmem:[#allocation2 + $0x28] sm:$0x3] %vm180, 0.0
        %185 = vst.msk [vmem:[#allocation2 + $0x30] sm:$0xff] %vm177, 0.0
        %186 = vst.msk [vmem:[#allocation2 + $0x38] sm:$0xff] %vm177, 0.0
        %187 = vst.msk [vmem:[#allocation2 + $0x40] sm:$0x3] %vm180, 0.0
        %188 = vst.msk [vmem:[#allocation2 + $0x48] sm:$0xff] %vm177, 0.0
        %189 = vst.msk [vmem:[#allocation2 + $0x50] sm:$0xff] %vm177, 0.0
        %190 = vst.msk [vmem:[#allocation2 + $0x58] sm:$0x3] %vm180, 0.0
        %v191 = vld [vmem:[%s147] sm:$0xff]
        %v192 = vld [vmem:[%s147 + $0x8] sm:$0xff]
        %v193 = vld [vmem:[%s147 + $0x10] sm:$0xff]
        %v194 = vld [vmem:[%s147 + $0x18] sm:$0xff]
        %v195 = vld [vmem:[%s147 + $0x20] sm:$0xff]
        %v196 = vld [vmem:[%s147 + $0x28] sm:$0xff]
        %v197 = vld [vmem:[%s147 + $0x30] sm:$0xff]
        %v198 = vld [vmem:[%s147 + $0x38] sm:$0xff]
        %207 = vrot.lane.b32.xlu0 %v191, 1
        %v208 = vpop.permute.xlu0 %207
        %209 = vrot.lane.b32.xlu0 %v192, 1
        %v210 = vpop.permute.xlu0 %209
        %211 = vrot.lane.b32.xlu0 %v193, 1
        %v212 = vpop.permute.xlu0 %211
        %213 = vrot.lane.b32.xlu0 %v194, 1
        %v214 = vpop.permute.xlu0 %213
        %215 = vrot.lane.b32.xlu0 %v195, 1
        %v216 = vpop.permute.xlu0 %215
        %217 = vrot.lane.b32.xlu0 %v196, 1
        %v218 = vpop.permute.xlu0 %217
        %219 = vrot.lane.b32.xlu0 %v197, 1
        %v220 = vpop.permute.xlu0 %219
        %221 = vrot.lane.b32.xlu0 %v198, 1
        %v222 = vpop.permute.xlu0 %221
        %vm231 = vcmask 138248
        %232 = vst.msk [vmem:[#allocation2 + $0x1] sm:$0xff] %vm231, %v208
        %233 = vst.msk [vmem:[#allocation2 + $0x9] sm:$0xff] %vm231, %v210
        %234 = vst.msk [vmem:[#allocation2 + $0x19] sm:$0xff] %vm231, %v212
        %235 = vst.msk [vmem:[#allocation2 + $0x21] sm:$0xff] %vm231, %v214
        %236 = vst.msk [vmem:[#allocation2 + $0x31] sm:$0xff] %vm231, %v216
        %237 = vst.msk [vmem:[#allocation2 + $0x39] sm:$0xff] %vm231, %v218
        %238 = vst.msk [vmem:[#allocation2 + $0x49] sm:$0xff] %vm231, %v220
        %239 = vst.msk [vmem:[#allocation2 + $0x51] sm:$0xff] %vm231, %v222
        %v240 = vld [vmem:[#allocation2] sm:$0xff]
        %v241 = vld [vmem:[#allocation2 + $0x8] sm:$0xff]
        %vm242 = vcmask 130048
        %243 = vst.msk [vmem:[#allocation3] sm:$0xff] %vm242, %v240
        %244 = vst.msk [vmem:[#allocation3 + $0x8] sm:$0xff] %vm242, %v241
        %v245 = vld [vmem:[#allocation2] sm:$0xff]
        %v246 = vld [vmem:[#allocation2 + $0x8] sm:$0xff]
        %249 = vrot.lane.b32.xlu0 %v245, 127
        %v250 = vpop.permute.xlu0 %249
        %251 = vrot.lane.b32.xlu0 %v246, 127
        %v252 = vpop.permute.xlu0 %251
        %s255 = scalar_lea.vmem [#allocation3], 16
        %256 = vst.msk [vmem:[%s255] sm:$0xff] %vm242, %v250
        %257 = vst.msk [vmem:[%s255 + $0x8] sm:$0xff] %vm242, %v252
        %v258 = vld [vmem:[#allocation2] sm:$0xff]
        %v259 = vld [vmem:[#allocation2 + $0x8] sm:$0xff]
        %262 = vrot.lane.b32.xlu0 %v258, 126
        %v263 = vpop.permute.xlu0 %262
        %264 = vrot.lane.b32.xlu0 %v259, 126
        %v265 = vpop.permute.xlu0 %264
        %s268 = scalar_lea.vmem [#allocation3], 32
        %269 = vst.msk [vmem:[%s268] sm:$0xff] %vm242, %v263
        %270 = vst.msk [vmem:[%s268 + $0x8] sm:$0xff] %vm242, %v265
        %v271 = vld [vmem:[#allocation2 + $0x1] sm:$0xff]
        %v272 = vld [vmem:[#allocation2 + $0x9] sm:$0xff]
        %s273 = scalar_lea.vmem [#allocation3], 48
        %274 = vst.msk [vmem:[%s273] sm:$0xff] %vm242, %v271
        %275 = vst.msk [vmem:[%s273 + $0x8] sm:$0xff] %vm242, %v272
        %v276 = vld [vmem:[#allocation2 + $0x1] sm:$0xff]
        %v277 = vld [vmem:[#allocation2 + $0x9] sm:$0xff]
        %280 = vrot.lane.b32.xlu0 %v276, 127
        %v281 = vpop.permute.xlu0 %280
        %282 = vrot.lane.b32.xlu0 %v277, 127
        %v283 = vpop.permute.xlu0 %282
        %s286 = scalar_lea.vmem [#allocation3], 64
        %287 = vst.msk [vmem:[%s286] sm:$0xff] %vm242, %v281
        %288 = vst.msk [vmem:[%s286 + $0x8] sm:$0xff] %vm242, %v283
        %v289 = vld [vmem:[#allocation2 + $0x1] sm:$0xff]
        %v290 = vld [vmem:[#allocation2 + $0x9] sm:$0xff]
        %293 = vrot.lane.b32.xlu0 %v289, 126
        %v294 = vpop.permute.xlu0 %293
        %295 = vrot.lane.b32.xlu0 %v290, 126
        %v296 = vpop.permute.xlu0 %295
        %s299 = scalar_lea.vmem [#allocation3], 80
        %300 = vst.msk [vmem:[%s299] sm:$0xff] %vm242, %v294
        %301 = vst.msk [vmem:[%s299 + $0x8] sm:$0xff] %vm242, %v296
        %v302 = vld [vmem:[#allocation2 + $0x2] sm:$0xff]
        %v303 = vld [vmem:[#allocation2 + $0xa] sm:$0xff]
        %s304 = scalar_lea.vmem [#allocation3], 96
        %305 = vst.msk [vmem:[%s304] sm:$0xff] %vm242, %v302
        %306 = vst.msk [vmem:[%s304 + $0x8] sm:$0xff] %vm242, %v303
        %v307 = vld [vmem:[#allocation2 + $0x2] sm:$0xff]
        %v308 = vld [vmem:[#allocation2 + $0xa] sm:$0xff]
        %311 = vrot.lane.b32.xlu0 %v307, 127
        %v312 = vpop.permute.xlu0 %311
        %313 = vrot.lane.b32.xlu0 %v308, 127
        %v314 = vpop.permute.xlu0 %313
        %s317 = scalar_lea.vmem [#allocation3], 112
        %318 = vst.msk [vmem:[%s317] sm:$0xff] %vm242, %v312
        %319 = vst.msk [vmem:[%s317 + $0x8] sm:$0xff] %vm242, %v314
        %v320 = vld [vmem:[#allocation2 + $0x2] sm:$0xff]
        %v321 = vld [vmem:[#allocation2 + $0xa] sm:$0xff]
        %324 = vrot.lane.b32.xlu0 %v320, 126
        %v325 = vpop.permute.xlu0 %324
        %326 = vrot.lane.b32.xlu0 %v321, 126
        %v327 = vpop.permute.xlu0 %326
        %s330 = scalar_lea.vmem [#allocation3], 128
        %331 = vst.msk [vmem:[%s330] sm:$0xff] %vm242, %v325
        %332 = vst.msk [vmem:[%s330 + $0x8] sm:$0xff] %vm242, %v327
        %s333 = scalar_lea.vmem [#allocation2], 24
        %v334 = vld [vmem:[%s333] sm:$0xff]
        %v335 = vld [vmem:[%s333 + $0x8] sm:$0xff]
        %s336 = scalar_lea.vmem [#allocation3], 144
        %337 = vst.msk [vmem:[%s336] sm:$0xff] %vm242, %v334
        %338 = vst.msk [vmem:[%s336 + $0x8] sm:$0xff] %vm242, %v335
        %v339 = vld [vmem:[%s333] sm:$0xff]
        %v340 = vld [vmem:[%s333 + $0x8] sm:$0xff]
        %343 = vrot.lane.b32.xlu0 %v339, 127
        %v344 = vpop.permute.xlu0 %343
        %345 = vrot.lane.b32.xlu0 %v340, 127
        %v346 = vpop.permute.xlu0 %345
        %s349 = scalar_lea.vmem [#allocation3], 160
        %350 = vst.msk [vmem:[%s349] sm:$0xff] %vm242, %v344
        %351 = vst.msk [vmem:[%s349 + $0x8] sm:$0xff] %vm242, %v346
        %v352 = vld [vmem:[%s333] sm:$0xff]
        %v353 = vld [vmem:[%s333 + $0x8] sm:$0xff]
        %356 = vrot.lane.b32.xlu0 %v352, 126
        %v357 = vpop.permute.xlu0 %356
        %358 = vrot.lane.b32.xlu0 %v353, 126
        %v359 = vpop.permute.xlu0 %358
        %s362 = scalar_lea.vmem [#allocation3], 176
        %363 = vst.msk [vmem:[%s362] sm:$0xff] %vm242, %v357
        %364 = vst.msk [vmem:[%s362 + $0x8] sm:$0xff] %vm242, %v359
        %v365 = vld [vmem:[%s333 + $0x1] sm:$0xff]
        %v366 = vld [vmem:[%s333 + $0x9] sm:$0xff]
        %s367 = scalar_lea.vmem [#allocation3], 192
        %368 = vst.msk [vmem:[%s367] sm:$0xff] %vm242, %v365
        %369 = vst.msk [vmem:[%s367 + $0x8] sm:$0xff] %vm242, %v366
        %v370 = vld [vmem:[%s333 + $0x1] sm:$0xff]
        %v371 = vld [vmem:[%s333 + $0x9] sm:$0xff]
        %374 = vrot.lane.b32.xlu0 %v370, 127
        %v375 = vpop.permute.xlu0 %374
        %376 = vrot.lane.b32.xlu0 %v371, 127
        %v377 = vpop.permute.xlu0 %376
        %s380 = scalar_lea.vmem [#allocation3], 208
        %381 = vst.msk [vmem:[%s380] sm:$0xff] %vm242, %v375
        %382 = vst.msk [vmem:[%s380 + $0x8] sm:$0xff] %vm242, %v377
        %v383 = vld [vmem:[%s333 + $0x1] sm:$0xff]
        %v384 = vld [vmem:[%s333 + $0x9] sm:$0xff]
        %387 = vrot.lane.b32.xlu0 %v383, 126
        %v388 = vpop.permute.xlu0 %387
        %389 = vrot.lane.b32.xlu0 %v384, 126
        %v390 = vpop.permute.xlu0 %389
        %s393 = scalar_lea.vmem [#allocation3], 224
        %394 = vst.msk [vmem:[%s393] sm:$0xff] %vm242, %v388
        %395 = vst.msk [vmem:[%s393 + $0x8] sm:$0xff] %vm242, %v390
        %v396 = vld [vmem:[%s333 + $0x2] sm:$0xff]
        %v397 = vld [vmem:[%s333 + $0xa] sm:$0xff]
        %s398 = scalar_lea.vmem [#allocation3], 240
        %399 = vst.msk [vmem:[%s398] sm:$0xff] %vm242, %v396
        %400 = vst.msk [vmem:[%s398 + $0x8] sm:$0xff] %vm242, %v397
        %v401 = vld [vmem:[%s333 + $0x2] sm:$0xff]
        %v402 = vld [vmem:[%s333 + $0xa] sm:$0xff]
        %405 = vrot.lane.b32.xlu0 %v401, 127
        %v406 = vpop.permute.xlu0 %405
        %407 = vrot.lane.b32.xlu0 %v402, 127
        %v408 = vpop.permute.xlu0 %407
        %s411 = scalar_lea.vmem [#allocation3], 256
        %412 = vst.msk [vmem:[%s411] sm:$0xff] %vm242, %v406
        %413 = vst.msk [vmem:[%s411 + $0x8] sm:$0xff] %vm242, %v408
        %v414 = vld [vmem:[%s333 + $0x2] sm:$0xff]
        %v415 = vld [vmem:[%s333 + $0xa] sm:$0xff]
        %418 = vrot.lane.b32.xlu0 %v414, 126
        %v419 = vpop.permute.xlu0 %418
        %420 = vrot.lane.b32.xlu0 %v415, 126
        %v421 = vpop.permute.xlu0 %420
        %s424 = scalar_lea.vmem [#allocation3], 272
        %425 = vst.msk [vmem:[%s424] sm:$0xff] %vm242, %v419
        %426 = vst.msk [vmem:[%s424 + $0x8] sm:$0xff] %vm242, %v421
        %s427 = scalar_lea.vmem [#allocation2], 48
        %v428 = vld [vmem:[%s427] sm:$0xff]
        %v429 = vld [vmem:[%s427 + $0x8] sm:$0xff]
        %s430 = scalar_lea.vmem [#allocation3], 288
        %431 = vst.msk [vmem:[%s430] sm:$0xff] %vm242, %v428
        %432 = vst.msk [vmem:[%s430 + $0x8] sm:$0xff] %vm242, %v429
        %v433 = vld [vmem:[%s427] sm:$0xff]
        %v434 = vld [vmem:[%s427 + $0x8] sm:$0xff]
        %437 = vrot.lane.b32.xlu0 %v433, 127
        %v438 = vpop.permute.xlu0 %437
        %439 = vrot.lane.b32.xlu0 %v434, 127
        %v440 = vpop.permute.xlu0 %439
        %s443 = scalar_lea.vmem [#allocation3], 304
        %444 = vst.msk [vmem:[%s443] sm:$0xff] %vm242, %v438
        %445 = vst.msk [vmem:[%s443 + $0x8] sm:$0xff] %vm242, %v440
        %v446 = vld [vmem:[%s427] sm:$0xff]
        %v447 = vld [vmem:[%s427 + $0x8] sm:$0xff]
        %450 = vrot.lane.b32.xlu0 %v446, 126
        %v451 = vpop.permute.xlu0 %450
        %452 = vrot.lane.b32.xlu0 %v447, 126
        %v453 = vpop.permute.xlu0 %452
        %s456 = scalar_lea.vmem [#allocation3], 320
        %457 = vst.msk [vmem:[%s456] sm:$0xff] %vm242, %v451
        %458 = vst.msk [vmem:[%s456 + $0x8] sm:$0xff] %vm242, %v453
        %v459 = vld [vmem:[%s427 + $0x1] sm:$0xff]
        %v460 = vld [vmem:[%s427 + $0x9] sm:$0xff]
        %s461 = scalar_lea.vmem [#allocation3], 336
        %462 = vst.msk [vmem:[%s461] sm:$0xff] %vm242, %v459
        %463 = vst.msk [vmem:[%s461 + $0x8] sm:$0xff] %vm242, %v460
        %v464 = vld [vmem:[%s427 + $0x1] sm:$0xff]
        %v465 = vld [vmem:[%s427 + $0x9] sm:$0xff]
        %468 = vrot.lane.b32.xlu0 %v464, 127
        %v469 = vpop.permute.xlu0 %468
        %470 = vrot.lane.b32.xlu0 %v465, 127
        %v471 = vpop.permute.xlu0 %470
        %s474 = scalar_lea.vmem [#allocation3], 352
        %475 = vst.msk [vmem:[%s474] sm:$0xff] %vm242, %v469
        %476 = vst.msk [vmem:[%s474 + $0x8] sm:$0xff] %vm242, %v471
        %v477 = vld [vmem:[%s427 + $0x1] sm:$0xff]
        %v478 = vld [vmem:[%s427 + $0x9] sm:$0xff]
        %481 = vrot.lane.b32.xlu0 %v477, 126
        %v482 = vpop.permute.xlu0 %481
        %483 = vrot.lane.b32.xlu0 %v478, 126
        %v484 = vpop.permute.xlu0 %483
        %s487 = scalar_lea.vmem [#allocation3], 368
        %488 = vst.msk [vmem:[%s487] sm:$0xff] %vm242, %v482
        %489 = vst.msk [vmem:[%s487 + $0x8] sm:$0xff] %vm242, %v484
        %v490 = vld [vmem:[%s427 + $0x2] sm:$0xff]
        %v491 = vld [vmem:[%s427 + $0xa] sm:$0xff]
        %s492 = scalar_lea.vmem [#allocation3], 384
        %493 = vst.msk [vmem:[%s492] sm:$0xff] %vm242, %v490
        %494 = vst.msk [vmem:[%s492 + $0x8] sm:$0xff] %vm242, %v491
        %v495 = vld [vmem:[%s427 + $0x2] sm:$0xff]
        %v496 = vld [vmem:[%s427 + $0xa] sm:$0xff]
        %499 = vrot.lane.b32.xlu0 %v495, 127
        %v500 = vpop.permute.xlu0 %499
        %501 = vrot.lane.b32.xlu0 %v496, 127
        %v502 = vpop.permute.xlu0 %501
        %s505 = scalar_lea.vmem [#allocation3], 400
        %506 = vst.msk [vmem:[%s505] sm:$0xff] %vm242, %v500
        %507 = vst.msk [vmem:[%s505 + $0x8] sm:$0xff] %vm242, %v502
        %v508 = vld [vmem:[%s427 + $0x2] sm:$0xff]
        %v509 = vld [vmem:[%s427 + $0xa] sm:$0xff]
        %512 = vrot.lane.b32.xlu0 %v508, 126
        %v513 = vpop.permute.xlu0 %512
        %514 = vrot.lane.b32.xlu0 %v509, 126
        %v515 = vpop.permute.xlu0 %514
        %s518 = scalar_lea.vmem [#allocation3], 416
        %519 = vst.msk [vmem:[%s518] sm:$0xff] %vm242, %v513
        %520 = vst.msk [vmem:[%s518 + $0x8] sm:$0xff] %vm242, %v515
        %s521 = scalar_lea.vmem [#allocation2], 72
        %v522 = vld [vmem:[%s521] sm:$0xff]
        %v523 = vld [vmem:[%s521 + $0x8] sm:$0xff]
        %s524 = scalar_lea.vmem [#allocation3], 432
        %525 = vst.msk [vmem:[%s524] sm:$0xff] %vm242, %v522
        %526 = vst.msk [vmem:[%s524 + $0x8] sm:$0xff] %vm242, %v523
        %v527 = vld [vmem:[%s521] sm:$0xff]
        %v528 = vld [vmem:[%s521 + $0x8] sm:$0xff]
        %531 = vrot.lane.b32.xlu0 %v527, 127
        %v532 = vpop.permute.xlu0 %531
        %533 = vrot.lane.b32.xlu0 %v528, 127
        %v534 = vpop.permute.xlu0 %533
        %s537 = scalar_lea.vmem [#allocation3], 448
        %538 = vst.msk [vmem:[%s537] sm:$0xff] %vm242, %v532
        %539 = vst.msk [vmem:[%s537 + $0x8] sm:$0xff] %vm242, %v534
        %v540 = vld [vmem:[%s521] sm:$0xff]
        %v541 = vld [vmem:[%s521 + $0x8] sm:$0xff]
        %544 = vrot.lane.b32.xlu0 %v540, 126
        %v545 = vpop.permute.xlu0 %544
        %546 = vrot.lane.b32.xlu0 %v541, 126
        %v547 = vpop.permute.xlu0 %546
        %s550 = scalar_lea.vmem [#allocation3], 464
        %551 = vst.msk [vmem:[%s550] sm:$0xff] %vm242, %v545
        %552 = vst.msk [vmem:[%s550 + $0x8] sm:$0xff] %vm242, %v547
        %v553 = vld [vmem:[%s521 + $0x1] sm:$0xff]
        %v554 = vld [vmem:[%s521 + $0x9] sm:$0xff]
        %s555 = scalar_lea.vmem [#allocation3], 480
        %556 = vst.msk [vmem:[%s555] sm:$0xff] %vm242, %v553
        %557 = vst.msk [vmem:[%s555 + $0x8] sm:$0xff] %vm242, %v554
        %v558 = vld [vmem:[%s521 + $0x1] sm:$0xff]
        %v559 = vld [vmem:[%s521 + $0x9] sm:$0xff]
        %562 = vrot.lane.b32.xlu0 %v558, 127
        %v563 = vpop.permute.xlu0 %562
        %564 = vrot.lane.b32.xlu0 %v559, 127
        %v565 = vpop.permute.xlu0 %564
        %s568 = scalar_lea.vmem [#allocation3], 496
        %569 = vst.msk [vmem:[%s568] sm:$0xff] %vm242, %v563
        %570 = vst.msk [vmem:[%s568 + $0x8] sm:$0xff] %vm242, %v565
        %v571 = vld [vmem:[%s521 + $0x1] sm:$0xff]
        %v572 = vld [vmem:[%s521 + $0x9] sm:$0xff]
        %575 = vrot.lane.b32.xlu0 %v571, 126
        %v576 = vpop.permute.xlu0 %575
        %577 = vrot.lane.b32.xlu0 %v572, 126
        %v578 = vpop.permute.xlu0 %577
        %s581 = scalar_lea.vmem [#allocation3], 512
        %582 = vst.msk [vmem:[%s581] sm:$0xff] %vm242, %v576
        %583 = vst.msk [vmem:[%s581 + $0x8] sm:$0xff] %vm242, %v578
        %v584 = vld [vmem:[%s521 + $0x2] sm:$0xff]
        %v585 = vld [vmem:[%s521 + $0xa] sm:$0xff]
        %s586 = scalar_lea.vmem [#allocation3], 528
        %587 = vst.msk [vmem:[%s586] sm:$0xff] %vm242, %v584
        %588 = vst.msk [vmem:[%s586 + $0x8] sm:$0xff] %vm242, %v585
        %v589 = vld [vmem:[%s521 + $0x2] sm:$0xff]
        %v590 = vld [vmem:[%s521 + $0xa] sm:$0xff]
        %593 = vrot.lane.b32.xlu0 %v589, 127
        %v594 = vpop.permute.xlu0 %593
        %595 = vrot.lane.b32.xlu0 %v590, 127
        %v596 = vpop.permute.xlu0 %595
        %s599 = scalar_lea.vmem [#allocation3], 544
        %600 = vst.msk [vmem:[%s599] sm:$0xff] %vm242, %v594
        %601 = vst.msk [vmem:[%s599 + $0x8] sm:$0xff] %vm242, %v596
        %v602 = vld [vmem:[%s521 + $0x2] sm:$0xff]
        %v603 = vld [vmem:[%s521 + $0xa] sm:$0xff]
        %606 = vrot.lane.b32.xlu0 %v602, 126
        %v607 = vpop.permute.xlu0 %606
        %608 = vrot.lane.b32.xlu0 %v603, 126
        %v609 = vpop.permute.xlu0 %608
        %s612 = scalar_lea.vmem [#allocation3], 560
        %613 = vst.msk [vmem:[%s612] sm:$0xff] %vm242, %v607
        %614 = vst.msk [vmem:[%s612 + $0x8] sm:$0xff] %vm242, %v609
        %s615 = scalar_lea.vmem [#allocation3], 576
        %616 = vst.msk [vmem:[%s615] sm:$0xff] %vm242, 1.0
        %617 = vst.msk [vmem:[%s615 + $0x8] sm:$0xff] %vm242, 1.0
        %v618 = vld [vmem:[#allocation6] sm:$0xff]
        %v619 = vld [vmem:[#allocation3] sm:$0xff]
        %v620 = vld [vmem:[#allocation3 + $0x8] sm:$0xff]
        %v621 = vld [vmem:[#allocation3 + $0x10] sm:$0xff]
        %v622 = vld [vmem:[#allocation3 + $0x18] sm:$0xff]
        %v623 = vld [vmem:[#allocation3 + $0x20] sm:$0xff]
        %v624 = vld [vmem:[#allocation3 + $0x28] sm:$0xff]
        %v625 = vld [vmem:[#allocation3 + $0x30] sm:$0xff]
        %v626 = vld [vmem:[#allocation3 + $0x38] sm:$0xff]
        %v627 = vld [vmem:[#allocation3 + $0x40] sm:$0xff]
        %v628 = vld [vmem:[#allocation3 + $0x48] sm:$0xff]
        %v629 = vld [vmem:[#allocation3 + $0x50] sm:$0xff]
        %v630 = vld [vmem:[#allocation3 + $0x58] sm:$0xff]
        %v631 = vld [vmem:[#allocation3 + $0x60] sm:$0xff]
        %v632 = vld [vmem:[#allocation3 + $0x68] sm:$0xff]
        %v633 = vld [vmem:[#allocation3 + $0x70] sm:$0xff]
        %v634 = vld [vmem:[#allocation3 + $0x78] sm:$0xff]
        %v635 = vld [vmem:[#allocation3 + $0x80] sm:$0xff]
        %v636 = vld [vmem:[#allocation3 + $0x88] sm:$0xff]
        %v637 = vld [vmem:[#allocation3 + $0x90] sm:$0xff]
        %v638 = vld [vmem:[#allocation3 + $0x98] sm:$0xff]
        %v639 = vld [vmem:[#allocation3 + $0xa0] sm:$0xff]
        %v640 = vld [vmem:[#allocation3 + $0xa8] sm:$0xff]
        %v641 = vld [vmem:[#allocation3 + $0xb0] sm:$0xff]
        %v642 = vld [vmem:[#allocation3 + $0xb8] sm:$0xff]
        %v643 = vld [vmem:[#allocation3 + $0xc0] sm:$0xff]
        %v644 = vld [vmem:[#allocation3 + $0xc8] sm:$0xff]
        %v645 = vld [vmem:[#allocation3 + $0xd0] sm:$0xff]
        %v646 = vld [vmem:[#allocation3 + $0xd8] sm:$0xff]
        %v647 = vld [vmem:[#allocation3 + $0xe0] sm:$0xff]
        %v648 = vld [vmem:[#allocation3 + $0xe8] sm:$0xff]
        %v649 = vld [vmem:[#allocation3 + $0xf0] sm:$0xff]
        %v650 = vld [vmem:[#allocation3 + $0xf8] sm:$0xff]
        %v651 = vld [vmem:[#allocation3 + $0x100] sm:$0xff]
        %v652 = vld [vmem:[#allocation3 + $0x108] sm:$0xff]
        %v653 = vld [vmem:[#allocation3 + $0x110] sm:$0xff]
        %v654 = vld [vmem:[#allocation3 + $0x118] sm:$0xff]
        %v655 = vld [vmem:[#allocation3 + $0x120] sm:$0xff]
        %v656 = vld [vmem:[#allocation3 + $0x128] sm:$0xff]
        %v657 = vld [vmem:[#allocation3 + $0x130] sm:$0xff]
        %v658 = vld [vmem:[#allocation3 + $0x138] sm:$0xff]
        %v659 = vld [vmem:[#allocation3 + $0x140] sm:$0xff]
        %v660 = vld [vmem:[#allocation3 + $0x148] sm:$0xff]
        %v661 = vld [vmem:[#allocation3 + $0x150] sm:$0xff]
        %v662 = vld [vmem:[#allocation3 + $0x158] sm:$0xff]
        %v663 = vld [vmem:[#allocation3 + $0x160] sm:$0xff]
        %v664 = vld [vmem:[#allocation3 + $0x168] sm:$0xff]
        %v665 = vld [vmem:[#allocation3 + $0x170] sm:$0xff]
        %v666 = vld [vmem:[#allocation3 + $0x178] sm:$0xff]
        %v667 = vld [vmem:[#allocation3 + $0x180] sm:$0xff]
        %v668 = vld [vmem:[#allocation3 + $0x188] sm:$0xff]
        %v669 = vld [vmem:[#allocation3 + $0x190] sm:$0xff]
        %v670 = vld [vmem:[#allocation3 + $0x198] sm:$0xff]
        %v671 = vld [vmem:[#allocation3 + $0x1a0] sm:$0xff]
        %v672 = vld [vmem:[#allocation3 + $0x1a8] sm:$0xff]
        %v673 = vld [vmem:[#allocation3 + $0x1b0] sm:$0xff]
        %v674 = vld [vmem:[#allocation3 + $0x1b8] sm:$0xff]
        %v675 = vld [vmem:[#allocation3 + $0x1c0] sm:$0xff]
        %v676 = vld [vmem:[#allocation3 + $0x1c8] sm:$0xff]
        %v677 = vld [vmem:[#allocation3 + $0x1d0] sm:$0xff]
        %v678 = vld [vmem:[#allocation3 + $0x1d8] sm:$0xff]
        %v679 = vld [vmem:[#allocation3 + $0x1e0] sm:$0xff]
        %v680 = vld [vmem:[#allocation3 + $0x1e8] sm:$0xff]
        %v681 = vld [vmem:[#allocation3 + $0x1f0] sm:$0xff]
        %v682 = vld [vmem:[#allocation3 + $0x1f8] sm:$0xff]
        %v683 = vld [vmem:[#allocation3 + $0x200] sm:$0xff]
        %v684 = vld [vmem:[#allocation3 + $0x208] sm:$0xff]
        %v685 = vld [vmem:[#allocation3 + $0x210] sm:$0xff]
        %v686 = vld [vmem:[#allocation3 + $0x218] sm:$0xff]
        %v687 = vld [vmem:[#allocation3 + $0x220] sm:$0xff]
        %v688 = vld [vmem:[#allocation3 + $0x228] sm:$0xff]
        %v689 = vld [vmem:[#allocation3 + $0x230] sm:$0xff]
        %v690 = vld [vmem:[#allocation3 + $0x238] sm:$0xff]
        %v691 = vld [vmem:[#allocation3 + $0x240] sm:$0xff]
        %v692 = vld [vmem:[#allocation3 + $0x248] sm:$0xff]
        %v693 = vcombine.low %v619, %v623
        %v694 = vcombine.high %v619, %v623
        %v696 = vunpack.c.l.s4 1983009808
        %v697 = vunpack.c.0.s8 %v696
        %v698 = vlaneseq
        %v699 = vshrl.u32 %v698, 7
        %v700 = vsub.s32 %v697, %v699
        %v701 = vrot.slane %v693, %v700
        %v703 = vunpack.c.l.s4 1983009808
        %v704 = vunpack.c.0.s8 %v703
        %v705 = vlaneseq
        %v706 = vshrl.u32 %v705, 7
        %v707 = vsub.s32 %v704, %v706
        %v708 = vrot.slane %v694, %v707
        %v709 = vcombine.low %v621, %v625
        %v710 = vcombine.high %v621, %v625
        %v712 = vunpack.c.l.s4 1983009808
        %v713 = vunpack.c.0.s8 %v712
        %v714 = vlaneseq
        %v715 = vshrl.u32 %v714, 7
        %v716 = vsub.s32 %v713, %v715
        %v717 = vrot.slane %v709, %v716
        %v719 = vunpack.c.l.s4 1983009808
        %v720 = vunpack.c.0.s8 %v719
        %v721 = vlaneseq
        %v722 = vshrl.u32 %v721, 7
        %v723 = vsub.s32 %v720, %v722
        %v724 = vrot.slane %v710, %v723
        %v725 = vcombine.low %v627, %v631
        %v726 = vcombine.high %v627, %v631
        %v728 = vunpack.c.l.s4 1983009808
        %v729 = vunpack.c.0.s8 %v728
        %v730 = vlaneseq
        %v731 = vshrl.u32 %v730, 7
        %v732 = vsub.s32 %v729, %v731
        %v733 = vrot.slane %v725, %v732
        %v735 = vunpack.c.l.s4 1983009808
        %v736 = vunpack.c.0.s8 %v735
        %v737 = vlaneseq
        %v738 = vshrl.u32 %v737, 7
        %v739 = vsub.s32 %v736, %v738
        %v740 = vrot.slane %v726, %v739
        %v741 = vcombine.low %v629, %v633
        %v742 = vcombine.high %v629, %v633
        %v744 = vunpack.c.l.s4 1983009808
        %v745 = vunpack.c.0.s8 %v744
        %v746 = vlaneseq
        %v747 = vshrl.u32 %v746, 7
        %v748 = vsub.s32 %v745, %v747
        %v749 = vrot.slane %v741, %v748
        %v751 = vunpack.c.l.s4 1983009808
        %v752 = vunpack.c.0.s8 %v751
        %v753 = vlaneseq
        %v754 = vshrl.u32 %v753, 7
        %v755 = vsub.s32 %v752, %v754
        %v756 = vrot.slane %v742, %v755
        %v757 = vcombine.low %v701, %v717
        %v758 = vcombine.high %v701, %v717
        %v760 = vunpack.c.l.s4 1934713408
        %v761 = vunpack.c.0.s8 %v760
        %v762 = vlaneseq
        %v763 = vshrl.u32 %v762, 7
        %v764 = vsub.s32 %v761, %v763
        %v765 = vrot.slane %v757, %v764
        %v767 = vunpack.c.l.s4 1934713408
        %v768 = vunpack.c.0.s8 %v767
        %v769 = vlaneseq
        %v770 = vshrl.u32 %v769, 7
        %v771 = vsub.s32 %v768, %v770
        %v772 = vrot.slane %v758, %v771
        %v773 = vcombine.low %v708, %v724
        %v774 = vcombine.high %v708, %v724
        %v776 = vunpack.c.l.s4 1934713408
        %v777 = vunpack.c.0.s8 %v776
        %v778 = vlaneseq
        %v779 = vshrl.u32 %v778, 7
        %v780 = vsub.s32 %v777, %v779
        %v781 = vrot.slane %v773, %v780
        %v783 = vunpack.c.l.s4 1934713408
        %v784 = vunpack.c.0.s8 %v783
        %v785 = vlaneseq
        %v786 = vshrl.u32 %v785, 7
        %v787 = vsub.s32 %v784, %v786
        %v788 = vrot.slane %v774, %v787
        %v789 = vcombine.low %v733, %v749
        %v790 = vcombine.high %v733, %v749
        %v792 = vunpack.c.l.s4 1934713408
        %v793 = vunpack.c.0.s8 %v792
        %v794 = vlaneseq
        %v795 = vshrl.u32 %v794, 7
        %v796 = vsub.s32 %v793, %v795
        %v797 = vrot.slane %v789, %v796
        %v799 = vunpack.c.l.s4 1934713408
        %v800 = vunpack.c.0.s8 %v799
        %v801 = vlaneseq
        %v802 = vshrl.u32 %v801, 7
        %v803 = vsub.s32 %v800, %v802
        %v804 = vrot.slane %v790, %v803
        %v805 = vcombine.low %v740, %v756
        %v806 = vcombine.high %v740, %v756
        %v808 = vunpack.c.l.s4 1934713408
        %v809 = vunpack.c.0.s8 %v808
        %v810 = vlaneseq
        %v811 = vshrl.u32 %v810, 7
        %v812 = vsub.s32 %v809, %v811
        %v813 = vrot.slane %v805, %v812
        %v815 = vunpack.c.l.s4 1934713408
        %v816 = vunpack.c.0.s8 %v815
        %v817 = vlaneseq
        %v818 = vshrl.u32 %v817, 7
        %v819 = vsub.s32 %v816, %v818
        %v820 = vrot.slane %v806, %v819
        %v821 = vcombine.low %v765, %v797
        %v822 = vcombine.high %v765, %v797
        %v823 = vcombine.low %v772, %v804
        %v824 = vcombine.high %v772, %v804
        %v825 = vcombine.low %v781, %v813
        %v826 = vcombine.high %v781, %v813
        %v827 = vcombine.low %v788, %v820
        %v828 = vcombine.high %v788, %v820
        %v829 = vcombine.low %v635, %v639
        %v830 = vcombine.high %v635, %v639
        %v832 = vunpack.c.l.s4 1983009808
        %v833 = vunpack.c.0.s8 %v832
        %v834 = vlaneseq
        %v835 = vshrl.u32 %v834, 7
        %v836 = vsub.s32 %v833, %v835
        %v837 = vrot.slane %v829, %v836
        %v839 = vunpack.c.l.s4 1983009808
        %v840 = vunpack.c.0.s8 %v839
        %v841 = vlaneseq
        %v842 = vshrl.u32 %v841, 7
        %v843 = vsub.s32 %v840, %v842
        %v844 = vrot.slane %v830, %v843
        %v845 = vcombine.low %v637, %v641
        %v846 = vcombine.high %v637, %v641
        %v848 = vunpack.c.l.s4 1983009808
        %v849 = vunpack.c.0.s8 %v848
        %v850 = vlaneseq
        %v851 = vshrl.u32 %v850, 7
        %v852 = vsub.s32 %v849, %v851
        %v853 = vrot.slane %v845, %v852
        %v855 = vunpack.c.l.s4 1983009808
        %v856 = vunpack.c.0.s8 %v855
        %v857 = vlaneseq
        %v858 = vshrl.u32 %v857, 7
        %v859 = vsub.s32 %v856, %v858
        %v860 = vrot.slane %v846, %v859
        %v861 = vcombine.low %v643, %v647
        %v862 = vcombine.high %v643, %v647
        %v864 = vunpack.c.l.s4 1983009808
        %v865 = vunpack.c.0.s8 %v864
        %v866 = vlaneseq
        %v867 = vshrl.u32 %v866, 7
        %v868 = vsub.s32 %v865, %v867
        %v869 = vrot.slane %v861, %v868
        %v871 = vunpack.c.l.s4 1983009808
        %v872 = vunpack.c.0.s8 %v871
        %v873 = vlaneseq
        %v874 = vshrl.u32 %v873, 7
        %v875 = vsub.s32 %v872, %v874
        %v876 = vrot.slane %v862, %v875
        %v877 = vcombine.low %v645, %v649
        %v878 = vcombine.high %v645, %v649
        %v880 = vunpack.c.l.s4 1983009808
        %v881 = vunpack.c.0.s8 %v880
        %v882 = vlaneseq
        %v883 = vshrl.u32 %v882, 7
        %v884 = vsub.s32 %v881, %v883
        %v885 = vrot.slane %v877, %v884
        %v887 = vunpack.c.l.s4 1983009808
        %v888 = vunpack.c.0.s8 %v887
        %v889 = vlaneseq
        %v890 = vshrl.u32 %v889, 7
        %v891 = vsub.s32 %v888, %v890
        %v892 = vrot.slane %v878, %v891
        %v893 = vcombine.low %v837, %v853
        %v894 = vcombine.high %v837, %v853
        %v896 = vunpack.c.l.s4 1934713408
        %v897 = vunpack.c.0.s8 %v896
        %v898 = vlaneseq
        %v899 = vshrl.u32 %v898, 7
        %v900 = vsub.s32 %v897, %v899
        %v901 = vrot.slane %v893, %v900
        %v903 = vunpack.c.l.s4 1934713408
        %v904 = vunpack.c.0.s8 %v903
        %v905 = vlaneseq
        %v906 = vshrl.u32 %v905, 7
        %v907 = vsub.s32 %v904, %v906
        %v908 = vrot.slane %v894, %v907
        %v909 = vcombine.low %v844, %v860
        %v910 = vcombine.high %v844, %v860
        %v912 = vunpack.c.l.s4 1934713408
        %v913 = vunpack.c.0.s8 %v912
        %v914 = vlaneseq
        %v915 = vshrl.u32 %v914, 7
        %v916 = vsub.s32 %v913, %v915
        %v917 = vrot.slane %v909, %v916
        %v919 = vunpack.c.l.s4 1934713408
        %v920 = vunpack.c.0.s8 %v919
        %v921 = vlaneseq
        %v922 = vshrl.u32 %v921, 7
        %v923 = vsub.s32 %v920, %v922
        %v924 = vrot.slane %v910, %v923
        %v925 = vcombine.low %v869, %v885
        %v926 = vcombine.high %v869, %v885
        %v928 = vunpack.c.l.s4 1934713408
        %v929 = vunpack.c.0.s8 %v928
        %v930 = vlaneseq
        %v931 = vshrl.u32 %v930, 7
        %v932 = vsub.s32 %v929, %v931
        %v933 = vrot.slane %v925, %v932
        %v935 = vunpack.c.l.s4 1934713408
        %v936 = vunpack.c.0.s8 %v935
        %v937 = vlaneseq
        %v938 = vshrl.u32 %v937, 7
        %v939 = vsub.s32 %v936, %v938
        %v940 = vrot.slane %v926, %v939
        %v941 = vcombine.low %v876, %v892
        %v942 = vcombine.high %v876, %v892
        %v944 = vunpack.c.l.s4 1934713408
        %v945 = vunpack.c.0.s8 %v944
        %v946 = vlaneseq
        %v947 = vshrl.u32 %v946, 7
        %v948 = vsub.s32 %v945, %v947
        %v949 = vrot.slane %v941, %v948
        %v951 = vunpack.c.l.s4 1934713408
        %v952 = vunpack.c.0.s8 %v951
        %v953 = vlaneseq
        %v954 = vshrl.u32 %v953, 7
        %v955 = vsub.s32 %v952, %v954
        %v956 = vrot.slane %v942, %v955
        %v957 = vcombine.low %v901, %v933
        %v958 = vcombine.high %v901, %v933
        %v959 = vcombine.low %v908, %v940
        %v960 = vcombine.high %v908, %v940
        %v961 = vcombine.low %v917, %v949
        %v962 = vcombine.high %v917, %v949
        %v963 = vcombine.low %v924, %v956
        %v964 = vcombine.high %v924, %v956
        %v965 = vcombine.low %v651, %v655
        %v966 = vcombine.high %v651, %v655
        %v968 = vunpack.c.l.s4 1983009808
        %v969 = vunpack.c.0.s8 %v968
        %v970 = vlaneseq
        %v971 = vshrl.u32 %v970, 7
        %v972 = vsub.s32 %v969, %v971
        %v973 = vrot.slane %v965, %v972
        %v975 = vunpack.c.l.s4 1983009808
        %v976 = vunpack.c.0.s8 %v975
        %v977 = vlaneseq
        %v978 = vshrl.u32 %v977, 7
        %v979 = vsub.s32 %v976, %v978
        %v980 = vrot.slane %v966, %v979
        %v981 = vcombine.low %v653, %v657
        %v982 = vcombine.high %v653, %v657
        %v984 = vunpack.c.l.s4 1983009808
        %v985 = vunpack.c.0.s8 %v984
        %v986 = vlaneseq
        %v987 = vshrl.u32 %v986, 7
        %v988 = vsub.s32 %v985, %v987
        %v989 = vrot.slane %v981, %v988
        %v991 = vunpack.c.l.s4 1983009808
        %v992 = vunpack.c.0.s8 %v991
        %v993 = vlaneseq
        %v994 = vshrl.u32 %v993, 7
        %v995 = vsub.s32 %v992, %v994
        %v996 = vrot.slane %v982, %v995
        %v997 = vcombine.low %v659, %v663
        %v998 = vcombine.high %v659, %v663
        %v1000 = vunpack.c.l.s4 1983009808
        %v1001 = vunpack.c.0.s8 %v1000
        %v1002 = vlaneseq
        %v1003 = vshrl.u32 %v1002, 7
        %v1004 = vsub.s32 %v1001, %v1003
        %v1005 = vrot.slane %v997, %v1004
        %v1007 = vunpack.c.l.s4 1983009808
        %v1008 = vunpack.c.0.s8 %v1007
        %v1009 = vlaneseq
        %v1010 = vshrl.u32 %v1009, 7
        %v1011 = vsub.s32 %v1008, %v1010
        %v1012 = vrot.slane %v998, %v1011
        %v1013 = vcombine.low %v661, %v665
        %v1014 = vcombine.high %v661, %v665
        %v1016 = vunpack.c.l.s4 1983009808
        %v1017 = vunpack.c.0.s8 %v1016
        %v1018 = vlaneseq
        %v1019 = vshrl.u32 %v1018, 7
        %v1020 = vsub.s32 %v1017, %v1019
        %v1021 = vrot.slane %v1013, %v1020
        %v1023 = vunpack.c.l.s4 1983009808
        %v1024 = vunpack.c.0.s8 %v1023
        %v1025 = vlaneseq
        %v1026 = vshrl.u32 %v1025, 7
        %v1027 = vsub.s32 %v1024, %v1026
        %v1028 = vrot.slane %v1014, %v1027
        %v1029 = vcombine.low %v973, %v989
        %v1030 = vcombine.high %v973, %v989
        %v1032 = vunpack.c.l.s4 1934713408
        %v1033 = vunpack.c.0.s8 %v1032
        %v1034 = vlaneseq
        %v1035 = vshrl.u32 %v1034, 7
        %v1036 = vsub.s32 %v1033, %v1035
        %v1037 = vrot.slane %v1029, %v1036
        %v1039 = vunpack.c.l.s4 1934713408
        %v1040 = vunpack.c.0.s8 %v1039
        %v1041 = vlaneseq
        %v1042 = vshrl.u32 %v1041, 7
        %v1043 = vsub.s32 %v1040, %v1042
        %v1044 = vrot.slane %v1030, %v1043
        %v1045 = vcombine.low %v980, %v996
        %v1046 = vcombine.high %v980, %v996
        %v1048 = vunpack.c.l.s4 1934713408
        %v1049 = vunpack.c.0.s8 %v1048
        %v1050 = vlaneseq
        %v1051 = vshrl.u32 %v1050, 7
        %v1052 = vsub.s32 %v1049, %v1051
        %v1053 = vrot.slane %v1045, %v1052
        %v1055 = vunpack.c.l.s4 1934713408
        %v1056 = vunpack.c.0.s8 %v1055
        %v1057 = vlaneseq
        %v1058 = vshrl.u32 %v1057, 7
        %v1059 = vsub.s32 %v1056, %v1058
        %v1060 = vrot.slane %v1046, %v1059
        %v1061 = vcombine.low %v1005, %v1021
        %v1062 = vcombine.high %v1005, %v1021
        %v1064 = vunpack.c.l.s4 1934713408
        %v1065 = vunpack.c.0.s8 %v1064
        %v1066 = vlaneseq
        %v1067 = vshrl.u32 %v1066, 7
        %v1068 = vsub.s32 %v1065, %v1067
        %v1069 = vrot.slane %v1061, %v1068
        %v1071 = vunpack.c.l.s4 1934713408
        %v1072 = vunpack.c.0.s8 %v1071
        %v1073 = vlaneseq
        %v1074 = vshrl.u32 %v1073, 7
        %v1075 = vsub.s32 %v1072, %v1074
        %v1076 = vrot.slane %v1062, %v1075
        %v1077 = vcombine.low %v1012, %v1028
        %v1078 = vcombine.high %v1012, %v1028
        %v1080 = vunpack.c.l.s4 1934713408
        %v1081 = vunpack.c.0.s8 %v1080
        %v1082 = vlaneseq
        %v1083 = vshrl.u32 %v1082, 7
        %v1084 = vsub.s32 %v1081, %v1083
        %v1085 = vrot.slane %v1077, %v1084
        %v1087 = vunpack.c.l.s4 1934713408
        %v1088 = vunpack.c.0.s8 %v1087
        %v1089 = vlaneseq
        %v1090 = vshrl.u32 %v1089, 7
        %v1091 = vsub.s32 %v1088, %v1090
        %v1092 = vrot.slane %v1078, %v1091
        %v1093 = vcombine.low %v1037, %v1069
        %v1094 = vcombine.high %v1037, %v1069
        %v1095 = vcombine.low %v1044, %v1076
        %v1096 = vcombine.high %v1044, %v1076
        %v1097 = vcombine.low %v1053, %v1085
        %v1098 = vcombine.high %v1053, %v1085
        %v1099 = vcombine.low %v1060, %v1092
        %v1100 = vcombine.high %v1060, %v1092
        %v1101 = vcombine.low %v667, %v671
        %v1102 = vcombine.high %v667, %v671
        %v1104 = vunpack.c.l.s4 1983009808
        %v1105 = vunpack.c.0.s8 %v1104
        %v1106 = vlaneseq
        %v1107 = vshrl.u32 %v1106, 7
        %v1108 = vsub.s32 %v1105, %v1107
        %v1109 = vrot.slane %v1101, %v1108
        %v1111 = vunpack.c.l.s4 1983009808
        %v1112 = vunpack.c.0.s8 %v1111
        %v1113 = vlaneseq
        %v1114 = vshrl.u32 %v1113, 7
        %v1115 = vsub.s32 %v1112, %v1114
        %v1116 = vrot.slane %v1102, %v1115
        %v1117 = vcombine.low %v669, %v673
        %v1118 = vcombine.high %v669, %v673
        %v1120 = vunpack.c.l.s4 1983009808
        %v1121 = vunpack.c.0.s8 %v1120
        %v1122 = vlaneseq
        %v1123 = vshrl.u32 %v1122, 7
        %v1124 = vsub.s32 %v1121, %v1123
        %v1125 = vrot.slane %v1117, %v1124
        %v1127 = vunpack.c.l.s4 1983009808
        %v1128 = vunpack.c.0.s8 %v1127
        %v1129 = vlaneseq
        %v1130 = vshrl.u32 %v1129, 7
        %v1131 = vsub.s32 %v1128, %v1130
        %v1132 = vrot.slane %v1118, %v1131
        %v1133 = vcombine.low %v675, %v679
        %v1134 = vcombine.high %v675, %v679
        %v1136 = vunpack.c.l.s4 1983009808
        %v1137 = vunpack.c.0.s8 %v1136
        %v1138 = vlaneseq
        %v1139 = vshrl.u32 %v1138, 7
        %v1140 = vsub.s32 %v1137, %v1139
        %v1141 = vrot.slane %v1133, %v1140
        %v1143 = vunpack.c.l.s4 1983009808
        %v1144 = vunpack.c.0.s8 %v1143
        %v1145 = vlaneseq
        %v1146 = vshrl.u32 %v1145, 7
        %v1147 = vsub.s32 %v1144, %v1146
        %v1148 = vrot.slane %v1134, %v1147
        %v1149 = vcombine.low %v677, %v681
        %v1150 = vcombine.high %v677, %v681
        %v1152 = vunpack.c.l.s4 1983009808
        %v1153 = vunpack.c.0.s8 %v1152
        %v1154 = vlaneseq
        %v1155 = vshrl.u32 %v1154, 7
        %v1156 = vsub.s32 %v1153, %v1155
        %v1157 = vrot.slane %v1149, %v1156
        %v1159 = vunpack.c.l.s4 1983009808
        %v1160 = vunpack.c.0.s8 %v1159
        %v1161 = vlaneseq
        %v1162 = vshrl.u32 %v1161, 7
        %v1163 = vsub.s32 %v1160, %v1162
        %v1164 = vrot.slane %v1150, %v1163
        %v1165 = vcombine.low %v1109, %v1125
        %v1166 = vcombine.high %v1109, %v1125
        %v1168 = vunpack.c.l.s4 1934713408
        %v1169 = vunpack.c.0.s8 %v1168
        %v1170 = vlaneseq
        %v1171 = vshrl.u32 %v1170, 7
        %v1172 = vsub.s32 %v1169, %v1171
        %v1173 = vrot.slane %v1165, %v1172
        %v1175 = vunpack.c.l.s4 1934713408
        %v1176 = vunpack.c.0.s8 %v1175
        %v1177 = vlaneseq
        %v1178 = vshrl.u32 %v1177, 7
        %v1179 = vsub.s32 %v1176, %v1178
        %v1180 = vrot.slane %v1166, %v1179
        %v1181 = vcombine.low %v1116, %v1132
        %v1182 = vcombine.high %v1116, %v1132
        %v1184 = vunpack.c.l.s4 1934713408
        %v1185 = vunpack.c.0.s8 %v1184
        %v1186 = vlaneseq
        %v1187 = vshrl.u32 %v1186, 7
        %v1188 = vsub.s32 %v1185, %v1187
        %v1189 = vrot.slane %v1181, %v1188
        %v1191 = vunpack.c.l.s4 1934713408
        %v1192 = vunpack.c.0.s8 %v1191
        %v1193 = vlaneseq
        %v1194 = vshrl.u32 %v1193, 7
        %v1195 = vsub.s32 %v1192, %v1194
        %v1196 = vrot.slane %v1182, %v1195
        %v1197 = vcombine.low %v1141, %v1157
        %v1198 = vcombine.high %v1141, %v1157
        %v1200 = vunpack.c.l.s4 1934713408
        %v1201 = vunpack.c.0.s8 %v1200
        %v1202 = vlaneseq
        %v1203 = vshrl.u32 %v1202, 7
        %v1204 = vsub.s32 %v1201, %v1203
        %v1205 = vrot.slane %v1197, %v1204
        %v1207 = vunpack.c.l.s4 1934713408
        %v1208 = vunpack.c.0.s8 %v1207
        %v1209 = vlaneseq
        %v1210 = vshrl.u32 %v1209, 7
        %v1211 = vsub.s32 %v1208, %v1210
        %v1212 = vrot.slane %v1198, %v1211
        %v1213 = vcombine.low %v1148, %v1164
        %v1214 = vcombine.high %v1148, %v1164
        %v1216 = vunpack.c.l.s4 1934713408
        %v1217 = vunpack.c.0.s8 %v1216
        %v1218 = vlaneseq
        %v1219 = vshrl.u32 %v1218, 7
        %v1220 = vsub.s32 %v1217, %v1219
        %v1221 = vrot.slane %v1213, %v1220
        %v1223 = vunpack.c.l.s4 1934713408
        %v1224 = vunpack.c.0.s8 %v1223
        %v1225 = vlaneseq
        %v1226 = vshrl.u32 %v1225, 7
        %v1227 = vsub.s32 %v1224, %v1226
        %v1228 = vrot.slane %v1214, %v1227
        %v1229 = vcombine.low %v1173, %v1205
        %v1230 = vcombine.high %v1173, %v1205
        %v1231 = vcombine.low %v1180, %v1212
        %v1232 = vcombine.high %v1180, %v1212
        %v1233 = vcombine.low %v1189, %v1221
        %v1234 = vcombine.high %v1189, %v1221
        %v1235 = vcombine.low %v1196, %v1228
        %v1236 = vcombine.high %v1196, %v1228
        %v1237 = vcombine.low %v683, %v687
        %v1238 = vcombine.high %v683, %v687
        %v1240 = vunpack.c.l.s4 1983009808
        %v1241 = vunpack.c.0.s8 %v1240
        %v1242 = vlaneseq
        %v1243 = vshrl.u32 %v1242, 7
        %v1244 = vsub.s32 %v1241, %v1243
        %v1245 = vrot.slane %v1237, %v1244
        %v1247 = vunpack.c.l.s4 1983009808
        %v1248 = vunpack.c.0.s8 %v1247
        %v1249 = vlaneseq
        %v1250 = vshrl.u32 %v1249, 7
        %v1251 = vsub.s32 %v1248, %v1250
        %v1252 = vrot.slane %v1238, %v1251
        %v1253 = vcombine.low %v685, %v689
        %v1254 = vcombine.high %v685, %v689
        %v1256 = vunpack.c.l.s4 1983009808
        %v1257 = vunpack.c.0.s8 %v1256
        %v1258 = vlaneseq
        %v1259 = vshrl.u32 %v1258, 7
        %v1260 = vsub.s32 %v1257, %v1259
        %v1261 = vrot.slane %v1253, %v1260
        %v1263 = vunpack.c.l.s4 1983009808
        %v1264 = vunpack.c.0.s8 %v1263
        %v1265 = vlaneseq
        %v1266 = vshrl.u32 %v1265, 7
        %v1267 = vsub.s32 %v1264, %v1266
        %v1268 = vrot.slane %v1254, %v1267
        %v1269 = vcombine.high %v691, 0.0
        %v1271 = vunpack.c.l.s4 1983009808
        %v1272 = vunpack.c.0.s8 %v1271
        %v1273 = vlaneseq
        %v1274 = vshrl.u32 %v1273, 7
        %v1275 = vsub.s32 %v1272, %v1274
        %v1276 = vrot.slane %v691, %v1275
        %v1278 = vunpack.c.l.s4 1983009808
        %v1279 = vunpack.c.0.s8 %v1278
        %v1280 = vlaneseq
        %v1281 = vshrl.u32 %v1280, 7
        %v1282 = vsub.s32 %v1279, %v1281
        %v1283 = vrot.slane %v1269, %v1282
        %v1284 = vcombine.low %v1245, %v1261
        %v1285 = vcombine.high %v1245, %v1261
        %v1287 = vunpack.c.l.s4 1934713408
        %v1288 = vunpack.c.0.s8 %v1287
        %v1289 = vlaneseq
        %v1290 = vshrl.u32 %v1289, 7
        %v1291 = vsub.s32 %v1288, %v1290
        %v1292 = vrot.slane %v1284, %v1291
        %v1294 = vunpack.c.l.s4 1934713408
        %v1295 = vunpack.c.0.s8 %v1294
        %v1296 = vlaneseq
        %v1297 = vshrl.u32 %v1296, 7
        %v1298 = vsub.s32 %v1295, %v1297
        %v1299 = vrot.slane %v1285, %v1298
        %v1300 = vcombine.low %v1252, %v1268
        %v1301 = vcombine.high %v1252, %v1268
        %v1303 = vunpack.c.l.s4 1934713408
        %v1304 = vunpack.c.0.s8 %v1303
        %v1305 = vlaneseq
        %v1306 = vshrl.u32 %v1305, 7
        %v1307 = vsub.s32 %v1304, %v1306
        %v1308 = vrot.slane %v1300, %v1307
        %v1310 = vunpack.c.l.s4 1934713408
        %v1311 = vunpack.c.0.s8 %v1310
        %v1312 = vlaneseq
        %v1313 = vshrl.u32 %v1312, 7
        %v1314 = vsub.s32 %v1311, %v1313
        %v1315 = vrot.slane %v1301, %v1314
        %v1316 = vcombine.high %v1276, 0.0
        %v1318 = vunpack.c.l.s4 1934713408
        %v1319 = vunpack.c.0.s8 %v1318
        %v1320 = vlaneseq
        %v1321 = vshrl.u32 %v1320, 7
        %v1322 = vsub.s32 %v1319, %v1321
        %v1323 = vrot.slane %v1276, %v1322
        %v1325 = vunpack.c.l.s4 1934713408
        %v1326 = vunpack.c.0.s8 %v1325
        %v1327 = vlaneseq
        %v1328 = vshrl.u32 %v1327, 7
        %v1329 = vsub.s32 %v1326, %v1328
        %v1330 = vrot.slane %v1316, %v1329
        %v1331 = vcombine.high %v1283, 0.0
        %v1333 = vunpack.c.l.s4 1934713408
        %v1334 = vunpack.c.0.s8 %v1333
        %v1335 = vlaneseq
        %v1336 = vshrl.u32 %v1335, 7
        %v1337 = vsub.s32 %v1334, %v1336
        %v1338 = vrot.slane %v1283, %v1337
        %v1340 = vunpack.c.l.s4 1934713408
        %v1341 = vunpack.c.0.s8 %v1340
        %v1342 = vlaneseq
        %v1343 = vshrl.u32 %v1342, 7
        %v1344 = vsub.s32 %v1341, %v1343
        %v1345 = vrot.slane %v1331, %v1344
        %v1346 = vcombine.low %v1292, %v1323
        %v1347 = vcombine.high %v1292, %v1323
        %v1348 = vcombine.low %v1299, %v1330
        %v1349 = vcombine.high %v1299, %v1330
        %v1350 = vcombine.low %v1308, %v1338
        %v1351 = vcombine.high %v1308, %v1338
        %v1352 = vcombine.low %v1315, %v1345
        %v1353 = vcombine.high %v1315, %v1345
        %v1354 = vcombine.low %v620, %v624
        %v1355 = vcombine.high %v620, %v624
        %v1357 = vunpack.c.l.s4 1983009808
        %v1358 = vunpack.c.0.s8 %v1357
        %v1359 = vlaneseq
        %v1360 = vshrl.u32 %v1359, 7
        %v1361 = vsub.s32 %v1358, %v1360
        %v1362 = vrot.slane %v1354, %v1361
        %v1364 = vunpack.c.l.s4 1983009808
        %v1365 = vunpack.c.0.s8 %v1364
        %v1366 = vlaneseq
        %v1367 = vshrl.u32 %v1366, 7
        %v1368 = vsub.s32 %v1365, %v1367
        %v1369 = vrot.slane %v1355, %v1368
        %v1370 = vcombine.low %v622, %v626
        %v1371 = vcombine.high %v622, %v626
        %v1373 = vunpack.c.l.s4 1983009808
        %v1374 = vunpack.c.0.s8 %v1373
        %v1375 = vlaneseq
        %v1376 = vshrl.u32 %v1375, 7
        %v1377 = vsub.s32 %v1374, %v1376
        %v1378 = vrot.slane %v1370, %v1377
        %v1380 = vunpack.c.l.s4 1983009808
        %v1381 = vunpack.c.0.s8 %v1380
        %v1382 = vlaneseq
        %v1383 = vshrl.u32 %v1382, 7
        %v1384 = vsub.s32 %v1381, %v1383
        %v1385 = vrot.slane %v1371, %v1384
        %v1386 = vcombine.low %v628, %v632
        %v1387 = vcombine.high %v628, %v632
        %v1389 = vunpack.c.l.s4 1983009808
        %v1390 = vunpack.c.0.s8 %v1389
        %v1391 = vlaneseq
        %v1392 = vshrl.u32 %v1391, 7
        %v1393 = vsub.s32 %v1390, %v1392
        %v1394 = vrot.slane %v1386, %v1393
        %v1396 = vunpack.c.l.s4 1983009808
        %v1397 = vunpack.c.0.s8 %v1396
        %v1398 = vlaneseq
        %v1399 = vshrl.u32 %v1398, 7
        %v1400 = vsub.s32 %v1397, %v1399
        %v1401 = vrot.slane %v1387, %v1400
        %v1402 = vcombine.low %v630, %v634
        %v1403 = vcombine.high %v630, %v634
        %v1405 = vunpack.c.l.s4 1983009808
        %v1406 = vunpack.c.0.s8 %v1405
        %v1407 = vlaneseq
        %v1408 = vshrl.u32 %v1407, 7
        %v1409 = vsub.s32 %v1406, %v1408
        %v1410 = vrot.slane %v1402, %v1409
        %v1412 = vunpack.c.l.s4 1983009808
        %v1413 = vunpack.c.0.s8 %v1412
        %v1414 = vlaneseq
        %v1415 = vshrl.u32 %v1414, 7
        %v1416 = vsub.s32 %v1413, %v1415
        %v1417 = vrot.slane %v1403, %v1416
        %v1418 = vcombine.low %v1362, %v1378
        %v1419 = vcombine.high %v1362, %v1378
        %v1421 = vunpack.c.l.s4 1934713408
        %v1422 = vunpack.c.0.s8 %v1421
        %v1423 = vlaneseq
        %v1424 = vshrl.u32 %v1423, 7
        %v1425 = vsub.s32 %v1422, %v1424
        %v1426 = vrot.slane %v1418, %v1425
        %v1428 = vunpack.c.l.s4 1934713408
        %v1429 = vunpack.c.0.s8 %v1428
        %v1430 = vlaneseq
        %v1431 = vshrl.u32 %v1430, 7
        %v1432 = vsub.s32 %v1429, %v1431
        %v1433 = vrot.slane %v1419, %v1432
        %v1434 = vcombine.low %v1369, %v1385
        %v1435 = vcombine.high %v1369, %v1385
        %v1437 = vunpack.c.l.s4 1934713408
        %v1438 = vunpack.c.0.s8 %v1437
        %v1439 = vlaneseq
        %v1440 = vshrl.u32 %v1439, 7
        %v1441 = vsub.s32 %v1438, %v1440
        %v1442 = vrot.slane %v1434, %v1441
        %v1444 = vunpack.c.l.s4 1934713408
        %v1445 = vunpack.c.0.s8 %v1444
        %v1446 = vlaneseq
        %v1447 = vshrl.u32 %v1446, 7
        %v1448 = vsub.s32 %v1445, %v1447
        %v1449 = vrot.slane %v1435, %v1448
        %v1450 = vcombine.low %v1394, %v1410
        %v1451 = vcombine.high %v1394, %v1410
        %v1453 = vunpack.c.l.s4 1934713408
        %v1454 = vunpack.c.0.s8 %v1453
        %v1455 = vlaneseq
        %v1456 = vshrl.u32 %v1455, 7
        %v1457 = vsub.s32 %v1454, %v1456
        %v1458 = vrot.slane %v1450, %v1457
        %v1460 = vunpack.c.l.s4 1934713408
        %v1461 = vunpack.c.0.s8 %v1460
        %v1462 = vlaneseq
        %v1463 = vshrl.u32 %v1462, 7
        %v1464 = vsub.s32 %v1461, %v1463
        %v1465 = vrot.slane %v1451, %v1464
        %v1466 = vcombine.low %v1401, %v1417
        %v1467 = vcombine.high %v1401, %v1417
        %v1469 = vunpack.c.l.s4 1934713408
        %v1470 = vunpack.c.0.s8 %v1469
        %v1471 = vlaneseq
        %v1472 = vshrl.u32 %v1471, 7
        %v1473 = vsub.s32 %v1470, %v1472
        %v1474 = vrot.slane %v1466, %v1473
        %v1476 = vunpack.c.l.s4 1934713408
        %v1477 = vunpack.c.0.s8 %v1476
        %v1478 = vlaneseq
        %v1479 = vshrl.u32 %v1478, 7
        %v1480 = vsub.s32 %v1477, %v1479
        %v1481 = vrot.slane %v1467, %v1480
        %v1482 = vcombine.low %v1426, %v1458
        %v1483 = vcombine.high %v1426, %v1458
        %v1484 = vcombine.low %v1433, %v1465
        %v1485 = vcombine.high %v1433, %v1465
        %v1486 = vcombine.low %v1442, %v1474
        %v1487 = vcombine.high %v1442, %v1474
        %v1488 = vcombine.low %v1449, %v1481
        %v1489 = vcombine.high %v1449, %v1481
        %v1490 = vcombine.low %v636, %v640
        %v1491 = vcombine.high %v636, %v640
        %v1493 = vunpack.c.l.s4 1983009808
        %v1494 = vunpack.c.0.s8 %v1493
        %v1495 = vlaneseq
        %v1496 = vshrl.u32 %v1495, 7
        %v1497 = vsub.s32 %v1494, %v1496
        %v1498 = vrot.slane %v1490, %v1497
        %v1500 = vunpack.c.l.s4 1983009808
        %v1501 = vunpack.c.0.s8 %v1500
        %v1502 = vlaneseq
        %v1503 = vshrl.u32 %v1502, 7
        %v1504 = vsub.s32 %v1501, %v1503
        %v1505 = vrot.slane %v1491, %v1504
        %v1506 = vcombine.low %v638, %v642
        %v1507 = vcombine.high %v638, %v642
        %v1509 = vunpack.c.l.s4 1983009808
        %v1510 = vunpack.c.0.s8 %v1509
        %v1511 = vlaneseq
        %v1512 = vshrl.u32 %v1511, 7
        %v1513 = vsub.s32 %v1510, %v1512
        %v1514 = vrot.slane %v1506, %v1513
        %v1516 = vunpack.c.l.s4 1983009808
        %v1517 = vunpack.c.0.s8 %v1516
        %v1518 = vlaneseq
        %v1519 = vshrl.u32 %v1518, 7
        %v1520 = vsub.s32 %v1517, %v1519
        %v1521 = vrot.slane %v1507, %v1520
        %v1522 = vcombine.low %v644, %v648
        %v1523 = vcombine.high %v644, %v648
        %v1525 = vunpack.c.l.s4 1983009808
        %v1526 = vunpack.c.0.s8 %v1525
        %v1527 = vlaneseq
        %v1528 = vshrl.u32 %v1527, 7
        %v1529 = vsub.s32 %v1526, %v1528
        %v1530 = vrot.slane %v1522, %v1529
        %v1532 = vunpack.c.l.s4 1983009808
        %v1533 = vunpack.c.0.s8 %v1532
        %v1534 = vlaneseq
        %v1535 = vshrl.u32 %v1534, 7
        %v1536 = vsub.s32 %v1533, %v1535
        %v1537 = vrot.slane %v1523, %v1536
        %v1538 = vcombine.low %v646, %v650
        %v1539 = vcombine.high %v646, %v650
        %v1541 = vunpack.c.l.s4 1983009808
        %v1542 = vunpack.c.0.s8 %v1541
        %v1543 = vlaneseq
        %v1544 = vshrl.u32 %v1543, 7
        %v1545 = vsub.s32 %v1542, %v1544
        %v1546 = vrot.slane %v1538, %v1545
        %v1548 = vunpack.c.l.s4 1983009808
        %v1549 = vunpack.c.0.s8 %v1548
        %v1550 = vlaneseq
        %v1551 = vshrl.u32 %v1550, 7
        %v1552 = vsub.s32 %v1549, %v1551
        %v1553 = vrot.slane %v1539, %v1552
        %v1554 = vcombine.low %v1498, %v1514
        %v1555 = vcombine.high %v1498, %v1514
        %v1557 = vunpack.c.l.s4 1934713408
        %v1558 = vunpack.c.0.s8 %v1557
        %v1559 = vlaneseq
        %v1560 = vshrl.u32 %v1559, 7
        %v1561 = vsub.s32 %v1558, %v1560
        %v1562 = vrot.slane %v1554, %v1561
        %v1564 = vunpack.c.l.s4 1934713408
        %v1565 = vunpack.c.0.s8 %v1564
        %v1566 = vlaneseq
        %v1567 = vshrl.u32 %v1566, 7
        %v1568 = vsub.s32 %v1565, %v1567
        %v1569 = vrot.slane %v1555, %v1568
        %v1570 = vcombine.low %v1505, %v1521
        %v1571 = vcombine.high %v1505, %v1521
        %v1573 = vunpack.c.l.s4 1934713408
        %v1574 = vunpack.c.0.s8 %v1573
        %v1575 = vlaneseq
        %v1576 = vshrl.u32 %v1575, 7
        %v1577 = vsub.s32 %v1574, %v1576
        %v1578 = vrot.slane %v1570, %v1577
        %v1580 = vunpack.c.l.s4 1934713408
        %v1581 = vunpack.c.0.s8 %v1580
        %v1582 = vlaneseq
        %v1583 = vshrl.u32 %v1582, 7
        %v1584 = vsub.s32 %v1581, %v1583
        %v1585 = vrot.slane %v1571, %v1584
        %v1586 = vcombine.low %v1530, %v1546
        %v1587 = vcombine.high %v1530, %v1546
        %v1589 = vunpack.c.l.s4 1934713408
        %v1590 = vunpack.c.0.s8 %v1589
        %v1591 = vlaneseq
        %v1592 = vshrl.u32 %v1591, 7
        %v1593 = vsub.s32 %v1590, %v1592
        %v1594 = vrot.slane %v1586, %v1593
        %v1596 = vunpack.c.l.s4 1934713408
        %v1597 = vunpack.c.0.s8 %v1596
        %v1598 = vlaneseq
        %v1599 = vshrl.u32 %v1598, 7
        %v1600 = vsub.s32 %v1597, %v1599
        %v1601 = vrot.slane %v1587, %v1600
        %v1602 = vcombine.low %v1537, %v1553
        %v1603 = vcombine.high %v1537, %v1553
        %v1605 = vunpack.c.l.s4 1934713408
        %v1606 = vunpack.c.0.s8 %v1605
        %v1607 = vlaneseq
        %v1608 = vshrl.u32 %v1607, 7
        %v1609 = vsub.s32 %v1606, %v1608
        %v1610 = vrot.slane %v1602, %v1609
        %v1612 = vunpack.c.l.s4 1934713408
        %v1613 = vunpack.c.0.s8 %v1612
        %v1614 = vlaneseq
        %v1615 = vshrl.u32 %v1614, 7
        %v1616 = vsub.s32 %v1613, %v1615
        %v1617 = vrot.slane %v1603, %v1616
        %v1618 = vcombine.low %v1562, %v1594
        %v1619 = vcombine.high %v1562, %v1594
        %v1620 = vcombine.low %v1569, %v1601
        %v1621 = vcombine.high %v1569, %v1601
        %v1622 = vcombine.low %v1578, %v1610
        %v1623 = vcombine.high %v1578, %v1610
        %v1624 = vcombine.low %v1585, %v1617
        %v1625 = vcombine.high %v1585, %v1617
        %v1626 = vcombine.low %v652, %v656
        %v1627 = vcombine.high %v652, %v656
        %v1629 = vunpack.c.l.s4 1983009808
        %v1630 = vunpack.c.0.s8 %v1629
        %v1631 = vlaneseq
        %v1632 = vshrl.u32 %v1631, 7
        %v1633 = vsub.s32 %v1630, %v1632
        %v1634 = vrot.slane %v1626, %v1633
        %v1636 = vunpack.c.l.s4 1983009808
        %v1637 = vunpack.c.0.s8 %v1636
        %v1638 = vlaneseq
        %v1639 = vshrl.u32 %v1638, 7
        %v1640 = vsub.s32 %v1637, %v1639
        %v1641 = vrot.slane %v1627, %v1640
        %v1642 = vcombine.low %v654, %v658
        %v1643 = vcombine.high %v654, %v658
        %v1645 = vunpack.c.l.s4 1983009808
        %v1646 = vunpack.c.0.s8 %v1645
        %v1647 = vlaneseq
        %v1648 = vshrl.u32 %v1647, 7
        %v1649 = vsub.s32 %v1646, %v1648
        %v1650 = vrot.slane %v1642, %v1649
        %v1652 = vunpack.c.l.s4 1983009808
        %v1653 = vunpack.c.0.s8 %v1652
        %v1654 = vlaneseq
        %v1655 = vshrl.u32 %v1654, 7
        %v1656 = vsub.s32 %v1653, %v1655
        %v1657 = vrot.slane %v1643, %v1656
        %v1658 = vcombine.low %v660, %v664
        %v1659 = vcombine.high %v660, %v664
        %v1661 = vunpack.c.l.s4 1983009808
        %v1662 = vunpack.c.0.s8 %v1661
        %v1663 = vlaneseq
        %v1664 = vshrl.u32 %v1663, 7
        %v1665 = vsub.s32 %v1662, %v1664
        %v1666 = vrot.slane %v1658, %v1665
        %v1668 = vunpack.c.l.s4 1983009808
        %v1669 = vunpack.c.0.s8 %v1668
        %v1670 = vlaneseq
        %v1671 = vshrl.u32 %v1670, 7
        %v1672 = vsub.s32 %v1669, %v1671
        %v1673 = vrot.slane %v1659, %v1672
        %v1674 = vcombine.low %v662, %v666
        %v1675 = vcombine.high %v662, %v666
        %v1677 = vunpack.c.l.s4 1983009808
        %v1678 = vunpack.c.0.s8 %v1677
        %v1679 = vlaneseq
        %v1680 = vshrl.u32 %v1679, 7
        %v1681 = vsub.s32 %v1678, %v1680
        %v1682 = vrot.slane %v1674, %v1681
        %v1684 = vunpack.c.l.s4 1983009808
        %v1685 = vunpack.c.0.s8 %v1684
        %v1686 = vlaneseq
        %v1687 = vshrl.u32 %v1686, 7
        %v1688 = vsub.s32 %v1685, %v1687
        %v1689 = vrot.slane %v1675, %v1688
        %v1690 = vcombine.low %v1634, %v1650
        %v1691 = vcombine.high %v1634, %v1650
        %v1693 = vunpack.c.l.s4 1934713408
        %v1694 = vunpack.c.0.s8 %v1693
        %v1695 = vlaneseq
        %v1696 = vshrl.u32 %v1695, 7
        %v1697 = vsub.s32 %v1694, %v1696
        %v1698 = vrot.slane %v1690, %v1697
        %v1700 = vunpack.c.l.s4 1934713408
        %v1701 = vunpack.c.0.s8 %v1700
        %v1702 = vlaneseq
        %v1703 = vshrl.u32 %v1702, 7
        %v1704 = vsub.s32 %v1701, %v1703
        %v1705 = vrot.slane %v1691, %v1704
        %v1706 = vcombine.low %v1641, %v1657
        %v1707 = vcombine.high %v1641, %v1657
        %v1709 = vunpack.c.l.s4 1934713408
        %v1710 = vunpack.c.0.s8 %v1709
        %v1711 = vlaneseq
        %v1712 = vshrl.u32 %v1711, 7
        %v1713 = vsub.s32 %v1710, %v1712
        %v1714 = vrot.slane %v1706, %v1713
        %v1716 = vunpack.c.l.s4 1934713408
        %v1717 = vunpack.c.0.s8 %v1716
        %v1718 = vlaneseq
        %v1719 = vshrl.u32 %v1718, 7
        %v1720 = vsub.s32 %v1717, %v1719
        %v1721 = vrot.slane %v1707, %v1720
        %v1722 = vcombine.low %v1666, %v1682
        %v1723 = vcombine.high %v1666, %v1682
        %v1725 = vunpack.c.l.s4 1934713408
        %v1726 = vunpack.c.0.s8 %v1725
        %v1727 = vlaneseq
        %v1728 = vshrl.u32 %v1727, 7
        %v1729 = vsub.s32 %v1726, %v1728
        %v1730 = vrot.slane %v1722, %v1729
        %v1732 = vunpack.c.l.s4 1934713408
        %v1733 = vunpack.c.0.s8 %v1732
        %v1734 = vlaneseq
        %v1735 = vshrl.u32 %v1734, 7
        %v1736 = vsub.s32 %v1733, %v1735
        %v1737 = vrot.slane %v1723, %v1736
        %v1738 = vcombine.low %v1673, %v1689
        %v1739 = vcombine.high %v1673, %v1689
        %v1741 = vunpack.c.l.s4 1934713408
        %v1742 = vunpack.c.0.s8 %v1741
        %v1743 = vlaneseq
        %v1744 = vshrl.u32 %v1743, 7
        %v1745 = vsub.s32 %v1742, %v1744
        %v1746 = vrot.slane %v1738, %v1745
        %v1748 = vunpack.c.l.s4 1934713408
        %v1749 = vunpack.c.0.s8 %v1748
        %v1750 = vlaneseq
        %v1751 = vshrl.u32 %v1750, 7
        %v1752 = vsub.s32 %v1749, %v1751
        %v1753 = vrot.slane %v1739, %v1752
        %v1754 = vcombine.low %v1698, %v1730
        %v1755 = vcombine.high %v1698, %v1730
        %v1756 = vcombine.low %v1705, %v1737
        %v1757 = vcombine.high %v1705, %v1737
        %v1758 = vcombine.low %v1714, %v1746
        %v1759 = vcombine.high %v1714, %v1746
        %v1760 = vcombine.low %v1721, %v1753
        %v1761 = vcombine.high %v1721, %v1753
        %v1762 = vcombine.low %v668, %v672
        %v1763 = vcombine.high %v668, %v672
        %v1765 = vunpack.c.l.s4 1983009808
        %v1766 = vunpack.c.0.s8 %v1765
        %v1767 = vlaneseq
        %v1768 = vshrl.u32 %v1767, 7
        %v1769 = vsub.s32 %v1766, %v1768
        %v1770 = vrot.slane %v1762, %v1769
        %v1772 = vunpack.c.l.s4 1983009808
        %v1773 = vunpack.c.0.s8 %v1772
        %v1774 = vlaneseq
        %v1775 = vshrl.u32 %v1774, 7
        %v1776 = vsub.s32 %v1773, %v1775
        %v1777 = vrot.slane %v1763, %v1776
        %v1778 = vcombine.low %v670, %v674
        %v1779 = vcombine.high %v670, %v674
        %v1781 = vunpack.c.l.s4 1983009808
        %v1782 = vunpack.c.0.s8 %v1781
        %v1783 = vlaneseq
        %v1784 = vshrl.u32 %v1783, 7
        %v1785 = vsub.s32 %v1782, %v1784
        %v1786 = vrot.slane %v1778, %v1785
        %v1788 = vunpack.c.l.s4 1983009808
        %v1789 = vunpack.c.0.s8 %v1788
        %v1790 = vlaneseq
        %v1791 = vshrl.u32 %v1790, 7
        %v1792 = vsub.s32 %v1789, %v1791
        %v1793 = vrot.slane %v1779, %v1792
        %v1794 = vcombine.low %v676, %v680
        %v1795 = vcombine.high %v676, %v680
        %v1797 = vunpack.c.l.s4 1983009808
        %v1798 = vunpack.c.0.s8 %v1797
        %v1799 = vlaneseq
        %v1800 = vshrl.u32 %v1799, 7
        %v1801 = vsub.s32 %v1798, %v1800
        %v1802 = vrot.slane %v1794, %v1801
        %v1804 = vunpack.c.l.s4 1983009808
        %v1805 = vunpack.c.0.s8 %v1804
        %v1806 = vlaneseq
        %v1807 = vshrl.u32 %v1806, 7
        %v1808 = vsub.s32 %v1805, %v1807
        %v1809 = vrot.slane %v1795, %v1808
        %v1810 = vcombine.low %v678, %v682
        %v1811 = vcombine.high %v678, %v682
        %v1813 = vunpack.c.l.s4 1983009808
        %v1814 = vunpack.c.0.s8 %v1813
        %v1815 = vlaneseq
        %v1816 = vshrl.u32 %v1815, 7
        %v1817 = vsub.s32 %v1814, %v1816
        %v1818 = vrot.slane %v1810, %v1817
        %v1820 = vunpack.c.l.s4 1983009808
        %v1821 = vunpack.c.0.s8 %v1820
        %v1822 = vlaneseq
        %v1823 = vshrl.u32 %v1822, 7
        %v1824 = vsub.s32 %v1821, %v1823
        %v1825 = vrot.slane %v1811, %v1824
        %v1826 = vcombine.low %v1770, %v1786
        %v1827 = vcombine.high %v1770, %v1786
        %v1829 = vunpack.c.l.s4 1934713408
        %v1830 = vunpack.c.0.s8 %v1829
        %v1831 = vlaneseq
        %v1832 = vshrl.u32 %v1831, 7
        %v1833 = vsub.s32 %v1830, %v1832
        %v1834 = vrot.slane %v1826, %v1833
        %v1836 = vunpack.c.l.s4 1934713408
        %v1837 = vunpack.c.0.s8 %v1836
        %v1838 = vlaneseq
        %v1839 = vshrl.u32 %v1838, 7
        %v1840 = vsub.s32 %v1837, %v1839
        %v1841 = vrot.slane %v1827, %v1840
        %v1842 = vcombine.low %v1777, %v1793
        %v1843 = vcombine.high %v1777, %v1793
        %v1845 = vunpack.c.l.s4 1934713408
        %v1846 = vunpack.c.0.s8 %v1845
        %v1847 = vlaneseq
        %v1848 = vshrl.u32 %v1847, 7
        %v1849 = vsub.s32 %v1846, %v1848
        %v1850 = vrot.slane %v1842, %v1849
        %v1852 = vunpack.c.l.s4 1934713408
        %v1853 = vunpack.c.0.s8 %v1852
        %v1854 = vlaneseq
        %v1855 = vshrl.u32 %v1854, 7
        %v1856 = vsub.s32 %v1853, %v1855
        %v1857 = vrot.slane %v1843, %v1856
        %v1858 = vcombine.low %v1802, %v1818
        %v1859 = vcombine.high %v1802, %v1818
        %v1861 = vunpack.c.l.s4 1934713408
        %v1862 = vunpack.c.0.s8 %v1861
        %v1863 = vlaneseq
        %v1864 = vshrl.u32 %v1863, 7
        %v1865 = vsub.s32 %v1862, %v1864
        %v1866 = vrot.slane %v1858, %v1865
        %v1868 = vunpack.c.l.s4 1934713408
        %v1869 = vunpack.c.0.s8 %v1868
        %v1870 = vlaneseq
        %v1871 = vshrl.u32 %v1870, 7
        %v1872 = vsub.s32 %v1869, %v1871
        %v1873 = vrot.slane %v1859, %v1872
        %v1874 = vcombine.low %v1809, %v1825
        %v1875 = vcombine.high %v1809, %v1825
        %v1877 = vunpack.c.l.s4 1934713408
        %v1878 = vunpack.c.0.s8 %v1877
        %v1879 = vlaneseq
        %v1880 = vshrl.u32 %v1879, 7
        %v1881 = vsub.s32 %v1878, %v1880
        %v1882 = vrot.slane %v1874, %v1881
        %v1884 = vunpack.c.l.s4 1934713408
        %v1885 = vunpack.c.0.s8 %v1884
        %v1886 = vlaneseq
        %v1887 = vshrl.u32 %v1886, 7
        %v1888 = vsub.s32 %v1885, %v1887
        %v1889 = vrot.slane %v1875, %v1888
        %v1890 = vcombine.low %v1834, %v1866
        %v1891 = vcombine.high %v1834, %v1866
        %v1892 = vcombine.low %v1841, %v1873
        %v1893 = vcombine.high %v1841, %v1873
        %v1894 = vcombine.low %v1850, %v1882
        %v1895 = vcombine.high %v1850, %v1882
        %v1896 = vcombine.low %v1857, %v1889
        %v1897 = vcombine.high %v1857, %v1889
        %v1898 = vcombine.low %v684, %v688
        %v1899 = vcombine.high %v684, %v688
        %v1901 = vunpack.c.l.s4 1983009808
        %v1902 = vunpack.c.0.s8 %v1901
        %v1903 = vlaneseq
        %v1904 = vshrl.u32 %v1903, 7
        %v1905 = vsub.s32 %v1902, %v1904
        %v1906 = vrot.slane %v1898, %v1905
        %v1908 = vunpack.c.l.s4 1983009808
        %v1909 = vunpack.c.0.s8 %v1908
        %v1910 = vlaneseq
        %v1911 = vshrl.u32 %v1910, 7
        %v1912 = vsub.s32 %v1909, %v1911
        %v1913 = vrot.slane %v1899, %v1912
        %v1914 = vcombine.low %v686, %v690
        %v1915 = vcombine.high %v686, %v690
        %v1917 = vunpack.c.l.s4 1983009808
        %v1918 = vunpack.c.0.s8 %v1917
        %v1919 = vlaneseq
        %v1920 = vshrl.u32 %v1919, 7
        %v1921 = vsub.s32 %v1918, %v1920
        %v1922 = vrot.slane %v1914, %v1921
        %v1924 = vunpack.c.l.s4 1983009808
        %v1925 = vunpack.c.0.s8 %v1924
        %v1926 = vlaneseq
        %v1927 = vshrl.u32 %v1926, 7
        %v1928 = vsub.s32 %v1925, %v1927
        %v1929 = vrot.slane %v1915, %v1928
        %v1930 = vcombine.high %v692, 0.0
        %v1932 = vunpack.c.l.s4 1983009808
        %v1933 = vunpack.c.0.s8 %v1932
        %v1934 = vlaneseq
        %v1935 = vshrl.u32 %v1934, 7
        %v1936 = vsub.s32 %v1933, %v1935
        %v1937 = vrot.slane %v692, %v1936
        %v1939 = vunpack.c.l.s4 1983009808
        %v1940 = vunpack.c.0.s8 %v1939
        %v1941 = vlaneseq
        %v1942 = vshrl.u32 %v1941, 7
        %v1943 = vsub.s32 %v1940, %v1942
        %v1944 = vrot.slane %v1930, %v1943
        %v1945 = vcombine.low %v1906, %v1922
        %v1946 = vcombine.high %v1906, %v1922
        %v1948 = vunpack.c.l.s4 1934713408
        %v1949 = vunpack.c.0.s8 %v1948
        %v1950 = vlaneseq
        %v1951 = vshrl.u32 %v1950, 7
        %v1952 = vsub.s32 %v1949, %v1951
        %v1953 = vrot.slane %v1945, %v1952
        %v1955 = vunpack.c.l.s4 1934713408
        %v1956 = vunpack.c.0.s8 %v1955
        %v1957 = vlaneseq
        %v1958 = vshrl.u32 %v1957, 7
        %v1959 = vsub.s32 %v1956, %v1958
        %v1960 = vrot.slane %v1946, %v1959
        %v1961 = vcombine.low %v1913, %v1929
        %v1962 = vcombine.high %v1913, %v1929
        %v1964 = vunpack.c.l.s4 1934713408
        %v1965 = vunpack.c.0.s8 %v1964
        %v1966 = vlaneseq
        %v1967 = vshrl.u32 %v1966, 7
        %v1968 = vsub.s32 %v1965, %v1967
        %v1969 = vrot.slane %v1961, %v1968
        %v1971 = vunpack.c.l.s4 1934713408
        %v1972 = vunpack.c.0.s8 %v1971
        %v1973 = vlaneseq
        %v1974 = vshrl.u32 %v1973, 7
        %v1975 = vsub.s32 %v1972, %v1974
        %v1976 = vrot.slane %v1962, %v1975
        %v1977 = vcombine.high %v1937, 0.0
        %v1979 = vunpack.c.l.s4 1934713408
        %v1980 = vunpack.c.0.s8 %v1979
        %v1981 = vlaneseq
        %v1982 = vshrl.u32 %v1981, 7
        %v1983 = vsub.s32 %v1980, %v1982
        %v1984 = vrot.slane %v1937, %v1983
        %v1986 = vunpack.c.l.s4 1934713408
        %v1987 = vunpack.c.0.s8 %v1986
        %v1988 = vlaneseq
        %v1989 = vshrl.u32 %v1988, 7
        %v1990 = vsub.s32 %v1987, %v1989
        %v1991 = vrot.slane %v1977, %v1990
        %v1992 = vcombine.high %v1944, 0.0
        %v1994 = vunpack.c.l.s4 1934713408
        %v1995 = vunpack.c.0.s8 %v1994
        %v1996 = vlaneseq
        %v1997 = vshrl.u32 %v1996, 7
        %v1998 = vsub.s32 %v1995, %v1997
        %v1999 = vrot.slane %v1944, %v1998
        %v2001 = vunpack.c.l.s4 1934713408
        %v2002 = vunpack.c.0.s8 %v2001
        %v2003 = vlaneseq
        %v2004 = vshrl.u32 %v2003, 7
        %v2005 = vsub.s32 %v2002, %v2004
        %v2006 = vrot.slane %v1992, %v2005
        %v2007 = vcombine.low %v1953, %v1984
        %v2008 = vcombine.high %v1953, %v1984
        %v2009 = vcombine.low %v1960, %v1991
        %v2010 = vcombine.high %v1960, %v1991
        %v2011 = vcombine.low %v1969, %v1999
        %v2012 = vcombine.high %v1969, %v1999
        %v2013 = vcombine.low %v1976, %v2006
        %v2014 = vcombine.high %v1976, %v2006
        %2020 = vrot.lane.b32.xlu0 %v822, 16
        %v2021 = vpop.permute.xlu0 %2020
        %2022 = vrot.lane.b32.xlu0 %v958, 16
        %v2023 = vpop.permute.xlu0 %2022
        %2024 = vrot.lane.b32.xlu0 %v1094, 16
        %v2025 = vpop.permute.xlu0 %2024
        %2026 = vrot.lane.b32.xlu0 %v1230, 16
        %v2027 = vpop.permute.xlu0 %2026
        %2028 = vrot.lane.b32.xlu0 %v1347, 16
        %v2029 = vpop.permute.xlu0 %2028
        %2040 = vrot.lane.b32.xlu0 %v823, 32
        %v2041 = vpop.permute.xlu0 %2040
        %2042 = vrot.lane.b32.xlu0 %v959, 32
        %v2043 = vpop.permute.xlu0 %2042
        %2044 = vrot.lane.b32.xlu0 %v1095, 32
        %v2045 = vpop.permute.xlu0 %2044
        %2046 = vrot.lane.b32.xlu0 %v1231, 32
        %v2047 = vpop.permute.xlu0 %2046
        %2048 = vrot.lane.b32.xlu0 %v1348, 32
        %v2049 = vpop.permute.xlu0 %2048
        %2060 = vrot.lane.b32.xlu0 %v824, 48
        %v2061 = vpop.permute.xlu0 %2060
        %2062 = vrot.lane.b32.xlu0 %v960, 48
        %v2063 = vpop.permute.xlu0 %2062
        %2064 = vrot.lane.b32.xlu0 %v1096, 48
        %v2065 = vpop.permute.xlu0 %2064
        %2066 = vrot.lane.b32.xlu0 %v1232, 48
        %v2067 = vpop.permute.xlu0 %2066
        %2068 = vrot.lane.b32.xlu0 %v1349, 48
        %v2069 = vpop.permute.xlu0 %2068
        %2080 = vrot.lane.b32.xlu0 %v825, 64
        %v2081 = vpop.permute.xlu0 %2080
        %2082 = vrot.lane.b32.xlu0 %v961, 64
        %v2083 = vpop.permute.xlu0 %2082
        %2084 = vrot.lane.b32.xlu0 %v1097, 64
        %v2085 = vpop.permute.xlu0 %2084
        %2086 = vrot.lane.b32.xlu0 %v1233, 64
        %v2087 = vpop.permute.xlu0 %2086
        %2088 = vrot.lane.b32.xlu0 %v1350, 64
        %v2089 = vpop.permute.xlu0 %2088
        %2100 = vrot.lane.b32.xlu0 %v826, 80
        %v2101 = vpop.permute.xlu0 %2100
        %2102 = vrot.lane.b32.xlu0 %v962, 80
        %v2103 = vpop.permute.xlu0 %2102
        %2104 = vrot.lane.b32.xlu0 %v1098, 80
        %v2105 = vpop.permute.xlu0 %2104
        %2106 = vrot.lane.b32.xlu0 %v1234, 80
        %v2107 = vpop.permute.xlu0 %2106
        %2108 = vrot.lane.b32.xlu0 %v1351, 80
        %v2109 = vpop.permute.xlu0 %2108
        %2120 = vrot.lane.b32.xlu0 %v827, 96
        %v2121 = vpop.permute.xlu0 %2120
        %2122 = vrot.lane.b32.xlu0 %v963, 96
        %v2123 = vpop.permute.xlu0 %2122
        %2124 = vrot.lane.b32.xlu0 %v1099, 96
        %v2125 = vpop.permute.xlu0 %2124
        %2126 = vrot.lane.b32.xlu0 %v1235, 96
        %v2127 = vpop.permute.xlu0 %2126
        %2128 = vrot.lane.b32.xlu0 %v1352, 96
        %v2129 = vpop.permute.xlu0 %2128
        %2140 = vrot.lane.b32.xlu0 %v828, 112
        %v2141 = vpop.permute.xlu0 %2140
        %2142 = vrot.lane.b32.xlu0 %v964, 112
        %v2143 = vpop.permute.xlu0 %2142
        %2144 = vrot.lane.b32.xlu0 %v1100, 112
        %v2145 = vpop.permute.xlu0 %2144
        %2146 = vrot.lane.b32.xlu0 %v1236, 112
        %v2147 = vpop.permute.xlu0 %2146
        %2148 = vrot.lane.b32.xlu0 %v1353, 112
        %v2149 = vpop.permute.xlu0 %2148
        %2160 = vrot.lane.b32.xlu0 %v1483, 16
        %v2161 = vpop.permute.xlu0 %2160
        %2162 = vrot.lane.b32.xlu0 %v1619, 16
        %v2163 = vpop.permute.xlu0 %2162
        %2164 = vrot.lane.b32.xlu0 %v1755, 16
        %v2165 = vpop.permute.xlu0 %2164
        %2166 = vrot.lane.b32.xlu0 %v1891, 16
        %v2167 = vpop.permute.xlu0 %2166
        %2168 = vrot.lane.b32.xlu0 %v2008, 16
        %v2169 = vpop.permute.xlu0 %2168
        %2180 = vrot.lane.b32.xlu0 %v1484, 32
        %v2181 = vpop.permute.xlu0 %2180
        %2182 = vrot.lane.b32.xlu0 %v1620, 32
        %v2183 = vpop.permute.xlu0 %2182
        %2184 = vrot.lane.b32.xlu0 %v1756, 32
        %v2185 = vpop.permute.xlu0 %2184
        %2186 = vrot.lane.b32.xlu0 %v1892, 32
        %v2187 = vpop.permute.xlu0 %2186
        %2188 = vrot.lane.b32.xlu0 %v2009, 32
        %v2189 = vpop.permute.xlu0 %2188
        %2200 = vrot.lane.b32.xlu0 %v1485, 48
        %v2201 = vpop.permute.xlu0 %2200
        %2202 = vrot.lane.b32.xlu0 %v1621, 48
        %v2203 = vpop.permute.xlu0 %2202
        %2204 = vrot.lane.b32.xlu0 %v1757, 48
        %v2205 = vpop.permute.xlu0 %2204
        %2206 = vrot.lane.b32.xlu0 %v1893, 48
        %v2207 = vpop.permute.xlu0 %2206
        %2208 = vrot.lane.b32.xlu0 %v2010, 48
        %v2209 = vpop.permute.xlu0 %2208
        %2220 = vrot.lane.b32.xlu0 %v1486, 64
        %v2221 = vpop.permute.xlu0 %2220
        %2222 = vrot.lane.b32.xlu0 %v1622, 64
        %v2223 = vpop.permute.xlu0 %2222
        %2224 = vrot.lane.b32.xlu0 %v1758, 64
        %v2225 = vpop.permute.xlu0 %2224
        %2226 = vrot.lane.b32.xlu0 %v1894, 64
        %v2227 = vpop.permute.xlu0 %2226
        %2228 = vrot.lane.b32.xlu0 %v2011, 64
        %v2229 = vpop.permute.xlu0 %2228
        %2240 = vrot.lane.b32.xlu0 %v1487, 80
        %v2241 = vpop.permute.xlu0 %2240
        %2242 = vrot.lane.b32.xlu0 %v1623, 80
        %v2243 = vpop.permute.xlu0 %2242
        %2244 = vrot.lane.b32.xlu0 %v1759, 80
        %v2245 = vpop.permute.xlu0 %2244
        %2246 = vrot.lane.b32.xlu0 %v1895, 80
        %v2247 = vpop.permute.xlu0 %2246
        %2248 = vrot.lane.b32.xlu0 %v2012, 80
        %v2249 = vpop.permute.xlu0 %2248
        %2260 = vrot.lane.b32.xlu0 %v1488, 96
        %v2261 = vpop.permute.xlu0 %2260
        %2262 = vrot.lane.b32.xlu0 %v1624, 96
        %v2263 = vpop.permute.xlu0 %2262
        %2264 = vrot.lane.b32.xlu0 %v1760, 96
        %v2265 = vpop.permute.xlu0 %2264
        %2266 = vrot.lane.b32.xlu0 %v1896, 96
        %v2267 = vpop.permute.xlu0 %2266
        %2268 = vrot.lane.b32.xlu0 %v2013, 96
        %v2269 = vpop.permute.xlu0 %2268
        %2280 = vrot.lane.b32.xlu0 %v1489, 112
        %v2281 = vpop.permute.xlu0 %2280
        %2282 = vrot.lane.b32.xlu0 %v1625, 112
        %v2283 = vpop.permute.xlu0 %2282
        %2284 = vrot.lane.b32.xlu0 %v1761, 112
        %v2285 = vpop.permute.xlu0 %2284
        %2286 = vrot.lane.b32.xlu0 %v1897, 112
        %v2287 = vpop.permute.xlu0 %2286
        %2288 = vrot.lane.b32.xlu0 %v2014, 112
        %v2289 = vpop.permute.xlu0 %2288
        %v2295 = vsel %vm242, %v821, %v2021
        %v2296 = vsel %vm242, %v957, %v2023
        %v2297 = vsel %vm242, %v1093, %v2025
        %v2298 = vsel %vm242, %v1229, %v2027
        %v2299 = vsel %vm242, %v1346, %v2029
        %vm2300 = vcmask 261120
        %v2301 = vsel %vm2300, %v2295, %v2041
        %v2302 = vsel %vm2300, %v2296, %v2043
        %v2303 = vsel %vm2300, %v2297, %v2045
        %v2304 = vsel %vm2300, %v2298, %v2047
        %v2305 = vsel %vm2300, %v2299, %v2049
        %vm2306 = vcmask 392192
        %v2307 = vsel %vm2306, %v2301, %v2061
        %v2308 = vsel %vm2306, %v2302, %v2063
        %v2309 = vsel %vm2306, %v2303, %v2065
        %v2310 = vsel %vm2306, %v2304, %v2067
        %v2311 = vsel %vm2306, %v2305, %v2069
        %vm2312 = vcmask 523264
        %v2313 = vsel %vm2312, %v2307, %v2081
        %v2314 = vsel %vm2312, %v2308, %v2083
        %v2315 = vsel %vm2312, %v2309, %v2085
        %v2316 = vsel %vm2312, %v2310, %v2087
        %v2317 = vsel %vm2312, %v2311, %v2089
        %vm2318 = vcmask 654336
        %v2319 = vsel %vm2318, %v2313, %v2101
        %v2320 = vsel %vm2318, %v2314, %v2103
        %v2321 = vsel %vm2318, %v2315, %v2105
        %v2322 = vsel %vm2318, %v2316, %v2107
        %v2323 = vsel %vm2318, %v2317, %v2109
        %vm2324 = vcmask 785408
        %v2325 = vsel %vm2324, %v2319, %v2121
        %v2326 = vsel %vm2324, %v2320, %v2123
        %v2327 = vsel %vm2324, %v2321, %v2125
        %v2328 = vsel %vm2324, %v2322, %v2127
        %v2329 = vsel %vm2324, %v2323, %v2129
        %vm2330 = vcmask 916480
        %v2331 = vsel %vm2330, %v2325, %v2141
        %v2332 = vsel %vm2330, %v2326, %v2143
        %v2333 = vsel %vm2330, %v2327, %v2145
        %v2334 = vsel %vm2330, %v2328, %v2147
        %v2335 = vsel %vm2330, %v2329, %v2149
        %v2336 = vsel %vm242, %v1482, %v2161
        %v2337 = vsel %vm242, %v1618, %v2163
        %v2338 = vsel %vm242, %v1754, %v2165
        %v2339 = vsel %vm242, %v1890, %v2167
        %v2340 = vsel %vm242, %v2007, %v2169
        %v2341 = vsel %vm2300, %v2336, %v2181
        %v2342 = vsel %vm2300, %v2337, %v2183
        %v2343 = vsel %vm2300, %v2338, %v2185
        %v2344 = vsel %vm2300, %v2339, %v2187
        %v2345 = vsel %vm2300, %v2340, %v2189
        %v2346 = vsel %vm2306, %v2341, %v2201
        %v2347 = vsel %vm2306, %v2342, %v2203
        %v2348 = vsel %vm2306, %v2343, %v2205
        %v2349 = vsel %vm2306, %v2344, %v2207
        %v2350 = vsel %vm2306, %v2345, %v2209
        %v2351 = vsel %vm2312, %v2346, %v2221
        %v2352 = vsel %vm2312, %v2347, %v2223
        %v2353 = vsel %vm2312, %v2348, %v2225
        %v2354 = vsel %vm2312, %v2349, %v2227
        %v2355 = vsel %vm2312, %v2350, %v2229
        %v2356 = vsel %vm2318, %v2351, %v2241
        %v2357 = vsel %vm2318, %v2352, %v2243
        %v2358 = vsel %vm2318, %v2353, %v2245
        %v2359 = vsel %vm2318, %v2354, %v2247
        %v2360 = vsel %vm2318, %v2355, %v2249
        %v2361 = vsel %vm2324, %v2356, %v2261
        %v2362 = vsel %vm2324, %v2357, %v2263
        %v2363 = vsel %vm2324, %v2358, %v2265
        %v2364 = vsel %vm2324, %v2359, %v2267
        %v2365 = vsel %vm2324, %v2360, %v2269
        %v2366 = vsel %vm2330, %v2361, %v2281
        %v2367 = vsel %vm2330, %v2362, %v2283
        %v2368 = vsel %vm2330, %v2363, %v2285
        %v2369 = vsel %vm2330, %v2364, %v2287
        %v2370 = vsel %vm2330, %v2365, %v2289
        %v2371 = vcombine.low 0.0, 0.0
        %v2372 = vcombine.high 0.0, 0.0
        %v2374 = vunpack.c.l.s4 1983009808
        %v2375 = vunpack.c.0.s8 %v2374
        %v2376 = vlaneseq
        %v2377 = vshrl.u32 %v2376, 7
        %v2378 = vsub.s32 %v2375, %v2377
        %v2379 = vrot.slane %v2371, %v2378
        %v2381 = vunpack.c.l.s4 1983009808
        %v2382 = vunpack.c.0.s8 %v2381
        %v2383 = vlaneseq
        %v2384 = vshrl.u32 %v2383, 7
        %v2385 = vsub.s32 %v2382, %v2384
        %v2386 = vrot.slane %v2372, %v2385
        %v2387 = vcombine.low %v2379, %v2379
        %v2388 = vcombine.high %v2379, %v2379
        %v2390 = vunpack.c.l.s4 1934713408
        %v2391 = vunpack.c.0.s8 %v2390
        %v2392 = vlaneseq
        %v2393 = vshrl.u32 %v2392, 7
        %v2394 = vsub.s32 %v2391, %v2393
        %v2395 = vrot.slane %v2387, %v2394
        %v2397 = vunpack.c.l.s4 1934713408
        %v2398 = vunpack.c.0.s8 %v2397
        %v2399 = vlaneseq
        %v2400 = vshrl.u32 %v2399, 7
        %v2401 = vsub.s32 %v2398, %v2400
        %v2402 = vrot.slane %v2388, %v2401
        %v2403 = vcombine.low %v2386, %v2386
        %v2404 = vcombine.high %v2386, %v2386
        %v2406 = vunpack.c.l.s4 1934713408
        %v2407 = vunpack.c.0.s8 %v2406
        %v2408 = vlaneseq
        %v2409 = vshrl.u32 %v2408, 7
        %v2410 = vsub.s32 %v2407, %v2409
        %v2411 = vrot.slane %v2403, %v2410
        %v2413 = vunpack.c.l.s4 1934713408
        %v2414 = vunpack.c.0.s8 %v2413
        %v2415 = vlaneseq
        %v2416 = vshrl.u32 %v2415, 7
        %v2417 = vsub.s32 %v2414, %v2416
        %v2418 = vrot.slane %v2404, %v2417
        %v2419 = vcombine.low %v2395, %v2395
        %v2420 = vcombine.high %v2395, %v2395
        %v2421 = vcombine.low %v2402, %v2402
        %v2422 = vcombine.high %v2402, %v2402
        %v2423 = vcombine.low %v2411, %v2411
        %v2424 = vcombine.high %v2411, %v2411
        %v2425 = vcombine.low %v2418, %v2418
        %v2426 = vcombine.high %v2418, %v2418
        %2428 = vrot.lane.b32.xlu0 %v2420, 16
        %v2429 = vpop.permute.xlu0 %2428
        %2432 = vrot.lane.b32.xlu0 %v2421, 32
        %v2433 = vpop.permute.xlu0 %2432
        %2436 = vrot.lane.b32.xlu0 %v2422, 48
        %v2437 = vpop.permute.xlu0 %2436
        %2440 = vrot.lane.b32.xlu0 %v2423, 64
        %v2441 = vpop.permute.xlu0 %2440
        %2444 = vrot.lane.b32.xlu0 %v2424, 80
        %v2445 = vpop.permute.xlu0 %2444
        %2448 = vrot.lane.b32.xlu0 %v2425, 96
        %v2449 = vpop.permute.xlu0 %2448
        %2452 = vrot.lane.b32.xlu0 %v2426, 112
        %v2453 = vpop.permute.xlu0 %2452
        %v2455 = vsel %vm242, %v2419, %v2429
        %v2456 = vsel %vm2300, %v2455, %v2433
        %v2457 = vsel %vm2306, %v2456, %v2437
        %v2458 = vsel %vm2312, %v2457, %v2441
        %v2459 = vsel %vm2318, %v2458, %v2445
        %v2460 = vsel %vm2324, %v2459, %v2449
        %v2461 = vsel %vm2330, %v2460, %v2453
        %vm2462 = vcmask 302080
        %v2464 = vsel %vm2462, %v618, 0
        %vm2466 = vcmask 1044480
        %v2468 = vsel %vm2466, %v2335, 0
        %v2471 = vsel %vm2466, %v2370, 0
        %2473 = vmatprep.subr.mxu0 %v2366
        %2474 = vmatpush1.msra.mxu0 %v2331
        %2475 = vmatprep.subr.mxu0 %v2367
        %2476 = vmatpush1.msra.mxu0 %v2332
        %2477 = vmatprep.subr.mxu0 %v2368
        %2478 = vmatpush1.msra.mxu0 %v2333
        %2479 = vmatprep.subr.mxu0 %v2369
        %2480 = vmatpush1.msra.mxu0 %v2334
        %2481 = vmatprep.subr.mxu0 %v2471
        %2482 = vmatpush1.msra.mxu0 %v2468
        %2483 = vmatprep.subr.mxu0 0.0
        %2484 = vmatpush1.msra.mxu0 0.0
        %2485 = vmatprep.subr.mxu0 0.0
        %2486 = vmatpush1.msra.mxu0 0.0
        %2487 = vmatprep.subr.mxu0 0.0
        %2488 = vmatpush1.msra.mxu0 0.0
        %2489 = vmatprep.subr.mxu0 0.0
        %2490 = vmatpush1.msra.mxu0 0.0
        %2491 = vmatprep.subr.mxu0 0.0
        %2492 = vmatpush1.msra.mxu0 0.0
        %2493 = vmatprep.subr.mxu0 0.0
        %2494 = vmatpush1.msra.mxu0 0.0
        %2495 = vmatprep.subr.mxu0 0.0
        %2496 = vmatpush1.msra.mxu0 0.0
        %2497 = vmatprep.subr.mxu0 0.0
        %2498 = vmatpush1.msra.mxu0 0.0
        %2499 = vmatprep.subr.mxu0 0.0
        %2500 = vmatpush1.msra.mxu0 0.0
        %2501 = vmatprep.subr.mxu0 0.0
        %2502 = vmatpush1.msra.mxu0 0.0
        %2503 = vmatprep.subr.mxu0 0.0
        %2504 = vmatpush1.msra.mxu0 0.0
        %2505 = vmatprep.subr.mxu0 0.0
        %2506 = vmatpush1.msra.mxu0 0.0
        %2507 = vmatprep.subr.mxu0 0.0
        %2508 = vmatpush1.msra.mxu0 0.0
        %2509 = vmatprep.subr.mxu0 0.0
        %2510 = vmatpush1.msra.mxu0 0.0
        %2511 = vmatprep.subr.mxu0 0.0
        %2512 = vmatpush1.msra.mxu0 0.0
        %2513 = vmatprep.subr.mxu0 0.0
        %2514 = vmatpush1.msra.mxu0 0.0
        %2515 = vmatprep.subr.mxu0 0.0
        %2516 = vmatpush1.msra.mxu0 0.0
        %2517 = vmatprep.subr.mxu0 0.0
        %2518 = vmatpush1.msra.mxu0 0.0
        %2519 = vmatprep.subr.mxu0 0.0
        %2520 = vmatpush1.msra.mxu0 0.0
        %2521 = vmatprep.subr.mxu0 0.0
        %2522 = vmatpush1.msra.mxu0 0.0
        %2523 = vmatprep.subr.mxu0 0.0
        %2524 = vmatpush1.msra.mxu0 0.0
        %2525 = vmatprep.subr.mxu0 0.0
        %2526 = vmatpush1.msra.mxu0 0.0
        %2527 = vmatprep.subr.mxu0 0.0
        %2528 = vmatpush1.msra.mxu0 0.0
        %2529 = vmatprep.subr.mxu0 0.0
        %2530 = vmatpush1.msra.mxu0 0.0
        %2531 = vmatprep.subr.mxu0 0.0
        %2532 = vmatpush1.msra.mxu0 0.0
        %2533 = vmatprep.subr.mxu0 0.0
        %2534 = vmatpush1.msra.mxu0 0.0
        %2535 = vmatprep.subr.mxu0 0.0
        %2536 = vmatpush1.msra.mxu0 0.0
        %2537 = vmatprep.mubr.f32.mxu0 0.0
        %2538 = vmatmul.mubr.f32.gmra.mrb[0].mxu0 %v2464
        %v2539 = vpop.f32.mrb[0].mxu0
        %v2540 = vadd.f32 %v2461, %v2539
        %v2541 = vpop.f32.mrb[0].mxu0
        %v2542 = vadd.f32 %v2461, %v2541
        %2543 = vdwg.mxu0
        %2545 = vrot.lane.b32.xlu0 %v2540, 112
        %v2546 = vpop.permute.xlu0 %2545
        %2548 = vrot.lane.b32.xlu0 %v2540, 96
        %v2549 = vpop.permute.xlu0 %2548
        %2551 = vrot.lane.b32.xlu0 %v2540, 80
        %v2552 = vpop.permute.xlu0 %2551
        %2554 = vrot.lane.b32.xlu0 %v2540, 64
        %v2555 = vpop.permute.xlu0 %2554
        %2557 = vrot.lane.b32.xlu0 %v2540, 48
        %v2558 = vpop.permute.xlu0 %2557
        %2560 = vrot.lane.b32.xlu0 %v2540, 32
        %v2561 = vpop.permute.xlu0 %2560
        %2563 = vrot.lane.b32.xlu0 %v2540, 16
        %v2564 = vpop.permute.xlu0 %2563
        %2567 = vrot.lane.b32.xlu0 %v2542, 112
        %v2568 = vpop.permute.xlu0 %2567
        %2570 = vrot.lane.b32.xlu0 %v2542, 96
        %v2571 = vpop.permute.xlu0 %2570
        %2573 = vrot.lane.b32.xlu0 %v2542, 80
        %v2574 = vpop.permute.xlu0 %2573
        %2576 = vrot.lane.b32.xlu0 %v2542, 64
        %v2577 = vpop.permute.xlu0 %2576
        %2579 = vrot.lane.b32.xlu0 %v2542, 48
        %v2580 = vpop.permute.xlu0 %2579
        %2582 = vrot.lane.b32.xlu0 %v2542, 32
        %v2583 = vpop.permute.xlu0 %2582
        %2585 = vrot.lane.b32.xlu0 %v2542, 16
        %v2586 = vpop.permute.xlu0 %2585
        %v2588 = vcombine.low %v2540, %v2549
        %v2589 = vcombine.high %v2540, %v2549
        %v2591 = vunpack.c.l.s4 1983009808
        %v2592 = vunpack.c.0.s8 %v2591
        %v2593 = vlaneseq
        %v2594 = vshrl.u32 %v2593, 7
        %v2595 = vsub.s32 %v2592, %v2594
        %v2596 = vrot.slane %v2588, %v2595
        %v2598 = vunpack.c.l.s4 1983009808
        %v2599 = vunpack.c.0.s8 %v2598
        %v2600 = vlaneseq
        %v2601 = vshrl.u32 %v2600, 7
        %v2602 = vsub.s32 %v2599, %v2601
        %v2603 = vrot.slane %v2589, %v2602
        %v2604 = vcombine.low %v2546, %v2552
        %v2605 = vcombine.high %v2546, %v2552
        %v2607 = vunpack.c.l.s4 1983009808
        %v2608 = vunpack.c.0.s8 %v2607
        %v2609 = vlaneseq
        %v2610 = vshrl.u32 %v2609, 7
        %v2611 = vsub.s32 %v2608, %v2610
        %v2612 = vrot.slane %v2604, %v2611
        %v2614 = vunpack.c.l.s4 1983009808
        %v2615 = vunpack.c.0.s8 %v2614
        %v2616 = vlaneseq
        %v2617 = vshrl.u32 %v2616, 7
        %v2618 = vsub.s32 %v2615, %v2617
        %v2619 = vrot.slane %v2605, %v2618
        %v2620 = vcombine.low %v2555, %v2561
        %v2621 = vcombine.high %v2555, %v2561
        %v2623 = vunpack.c.l.s4 1983009808
        %v2624 = vunpack.c.0.s8 %v2623
        %v2625 = vlaneseq
        %v2626 = vshrl.u32 %v2625, 7
        %v2627 = vsub.s32 %v2624, %v2626
        %v2628 = vrot.slane %v2620, %v2627
        %v2630 = vunpack.c.l.s4 1983009808
        %v2631 = vunpack.c.0.s8 %v2630
        %v2632 = vlaneseq
        %v2633 = vshrl.u32 %v2632, 7
        %v2634 = vsub.s32 %v2631, %v2633
        %v2635 = vrot.slane %v2621, %v2634
        %v2636 = vcombine.low %v2558, %v2564
        %v2637 = vcombine.high %v2558, %v2564
        %v2639 = vunpack.c.l.s4 1983009808
        %v2640 = vunpack.c.0.s8 %v2639
        %v2641 = vlaneseq
        %v2642 = vshrl.u32 %v2641, 7
        %v2643 = vsub.s32 %v2640, %v2642
        %v2644 = vrot.slane %v2636, %v2643
        %v2646 = vunpack.c.l.s4 1983009808
        %v2647 = vunpack.c.0.s8 %v2646
        %v2648 = vlaneseq
        %v2649 = vshrl.u32 %v2648, 7
        %v2650 = vsub.s32 %v2647, %v2649
        %v2651 = vrot.slane %v2637, %v2650
        %v2652 = vcombine.low %v2596, %v2612
        %v2653 = vcombine.high %v2596, %v2612
        %v2655 = vunpack.c.l.s4 1934713408
        %v2656 = vunpack.c.0.s8 %v2655
        %v2657 = vlaneseq
        %v2658 = vshrl.u32 %v2657, 7
        %v2659 = vsub.s32 %v2656, %v2658
        %v2660 = vrot.slane %v2652, %v2659
        %v2662 = vunpack.c.l.s4 1934713408
        %v2663 = vunpack.c.0.s8 %v2662
        %v2664 = vlaneseq
        %v2665 = vshrl.u32 %v2664, 7
        %v2666 = vsub.s32 %v2663, %v2665
        %v2667 = vrot.slane %v2653, %v2666
        %v2668 = vcombine.low %v2603, %v2619
        %v2669 = vcombine.high %v2603, %v2619
        %v2671 = vunpack.c.l.s4 1934713408
        %v2672 = vunpack.c.0.s8 %v2671
        %v2673 = vlaneseq
        %v2674 = vshrl.u32 %v2673, 7
        %v2675 = vsub.s32 %v2672, %v2674
        %v2676 = vrot.slane %v2668, %v2675
        %v2678 = vunpack.c.l.s4 1934713408
        %v2679 = vunpack.c.0.s8 %v2678
        %v2680 = vlaneseq
        %v2681 = vshrl.u32 %v2680, 7
        %v2682 = vsub.s32 %v2679, %v2681
        %v2683 = vrot.slane %v2669, %v2682
        %v2684 = vcombine.low %v2628, %v2644
        %v2685 = vcombine.high %v2628, %v2644
        %v2687 = vunpack.c.l.s4 1934713408
        %v2688 = vunpack.c.0.s8 %v2687
        %v2689 = vlaneseq
        %v2690 = vshrl.u32 %v2689, 7
        %v2691 = vsub.s32 %v2688, %v2690
        %v2692 = vrot.slane %v2684, %v2691
        %v2694 = vunpack.c.l.s4 1934713408
        %v2695 = vunpack.c.0.s8 %v2694
        %v2696 = vlaneseq
        %v2697 = vshrl.u32 %v2696, 7
        %v2698 = vsub.s32 %v2695, %v2697
        %v2699 = vrot.slane %v2685, %v2698
        %v2700 = vcombine.low %v2635, %v2651
        %v2701 = vcombine.high %v2635, %v2651
        %v2703 = vunpack.c.l.s4 1934713408
        %v2704 = vunpack.c.0.s8 %v2703
        %v2705 = vlaneseq
        %v2706 = vshrl.u32 %v2705, 7
        %v2707 = vsub.s32 %v2704, %v2706
        %v2708 = vrot.slane %v2700, %v2707
        %v2710 = vunpack.c.l.s4 1934713408
        %v2711 = vunpack.c.0.s8 %v2710
        %v2712 = vlaneseq
        %v2713 = vshrl.u32 %v2712, 7
        %v2714 = vsub.s32 %v2711, %v2713
        %v2715 = vrot.slane %v2701, %v2714
        %v2716 = vcombine.low %v2660, %v2692
        %v2717 = vcombine.high %v2660, %v2692
        %v2718 = vcombine.low %v2667, %v2699
        %v2719 = vcombine.high %v2667, %v2699
        %v2720 = vcombine.low %v2676, %v2708
        %v2721 = vcombine.high %v2676, %v2708
        %v2722 = vcombine.low %v2683, %v2715
        %v2723 = vcombine.high %v2683, %v2715
        %v2724 = vcombine.low %v2542, %v2571
        %v2725 = vcombine.high %v2542, %v2571
        %v2727 = vunpack.c.l.s4 1983009808
        %v2728 = vunpack.c.0.s8 %v2727
        %v2729 = vlaneseq
        %v2730 = vshrl.u32 %v2729, 7
        %v2731 = vsub.s32 %v2728, %v2730
        %v2732 = vrot.slane %v2724, %v2731
        %v2734 = vunpack.c.l.s4 1983009808
        %v2735 = vunpack.c.0.s8 %v2734
        %v2736 = vlaneseq
        %v2737 = vshrl.u32 %v2736, 7
        %v2738 = vsub.s32 %v2735, %v2737
        %v2739 = vrot.slane %v2725, %v2738
        %v2740 = vcombine.low %v2568, %v2574
        %v2741 = vcombine.high %v2568, %v2574
        %v2743 = vunpack.c.l.s4 1983009808
        %v2744 = vunpack.c.0.s8 %v2743
        %v2745 = vlaneseq
        %v2746 = vshrl.u32 %v2745, 7
        %v2747 = vsub.s32 %v2744, %v2746
        %v2748 = vrot.slane %v2740, %v2747
        %v2750 = vunpack.c.l.s4 1983009808
        %v2751 = vunpack.c.0.s8 %v2750
        %v2752 = vlaneseq
        %v2753 = vshrl.u32 %v2752, 7
        %v2754 = vsub.s32 %v2751, %v2753
        %v2755 = vrot.slane %v2741, %v2754
        %v2756 = vcombine.low %v2577, %v2583
        %v2757 = vcombine.high %v2577, %v2583
        %v2759 = vunpack.c.l.s4 1983009808
        %v2760 = vunpack.c.0.s8 %v2759
        %v2761 = vlaneseq
        %v2762 = vshrl.u32 %v2761, 7
        %v2763 = vsub.s32 %v2760, %v2762
        %v2764 = vrot.slane %v2756, %v2763
        %v2766 = vunpack.c.l.s4 1983009808
        %v2767 = vunpack.c.0.s8 %v2766
        %v2768 = vlaneseq
        %v2769 = vshrl.u32 %v2768, 7
        %v2770 = vsub.s32 %v2767, %v2769
        %v2771 = vrot.slane %v2757, %v2770
        %v2772 = vcombine.low %v2580, %v2586
        %v2773 = vcombine.high %v2580, %v2586
        %v2775 = vunpack.c.l.s4 1983009808
        %v2776 = vunpack.c.0.s8 %v2775
        %v2777 = vlaneseq
        %v2778 = vshrl.u32 %v2777, 7
        %v2779 = vsub.s32 %v2776, %v2778
        %v2780 = vrot.slane %v2772, %v2779
        %v2782 = vunpack.c.l.s4 1983009808
        %v2783 = vunpack.c.0.s8 %v2782
        %v2784 = vlaneseq
        %v2785 = vshrl.u32 %v2784, 7
        %v2786 = vsub.s32 %v2783, %v2785
        %v2787 = vrot.slane %v2773, %v2786
        %v2788 = vcombine.low %v2732, %v2748
        %v2789 = vcombine.high %v2732, %v2748
        %v2791 = vunpack.c.l.s4 1934713408
        %v2792 = vunpack.c.0.s8 %v2791
        %v2793 = vlaneseq
        %v2794 = vshrl.u32 %v2793, 7
        %v2795 = vsub.s32 %v2792, %v2794
        %v2796 = vrot.slane %v2788, %v2795
        %v2798 = vunpack.c.l.s4 1934713408
        %v2799 = vunpack.c.0.s8 %v2798
        %v2800 = vlaneseq
        %v2801 = vshrl.u32 %v2800, 7
        %v2802 = vsub.s32 %v2799, %v2801
        %v2803 = vrot.slane %v2789, %v2802
        %v2804 = vcombine.low %v2739, %v2755
        %v2805 = vcombine.high %v2739, %v2755
        %v2807 = vunpack.c.l.s4 1934713408
        %v2808 = vunpack.c.0.s8 %v2807
        %v2809 = vlaneseq
        %v2810 = vshrl.u32 %v2809, 7
        %v2811 = vsub.s32 %v2808, %v2810
        %v2812 = vrot.slane %v2804, %v2811
        %v2814 = vunpack.c.l.s4 1934713408
        %v2815 = vunpack.c.0.s8 %v2814
        %v2816 = vlaneseq
        %v2817 = vshrl.u32 %v2816, 7
        %v2818 = vsub.s32 %v2815, %v2817
        %v2819 = vrot.slane %v2805, %v2818
        %v2820 = vcombine.low %v2764, %v2780
        %v2821 = vcombine.high %v2764, %v2780
        %v2823 = vunpack.c.l.s4 1934713408
        %v2824 = vunpack.c.0.s8 %v2823
        %v2825 = vlaneseq
        %v2826 = vshrl.u32 %v2825, 7
        %v2827 = vsub.s32 %v2824, %v2826
        %v2828 = vrot.slane %v2820, %v2827
        %v2830 = vunpack.c.l.s4 1934713408
        %v2831 = vunpack.c.0.s8 %v2830
        %v2832 = vlaneseq
        %v2833 = vshrl.u32 %v2832, 7
        %v2834 = vsub.s32 %v2831, %v2833
        %v2835 = vrot.slane %v2821, %v2834
        %v2836 = vcombine.low %v2771, %v2787
        %v2837 = vcombine.high %v2771, %v2787
        %v2839 = vunpack.c.l.s4 1934713408
        %v2840 = vunpack.c.0.s8 %v2839
        %v2841 = vlaneseq
        %v2842 = vshrl.u32 %v2841, 7
        %v2843 = vsub.s32 %v2840, %v2842
        %v2844 = vrot.slane %v2836, %v2843
        %v2846 = vunpack.c.l.s4 1934713408
        %v2847 = vunpack.c.0.s8 %v2846
        %v2848 = vlaneseq
        %v2849 = vshrl.u32 %v2848, 7
        %v2850 = vsub.s32 %v2847, %v2849
        %v2851 = vrot.slane %v2837, %v2850
        %v2852 = vcombine.low %v2796, %v2828
        %v2853 = vcombine.high %v2796, %v2828
        %v2854 = vcombine.low %v2803, %v2835
        %v2855 = vcombine.high %v2803, %v2835
        %v2856 = vcombine.low %v2812, %v2844
        %v2857 = vcombine.high %v2812, %v2844
        %v2858 = vcombine.low %v2819, %v2851
        %v2859 = vcombine.high %v2819, %v2851
        %v2860 = vsel %vm242, %v2716, -inf
        %2861 = vmax.xlane.f32.xlu0 %v2860
        %v2862 = vpop.xlane.xlu0 %2861
        %v2863 = vsel %vm242, %v2852, -inf
        %2864 = vmax.xlane.f32.xlu0 %v2863
        %v2865 = vpop.xlane.xlu0 %2864
        %v2866 = vsel %vm242, %v2717, -inf
        %2867 = vmax.xlane.f32.xlu0 %v2866
        %v2868 = vpop.xlane.xlu0 %2867
        %v2869 = vsel %vm242, %v2853, -inf
        %2870 = vmax.xlane.f32.xlu0 %v2869
        %v2871 = vpop.xlane.xlu0 %2870
        %v2872 = vsel %vm242, %v2718, -inf
        %2873 = vmax.xlane.f32.xlu0 %v2872
        %v2874 = vpop.xlane.xlu0 %2873
        %v2875 = vsel %vm242, %v2854, -inf
        %2876 = vmax.xlane.f32.xlu0 %v2875
        %v2877 = vpop.xlane.xlu0 %2876
        %v2878 = vsel %vm242, %v2719, -inf
        %2879 = vmax.xlane.f32.xlu0 %v2878
        %v2880 = vpop.xlane.xlu0 %2879
        %v2881 = vsel %vm242, %v2855, -inf
        %2882 = vmax.xlane.f32.xlu0 %v2881
        %v2883 = vpop.xlane.xlu0 %2882
        %v2884 = vsel %vm242, %v2720, -inf
        %2885 = vmax.xlane.f32.xlu0 %v2884
        %v2886 = vpop.xlane.xlu0 %2885
        %v2887 = vsel %vm242, %v2856, -inf
        %2888 = vmax.xlane.f32.xlu0 %v2887
        %v2889 = vpop.xlane.xlu0 %2888
        %v2890 = vsel %vm242, %v2721, -inf
        %2891 = vmax.xlane.f32.xlu0 %v2890
        %v2892 = vpop.xlane.xlu0 %2891
        %v2893 = vsel %vm242, %v2857, -inf
        %2894 = vmax.xlane.f32.xlu0 %v2893
        %v2895 = vpop.xlane.xlu0 %2894
        %v2896 = vsel %vm242, %v2722, -inf
        %2897 = vmax.xlane.f32.xlu0 %v2896
        %v2898 = vpop.xlane.xlu0 %2897
        %v2899 = vsel %vm242, %v2858, -inf
        %2900 = vmax.xlane.f32.xlu0 %v2899
        %v2901 = vpop.xlane.xlu0 %2900
        %v2902 = vsel %vm242, %v2723, -inf
        %2903 = vmax.xlane.f32.xlu0 %v2902
        %v2904 = vpop.xlane.xlu0 %2903
        %v2905 = vsel %vm242, %v2859, -inf
        %2906 = vmax.xlane.f32.xlu0 %v2905
        %v2907 = vpop.xlane.xlu0 %2906
        %v2908 = vsub.f32 %v2716, %v2862
        %v2909 = vsub.f32 %v2852, %v2865
        %v2910 = vsub.f32 %v2717, %v2868
        %v2911 = vsub.f32 %v2853, %v2871
        %v2912 = vsub.f32 %v2718, %v2874
        %v2913 = vsub.f32 %v2854, %v2877
        %v2914 = vsub.f32 %v2719, %v2880
        %v2915 = vsub.f32 %v2855, %v2883
        %v2916 = vsub.f32 %v2720, %v2886
        %v2917 = vsub.f32 %v2856, %v2889
        %v2918 = vsub.f32 %v2721, %v2892
        %v2919 = vsub.f32 %v2857, %v2895
        %v2920 = vsub.f32 %v2722, %v2898
        %v2921 = vsub.f32 %v2858, %v2901
        %v2922 = vsub.f32 %v2723, %v2904
        %v2923 = vsub.f32 %v2859, %v2907
        %v2924 = vmul.f32 %v2908, 1.442695
        %v2925 = vpow.pop %v2924
        %v2926 = vmul.f32 %v2909, 1.442695
        %v2927 = vpow.pop %v2926
        %v2928 = vmul.f32 %v2910, 1.442695
        %v2929 = vpow.pop %v2928
        %v2930 = vmul.f32 %v2911, 1.442695
        %v2931 = vpow.pop %v2930
        %v2932 = vmul.f32 %v2912, 1.442695
        %v2933 = vpow.pop %v2932
        %v2934 = vmul.f32 %v2913, 1.442695
        %v2935 = vpow.pop %v2934
        %v2936 = vmul.f32 %v2914, 1.442695
        %v2937 = vpow.pop %v2936
        %v2938 = vmul.f32 %v2915, 1.442695
        %v2939 = vpow.pop %v2938
        %v2940 = vmul.f32 %v2916, 1.442695
        %v2941 = vpow.pop %v2940
        %v2942 = vmul.f32 %v2917, 1.442695
        %v2943 = vpow.pop %v2942
        %v2944 = vmul.f32 %v2918, 1.442695
        %v2945 = vpow.pop %v2944
        %v2946 = vmul.f32 %v2919, 1.442695
        %v2947 = vpow.pop %v2946
        %v2948 = vmul.f32 %v2920, 1.442695
        %v2949 = vpow.pop %v2948
        %v2950 = vmul.f32 %v2921, 1.442695
        %v2951 = vpow.pop %v2950
        %v2952 = vmul.f32 %v2922, 1.442695
        %v2953 = vpow.pop %v2952
        %v2954 = vmul.f32 %v2923, 1.442695
        %v2955 = vpow.pop %v2954
        %v2956 = vsel %vm242, %v2925, 0.0
        %2957 = vadd.xlane.f32.xlu0 %v2956
        %v2958 = vpop.xlane.xlu0 %2957
        %v2959 = vsel %vm242, %v2927, 0.0
        %2960 = vadd.xlane.f32.xlu0 %v2959
        %v2961 = vpop.xlane.xlu0 %2960
        %v2962 = vsel %vm242, %v2929, 0.0
        %2963 = vadd.xlane.f32.xlu0 %v2962
        %v2964 = vpop.xlane.xlu0 %2963
        %v2965 = vsel %vm242, %v2931, 0.0
        %2966 = vadd.xlane.f32.xlu0 %v2965
        %v2967 = vpop.xlane.xlu0 %2966
        %v2968 = vsel %vm242, %v2933, 0.0
        %2969 = vadd.xlane.f32.xlu0 %v2968
        %v2970 = vpop.xlane.xlu0 %2969
        %v2971 = vsel %vm242, %v2935, 0.0
        %2972 = vadd.xlane.f32.xlu0 %v2971
        %v2973 = vpop.xlane.xlu0 %2972
        %v2974 = vsel %vm242, %v2937, 0.0
        %2975 = vadd.xlane.f32.xlu0 %v2974
        %v2976 = vpop.xlane.xlu0 %2975
        %v2977 = vsel %vm242, %v2939, 0.0
        %2978 = vadd.xlane.f32.xlu0 %v2977
        %v2979 = vpop.xlane.xlu0 %2978
        %v2980 = vsel %vm242, %v2941, 0.0
        %2981 = vadd.xlane.f32.xlu0 %v2980
        %v2982 = vpop.xlane.xlu0 %2981
        %v2983 = vsel %vm242, %v2943, 0.0
        %2984 = vadd.xlane.f32.xlu0 %v2983
        %v2985 = vpop.xlane.xlu0 %2984
        %v2986 = vsel %vm242, %v2945, 0.0
        %2987 = vadd.xlane.f32.xlu0 %v2986
        %v2988 = vpop.xlane.xlu0 %2987
        %v2989 = vsel %vm242, %v2947, 0.0
        %2990 = vadd.xlane.f32.xlu0 %v2989
        %v2991 = vpop.xlane.xlu0 %2990
        %v2992 = vsel %vm242, %v2949, 0.0
        %2993 = vadd.xlane.f32.xlu0 %v2992
        %v2994 = vpop.xlane.xlu0 %2993
        %v2995 = vsel %vm242, %v2951, 0.0
        %2996 = vadd.xlane.f32.xlu0 %v2995
        %v2997 = vpop.xlane.xlu0 %2996
        %v2998 = vsel %vm242, %v2953, 0.0
        %2999 = vadd.xlane.f32.xlu0 %v2998
        %v3000 = vpop.xlane.xlu0 %2999
        %v3001 = vsel %vm242, %v2955, 0.0
        %3002 = vadd.xlane.f32.xlu0 %v3001
        %v3003 = vpop.xlane.xlu0 %3002
        %v3004 = vrcp.pop %v2958
        %v3005 = vrcp.pop %v2961
        %v3006 = vrcp.pop %v2964
        %v3007 = vrcp.pop %v2967
        %v3008 = vrcp.pop %v2970
        %v3009 = vrcp.pop %v2973
        %v3010 = vrcp.pop %v2976
        %v3011 = vrcp.pop %v2979
        %v3012 = vrcp.pop %v2982
        %v3013 = vrcp.pop %v2985
        %v3014 = vrcp.pop %v2988
        %v3015 = vrcp.pop %v2991
        %v3016 = vrcp.pop %v2994
        %v3017 = vrcp.pop %v2997
        %v3018 = vrcp.pop %v3000
        %v3019 = vrcp.pop %v3003
        %v3020 = vmul.f32 %v2958, %v3004
        %v3021 = vmul.f32 %v2961, %v3005
        %v3022 = vmul.f32 %v2964, %v3006
        %v3023 = vmul.f32 %v2967, %v3007
        %v3024 = vmul.f32 %v2970, %v3008
        %v3025 = vmul.f32 %v2973, %v3009
        %v3026 = vmul.f32 %v2976, %v3010
        %v3027 = vmul.f32 %v2979, %v3011
        %v3028 = vmul.f32 %v2982, %v3012
        %v3029 = vmul.f32 %v2985, %v3013
        %v3030 = vmul.f32 %v2988, %v3014
        %v3031 = vmul.f32 %v2991, %v3015
        %v3032 = vmul.f32 %v2994, %v3016
        %v3033 = vmul.f32 %v2997, %v3017
        %v3034 = vmul.f32 %v3000, %v3018
        %v3035 = vmul.f32 %v3003, %v3019
        %v3036 = vsub.f32 2.0, %v3020
        %v3037 = vsub.f32 2.0, %v3021
        %v3038 = vsub.f32 2.0, %v3022
        %v3039 = vsub.f32 2.0, %v3023
        %v3040 = vsub.f32 2.0, %v3024
        %v3041 = vsub.f32 2.0, %v3025
        %v3042 = vsub.f32 2.0, %v3026
        %v3043 = vsub.f32 2.0, %v3027
        %v3044 = vsub.f32 2.0, %v3028
        %v3045 = vsub.f32 2.0, %v3029
        %v3046 = vsub.f32 2.0, %v3030
        %v3047 = vsub.f32 2.0, %v3031
        %v3048 = vsub.f32 2.0, %v3032
        %v3049 = vsub.f32 2.0, %v3033
        %v3050 = vsub.f32 2.0, %v3034
        %v3051 = vsub.f32 2.0, %v3035
        %v3052 = vmul.f32 %v3004, %v3036
        %v3053 = vmul.f32 %v3005, %v3037
        %v3054 = vmul.f32 %v3006, %v3038
        %v3055 = vmul.f32 %v3007, %v3039
        %v3056 = vmul.f32 %v3008, %v3040
        %v3057 = vmul.f32 %v3009, %v3041
        %v3058 = vmul.f32 %v3010, %v3042
        %v3059 = vmul.f32 %v3011, %v3043
        %v3060 = vmul.f32 %v3012, %v3044
        %v3061 = vmul.f32 %v3013, %v3045
        %v3062 = vmul.f32 %v3014, %v3046
        %v3063 = vmul.f32 %v3015, %v3047
        %v3064 = vmul.f32 %v3016, %v3048
        %v3065 = vmul.f32 %v3017, %v3049
        %v3066 = vmul.f32 %v3018, %v3050
        %v3067 = vmul.f32 %v3019, %v3051
        %v3068 = vmul.f32 %v2925, %v3052
        %v3069 = vmul.f32 %v2927, %v3053
        %v3070 = vmul.f32 %v2929, %v3054
        %v3071 = vmul.f32 %v2931, %v3055
        %v3072 = vmul.f32 %v2933, %v3056
        %v3073 = vmul.f32 %v2935, %v3057
        %v3074 = vmul.f32 %v2937, %v3058
        %v3075 = vmul.f32 %v2939, %v3059
        %v3076 = vmul.f32 %v2941, %v3060
        %v3077 = vmul.f32 %v2943, %v3061
        %v3078 = vmul.f32 %v2945, %v3062
        %v3079 = vmul.f32 %v2947, %v3063
        %v3080 = vmul.f32 %v2949, %v3064
        %v3081 = vmul.f32 %v2951, %v3065
        %v3082 = vmul.f32 %v2953, %v3066
        %v3083 = vmul.f32 %v2955, %v3067
        %v3084 = vsel %vm242, %v3068, 0.0
        %v3085 = vsel %vm242, %v3070, 0.0
        %v3086 = vadd.f32 %v3084, %v3085
        %v3087 = vsel %vm242, %v3072, 0.0
        %v3088 = vadd.f32 %v3086, %v3087
        %v3089 = vsel %vm242, %v3074, 0.0
        %v3090 = vadd.f32 %v3088, %v3089
        %v3091 = vsel %vm242, %v3076, 0.0
        %v3092 = vadd.f32 %v3090, %v3091
        %v3093 = vsel %vm242, %v3078, 0.0
        %v3094 = vadd.f32 %v3092, %v3093
        %v3095 = vsel %vm242, %v3080, 0.0
        %v3096 = vadd.f32 %v3094, %v3095
        %v3097 = vsel %vm242, %v3082, 0.0
        %v3098 = vadd.f32 %v3096, %v3097
        %v3099 = vsel %vm242, %v3069, 0.0
        %v3100 = vsel %vm242, %v3071, 0.0
        %v3101 = vadd.f32 %v3099, %v3100
        %v3102 = vsel %vm242, %v3073, 0.0
        %v3103 = vadd.f32 %v3101, %v3102
        %v3104 = vsel %vm242, %v3075, 0.0
        %v3105 = vadd.f32 %v3103, %v3104
        %v3106 = vsel %vm242, %v3077, 0.0
        %v3107 = vadd.f32 %v3105, %v3106
        %v3108 = vsel %vm242, %v3079, 0.0
        %v3109 = vadd.f32 %v3107, %v3108
        %v3110 = vsel %vm242, %v3081, 0.0
        %v3111 = vadd.f32 %v3109, %v3110
        %v3112 = vsel %vm242, %v3083, 0.0
        %v3113 = vadd.f32 %v3111, %v3112
        %v3114 = vld [vmem:[%s147] sm:$0xff]
        %v3115 = vld [vmem:[%s147 + $0x8] sm:$0xff]
        %v3116 = vmul.f32 %v3114, %v3098
        %v3117 = vmul.f32 %v3115, %v3113
        %3118 = vst.msk [vmem:[%s176] sm:$0xff] %vm242, %v3116
        %3119 = vst.msk [vmem:[%s176 + $0x8] sm:$0xff] %vm242, %v3117
        %s3120 = scalar_lea.vmem %s147, 16 [#allocation4]
        %v3121 = vld [vmem:[%s3120] sm:$0xff]
        %v3122 = vld [vmem:[%s3120 + $0x8] sm:$0xff]
        %v3123 = vmul.f32 %v3121, %v3098
        %v3124 = vmul.f32 %v3122, %v3113
        %3125 = vst.msk [vmem:[%s176 + $0x10] sm:$0xff] %vm242, %v3123
        %3126 = vst.msk [vmem:[%s176 + $0x18] sm:$0xff] %vm242, %v3124
        %s3127 = scalar_lea.vmem %s147, 32 [#allocation4]
        %v3128 = vld [vmem:[%s3127] sm:$0xff]
        %v3129 = vld [vmem:[%s3127 + $0x8] sm:$0xff]
        %v3130 = vmul.f32 %v3128, %v3098
        %v3131 = vmul.f32 %v3129, %v3113
        %3132 = vst.msk [vmem:[%s176 + $0x20] sm:$0xff] %vm242, %v3130
        %3133 = vst.msk [vmem:[%s176 + $0x28] sm:$0xff] %vm242, %v3131
        %s3134 = scalar_lea.vmem %s147, 48 [#allocation4]
        %v3135 = vld [vmem:[%s3134] sm:$0xff]
        %v3136 = vld [vmem:[%s3134 + $0x8] sm:$0xff]
        %v3137 = vmul.f32 %v3135, %v3098
        %v3138 = vmul.f32 %v3136, %v3113
        %3139 = vst.msk [vmem:[%s176 + $0x30] sm:$0xff] %vm242, %v3137
        %3140 = vst.msk [vmem:[%s176 + $0x38] sm:$0xff] %vm242, %v3138
        %p3141 = scmp.lt.s32.totalorder %s17, 1
        %s3142 = scalar_select %p3141, %s17, 1
        %s3143 = smul.addr %s3142, 8
        %s3144 = smul.addr %s3143, 8
        %s3145 = scalar_lea.vmem %s2, %s3144
        // Predicated region
        $region37: #{tpu_custom_call.1} parent=27 // pred_check
          %p3146 = pneg %p82
        $region38: #{tpu_custom_call.1} parent=27 // pred_check_branch
          %3148 = sbr.rel (%p3146) target = $region40
        $region39: #{tpu_custom_call.1} parent=27 // pred_region
          _
        $region40: #{tpu_custom_call.1} parent=27 // pred_fallthru
          _
      $region28: #{tpu_custom_call.1} parent=5 // pred_fallthru
        _
      %p3149 = scmp.le.s32.totalorder 2, %s12
      // Predicated region
      $region41: #{tpu_custom_call.1} parent=5 // pred_check
        %p3150 = pneg %p3149
      $region42: #{tpu_custom_call.1} parent=5 // pred_check_branch
        %3152 = sbr.rel (%p3150) target = $region44
      $region43: #{tpu_custom_call.1} parent=5 // pred_region
        %s3153 = ssub.s32 %s12, 2
        // Predicated region
        $region45: #{tpu_custom_call.1} parent=43 // pred_check
          %p3154 = pneg %p88
        $region46: #{tpu_custom_call.1} parent=43 // pred_check_branch
          %3156 = sbr.rel (%p3154) target = $region48
        $region47: #{tpu_custom_call.1} parent=43 // pred_region
          %p3157 = scmp.lt.s32.totalorder %s18, 1
          %s3158 = scalar_select %p3157, %s18, 1
          %s3159 = smul.addr %s3158, 8
          %s3160 = smul.addr %s3159, 8
          %s3161 = scalar_lea.vmem %s2, %s3160
        $region48: #{tpu_custom_call.1} parent=43 // pred_fallthru
          _
      $region44: #{tpu_custom_call.1} parent=5 // pred_fallthru
        _
    $region6: #{tpu_custom_call.1} parent=1 // loop_footer
      %s16 = sadd.s32 1, %s12
    $region7: #{tpu_custom_call.1} parent=1 // loop_footer_branch
      %11 = sbr.rel target = $region3
    $region8: #{tpu_custom_call.1} parent=1 // loop_exit
      _
    %3162 = vsyncpa [#allocation5], 1
    %s3163 = scalar_lea.sflag [#allocation5], 1
    %3164 = vsyncpa %s3163, 1
    %3165 = vsyncpa [#allocation7], 1

</llo_original>
